<compile_context>
chip_gen: v7x
topology: tpu7x:2x2x1
jax: 0.10.0
libtpu: 0.0.40
codegen_flags: <defaults>
</compile_context>

<pallas_src>
import jax
import jax.numpy as jnp
from jax.experimental import pallas as pl
from jax.experimental.pallas import tpu as pltpu

# ---- model hyper-parameters (small, consistent with the module) -------------
LATENT_DIM = 32
CHANNELS = 1
IMG_SIZE = 16
IMG_SHAPE = (CHANNELS, IMG_SIZE, IMG_SIZE)
OUT_DIM = CHANNELS * IMG_SIZE * IMG_SIZE          # 256
HIDDEN = (128, 256, 512, 1024)
BN_EPS = 0.8
LEAKY_SLOPE = 0.2
BATCH = 8
K_PAD = 128                                        # padded latent / K of layer 1

# Packed 1-D parameter vector layout: [b1, g2, be2, g3, be3, g4, be4, b5].
# Every segment size is a multiple of 128 -> all static slices are lane-aligned.
_VEC_SIZES = (128, 256, 256, 512, 512, 1024, 1024, 256)
_VEC_OFFS = []
_o = 0
for _s in _VEC_SIZES:
    _VEC_OFFS.append(_o)
    _o += _s
VEC_TOTAL = _o                                     # 3968 = 31 * 128
(_B1_O, _G2_O, _BE2_O, _G3_O, _BE3_O, _G4_O, _BE4_O, _B5_O) = _VEC_OFFS


def _leaky_relu(x):
    return jnp.where(x > 0, x, LEAKY_SLOPE * x)


def _batchnorm_train(x, gamma, beta):
    # Training-mode BatchNorm1d: per-feature batch mean / biased variance,
    # folded into one scale + one shift per feature.
    mean = jnp.mean(x, axis=0, keepdims=True)
    var = jnp.mean((x - mean) ** 2, axis=0, keepdims=True)
    scale = gamma * jax.lax.rsqrt(var + BN_EPS)       # (1, N)
    shift = beta - mean * scale                       # (1, N)
    return x * scale + shift


def _vec(vec_ref, off, size):
    return vec_ref[:, off:off + size]              # static, lane-aligned slice


def generator_kernel(z_ref, w1_ref, w2_ref, w3_ref, w4_ref, w5_ref, vec_ref,
                     out_ref):
    # bf16 MXU dots, f32 accumulate; BN / activations in f32.
    def dot(a, w_ref):
        return jnp.dot(a.astype(jnp.bfloat16), w_ref[...],
                       preferred_element_type=jnp.float32)

    z = z_ref[...]

    # block(latent, 128, normalize=False)
    h = dot(z, w1_ref) + _vec(vec_ref, _B1_O, 128)
    h = _leaky_relu(h)

    # block(128, 256)   (linear bias cancelled by BN mean subtraction)
    h = dot(h, w2_ref)
    h = _leaky_relu(_batchnorm_train(h, _vec(vec_ref, _G2_O, 256),
                                     _vec(vec_ref, _BE2_O, 256)))

    # block(256, 512)
    h = dot(h, w3_ref)
    h = _leaky_relu(_batchnorm_train(h, _vec(vec_ref, _G3_O, 512),
                                     _vec(vec_ref, _BE3_O, 512)))

    # block(512, 1024)
    h = dot(h, w4_ref)
    h = _leaky_relu(_batchnorm_train(h, _vec(vec_ref, _G4_O, 1024),
                                     _vec(vec_ref, _BE4_O, 1024)))

    # Linear(1024, C*H*W) -> Tanh
    h = dot(h, w5_ref) + _vec(vec_ref, _B5_O, OUT_DIM)
    out_ref[...] = jnp.tanh(h)


def init_params(key):
    """Deterministic PyTorch-style init: U(-1/sqrt(fan_in), 1/sqrt(fan_in))."""
    dims = (LATENT_DIM,) + HIDDEN + (OUT_DIM,)
    params = []
    for i in range(len(dims) - 1):
        fan_in, fan_out = dims[i], dims[i + 1]
        key, kw, kb = jax.random.split(key, 3)
        bound = 1.0 / jnp.sqrt(float(fan_in))
        w = jax.random.uniform(kw, (fan_in, fan_out), jnp.float32, -bound, bound)
        b = jax.random.uniform(kb, (1, fan_out), jnp.float32, -bound, bound)
        params.append((w, b))
    # BatchNorm affine params (PyTorch default: weight=1, bias=0).
    bn_params = [(jnp.ones((1, d), jnp.float32), jnp.zeros((1, d), jnp.float32))
                 for d in HIDDEN[1:]]
    return params, bn_params


def prepare_params(params, bn_params):
    """One-time packing: pad w1's K dim to 128, cast weights to bf16, and pack
    all small 1-D params into a single lane-aligned f32 vector.  Do this once;
    the per-call forward then only streams ~1.9 MB of bf16 from HBM."""
    (w1, b1), (w2, _b2), (w3, _b3), (w4, _b4), (w5, b5) = params
    (g2, be2), (g3, be3), (g4, be4) = bn_params
    # _b2/_b3/_b4 are unused: training-mode BN cancels a per-feature bias.

    w1_pad = jnp.pad(w1, ((0, K_PAD - LATENT_DIM), (0, 0)))
    w1b = w1_pad.astype(jnp.bfloat16)
    w2b = w2.astype(jnp.bfloat16)
    w3b = w3.astype(jnp.bfloat16)
    w4b = w4.astype(jnp.bfloat16)
    w5b = w5.astype(jnp.bfloat16)
    vec = jnp.concatenate([b1, g2, be2, g3, be3, g4, be4, b5], axis=1)
    assert vec.shape == (1, VEC_TOTAL)
    return (w1b, w2b, w3b, w4b, w5b, vec)


@jax.jit
def generator_forward(z, prepared):
    w1b, w2b, w3b, w4b, w5b, vec = prepared

    # Pad latent/K of the first layer to a full 128 lanes (zeros -> exact no-op).
    z_pad = jnp.pad(z, ((0, 0), (0, K_PAD - LATENT_DIM)))

    inputs = (z_pad, w1b, w2b, w3b, w4b, w5b, vec)
    vmem_spec = pl.BlockSpec(memory_space=pltpu.MemorySpace.VMEM)

    out_flat = pl.pallas_call(
        generator_kernel,
        out_shape=jax.ShapeDtypeStruct((z.shape[0], OUT_DIM), jnp.float32),
        in_specs=[vmem_spec] * len(inputs),
        out_specs=vmem_spec,
        compiler_params=pltpu.CompilerParams(vmem_limit_bytes=16 << 20),
    )(*inputs)

    # img = img.view(B, C, H, W)  (NCHW)
    return out_flat.reshape(z.shape[0], *IMG_SHAPE)


def _reference_forward(z, prepared):
    """Pure-JAX reference using the same prepared (bf16) weights."""
    w1b, w2b, w3b, w4b, w5b, vec = prepared

    def vslice(off, size):
        return vec[:, off:off + size]

    def dot(a, w):
        return jnp.dot(a.astype(jnp.bfloat16), w,
                       preferred_element_type=jnp.float32)

    z_pad = jnp.pad(z, ((0, 0), (0, K_PAD - LATENT_DIM)))
    h = _leaky_relu(dot(z_pad, w1b) + vslice(_B1_O, 128))
    h = _leaky_relu(_batchnorm_train(dot(h, w2b),
                                     vslice(_G2_O, 256), vslice(_BE2_O, 256)))
    h = _leaky_relu(_batchnorm_train(dot(h, w3b),
                                     vslice(_G3_O, 512), vslice(_BE3_O, 512)))
    h = _leaky_relu(_batchnorm_train(dot(h, w4b),
                                     vslice(_G4_O, 1024), vslice(_BE4_O, 1024)))
    h = jnp.tanh(dot(h, w5b) + vslice(_B5_O, OUT_DIM))
    return h.reshape(z.shape[0], *IMG_SHAPE)


if __name__ == "__main__":
    key = jax.random.PRNGKey(0)
    key_z, key_p = jax.random.split(key)
    z = jax.random.normal(key_z, (BATCH, LATENT_DIM), jnp.float32)
    params, bn_params = init_params(key_p)
    prepared = prepare_params(params, bn_params)

    img = generator_forward(z, prepared)
    jax.block_until_ready(img)

    assert img.shape == (BATCH, CHANNELS, IMG_SIZE, IMG_SIZE), img.shape
    assert img.dtype == jnp.float32
    assert bool(jnp.all(jnp.isfinite(img)))
    assert bool(jnp.all(jnp.abs(img) <= 1.0))  # tanh output range

    # Correctness vs a pure-JAX reference using the identical bf16 weights.
    ref = _reference_forward(z, prepared)
    assert bool(jnp.all(jnp.abs(img - ref) <= 5e-2)), float(
        jnp.max(jnp.abs(img - ref)))

    print("KERNEL_OK")
</pallas_src>

<mosaic_0001>
module attributes {stable_mosaic.version = 11 : i64} {
  func.func @generator_kernel(%arg0: memref<8x128xf32, #tpu.memory_space<vmem>>, %arg1: memref<128x128xbf16, #tpu.memory_space<vmem>>, %arg2: memref<128x256xbf16, #tpu.memory_space<vmem>>, %arg3: memref<256x512xbf16, #tpu.memory_space<vmem>>, %arg4: memref<512x1024xbf16, #tpu.memory_space<vmem>>, %arg5: memref<1024x256xbf16, #tpu.memory_space<vmem>>, %arg6: memref<1x3968xf32, #tpu.memory_space<vmem>>, %arg7: memref<8x256xf32, #tpu.memory_space<vmem>>) attributes {dimension_semantics = [], scalar_prefetch = 0 : i64, scratch_operands = 0 : i64, tpu.core_type = #tpu.core_type<tc>} {
    %c0 = arith.constant 0 : index
    %c0_0 = arith.constant 0 : index
    %0 = vector.load %arg0[%c0, %c0_0] : memref<8x128xf32, #tpu.memory_space<vmem>>, vector<8x128xf32>
    %1 = arith.truncf %0 : vector<8x128xf32> to vector<8x128xbf16>
    %c0_1 = arith.constant 0 : index
    %c0_2 = arith.constant 0 : index
    %2 = vector.load %arg1[%c0_1, %c0_2] : memref<128x128xbf16, #tpu.memory_space<vmem>>, vector<128x128xbf16>
    %cst = arith.constant dense<0.000000e+00> : vector<8x128xf32>
    %3 = tpu.matmul %1, %2, %cst {dimension_numbers = #tpu.dot_dimension_numbers<[1], [0], [0], [1], [0, 0, 1, 1], [], []>} : vector<8x128xbf16>, vector<128x128xbf16>, vector<8x128xf32> -> vector<8x128xf32>
    %c0_3 = arith.constant 0 : index
    %c0_4 = arith.constant 0 : index
    %4 = vector.load %arg6[%c0_3, %c0_4] : memref<1x3968xf32, #tpu.memory_space<vmem>>, vector<1x128xf32>
    %5 = vector.broadcast %4 : vector<1x128xf32> to vector<8x128xf32>
    %6 = arith.addf %3, %5 : vector<8x128xf32>
    %cst_5 = arith.constant 0.000000e+00 : f32
    %7 = vector.broadcast %cst_5 : f32 to vector<8x128xf32>
    %8 = arith.cmpf ogt, %6, %7 : vector<8x128xf32>
    %cst_6 = arith.constant 2.000000e-01 : f32
    %9 = vector.broadcast %cst_6 : f32 to vector<8x128xf32>
    %10 = arith.mulf %9, %6 : vector<8x128xf32>
    %11 = arith.select %8, %6, %10 : vector<8x128xi1>, vector<8x128xf32>
    %12 = arith.truncf %11 : vector<8x128xf32> to vector<8x128xbf16>
    %c0_7 = arith.constant 0 : index
    %c0_8 = arith.constant 0 : index
    %13 = vector.load %arg2[%c0_7, %c0_8] : memref<128x256xbf16, #tpu.memory_space<vmem>>, vector<128x256xbf16>
    %cst_9 = arith.constant dense<0.000000e+00> : vector<8x256xf32>
    %14 = tpu.matmul %12, %13, %cst_9 {dimension_numbers = #tpu.dot_dimension_numbers<[1], [0], [0], [1], [0, 0, 1, 1], [], []>} : vector<8x128xbf16>, vector<128x256xbf16>, vector<8x256xf32> -> vector<8x256xf32>
    %c0_10 = arith.constant 0 : index
    %c128 = arith.constant 128 : index
    %15 = vector.load %arg6[%c0_10, %c128] : memref<1x3968xf32, #tpu.memory_space<vmem>>, vector<1x256xf32>
    %c0_11 = arith.constant 0 : index
    %c384 = arith.constant 384 : index
    %16 = vector.load %arg6[%c0_11, %c384] : memref<1x3968xf32, #tpu.memory_space<vmem>>, vector<1x256xf32>
    %cst_12 = arith.constant dense<0.000000e+00> : vector<256xf32>
    %17 = vector.multi_reduction <add>, %14, %cst_12 [0] : vector<8x256xf32> to vector<256xf32>
    %18 = vector.shape_cast %17 : vector<256xf32> to vector<1x256xf32>
    %cst_13 = arith.constant 8.000000e+00 : f32
    %19 = vector.broadcast %cst_13 : f32 to vector<1x256xf32>
    %20 = arith.divf %18, %19 : vector<1x256xf32>
    %21 = vector.broadcast %20 : vector<1x256xf32> to vector<8x256xf32>
    %22 = arith.subf %14, %21 : vector<8x256xf32>
    %23 = arith.mulf %22, %22 : vector<8x256xf32>
    %cst_14 = arith.constant dense<0.000000e+00> : vector<256xf32>
    %24 = vector.multi_reduction <add>, %23, %cst_14 [0] : vector<8x256xf32> to vector<256xf32>
    %25 = vector.shape_cast %24 : vector<256xf32> to vector<1x256xf32>
    %cst_15 = arith.constant 8.000000e+00 : f32
    %26 = vector.broadcast %cst_15 : f32 to vector<1x256xf32>
    %27 = arith.divf %25, %26 : vector<1x256xf32>
    %cst_16 = arith.constant 8.000000e-01 : f32
    %28 = vector.broadcast %cst_16 : f32 to vector<1x256xf32>
    %29 = arith.addf %27, %28 : vector<1x256xf32>
    %30 = math.rsqrt %29 : vector<1x256xf32>
    %31 = arith.mulf %15, %30 : vector<1x256xf32>
    %32 = arith.mulf %20, %31 : vector<1x256xf32>
    %33 = arith.subf %16, %32 : vector<1x256xf32>
    %34 = vector.broadcast %31 : vector<1x256xf32> to vector<8x256xf32>
    %35 = arith.mulf %14, %34 : vector<8x256xf32>
    %36 = vector.broadcast %33 : vector<1x256xf32> to vector<8x256xf32>
    %37 = arith.addf %35, %36 : vector<8x256xf32>
    %cst_17 = arith.constant 0.000000e+00 : f32
    %38 = vector.broadcast %cst_17 : f32 to vector<8x256xf32>
    %39 = arith.cmpf ogt, %37, %38 : vector<8x256xf32>
    %cst_18 = arith.constant 2.000000e-01 : f32
    %40 = vector.broadcast %cst_18 : f32 to vector<8x256xf32>
    %41 = arith.mulf %40, %37 : vector<8x256xf32>
    %42 = arith.select %39, %37, %41 : vector<8x256xi1>, vector<8x256xf32>
    %43 = arith.truncf %42 : vector<8x256xf32> to vector<8x256xbf16>
    %c0_19 = arith.constant 0 : index
    %c0_20 = arith.constant 0 : index
    %44 = vector.load %arg3[%c0_19, %c0_20] : memref<256x512xbf16, #tpu.memory_space<vmem>>, vector<256x512xbf16>
    %cst_21 = arith.constant dense<0.000000e+00> : vector<8x512xf32>
    %45 = tpu.matmul %43, %44, %cst_21 {dimension_numbers = #tpu.dot_dimension_numbers<[1], [0], [0], [1], [0, 0, 1, 1], [], []>} : vector<8x256xbf16>, vector<256x512xbf16>, vector<8x512xf32> -> vector<8x512xf32>
    %c0_22 = arith.constant 0 : index
    %c640 = arith.constant 640 : index
    %46 = vector.load %arg6[%c0_22, %c640] : memref<1x3968xf32, #tpu.memory_space<vmem>>, vector<1x512xf32>
    %c0_23 = arith.constant 0 : index
    %c1152 = arith.constant 1152 : index
    %47 = vector.load %arg6[%c0_23, %c1152] : memref<1x3968xf32, #tpu.memory_space<vmem>>, vector<1x512xf32>
    %cst_24 = arith.constant dense<0.000000e+00> : vector<512xf32>
    %48 = vector.multi_reduction <add>, %45, %cst_24 [0] : vector<8x512xf32> to vector<512xf32>
    %49 = vector.shape_cast %48 : vector<512xf32> to vector<1x512xf32>
    %cst_25 = arith.constant 8.000000e+00 : f32
    %50 = vector.broadcast %cst_25 : f32 to vector<1x512xf32>
    %51 = arith.divf %49, %50 : vector<1x512xf32>
    %52 = vector.broadcast %51 : vector<1x512xf32> to vector<8x512xf32>
    %53 = arith.subf %45, %52 : vector<8x512xf32>
    %54 = arith.mulf %53, %53 : vector<8x512xf32>
    %cst_26 = arith.constant dense<0.000000e+00> : vector<512xf32>
    %55 = vector.multi_reduction <add>, %54, %cst_26 [0] : vector<8x512xf32> to vector<512xf32>
    %56 = vector.shape_cast %55 : vector<512xf32> to vector<1x512xf32>
    %cst_27 = arith.constant 8.000000e+00 : f32
    %57 = vector.broadcast %cst_27 : f32 to vector<1x512xf32>
    %58 = arith.divf %56, %57 : vector<1x512xf32>
    %cst_28 = arith.constant 8.000000e-01 : f32
    %59 = vector.broadcast %cst_28 : f32 to vector<1x512xf32>
    %60 = arith.addf %58, %59 : vector<1x512xf32>
    %61 = math.rsqrt %60 : vector<1x512xf32>
    %62 = arith.mulf %46, %61 : vector<1x512xf32>
    %63 = arith.mulf %51, %62 : vector<1x512xf32>
    %64 = arith.subf %47, %63 : vector<1x512xf32>
    %65 = vector.broadcast %62 : vector<1x512xf32> to vector<8x512xf32>
    %66 = arith.mulf %45, %65 : vector<8x512xf32>
    %67 = vector.broadcast %64 : vector<1x512xf32> to vector<8x512xf32>
    %68 = arith.addf %66, %67 : vector<8x512xf32>
    %cst_29 = arith.constant 0.000000e+00 : f32
    %69 = vector.broadcast %cst_29 : f32 to vector<8x512xf32>
    %70 = arith.cmpf ogt, %68, %69 : vector<8x512xf32>
    %cst_30 = arith.constant 2.000000e-01 : f32
    %71 = vector.broadcast %cst_30 : f32 to vector<8x512xf32>
    %72 = arith.mulf %71, %68 : vector<8x512xf32>
    %73 = arith.select %70, %68, %72 : vector<8x512xi1>, vector<8x512xf32>
    %74 = arith.truncf %73 : vector<8x512xf32> to vector<8x512xbf16>
    %c0_31 = arith.constant 0 : index
    %c0_32 = arith.constant 0 : index
    %75 = vector.load %arg4[%c0_31, %c0_32] : memref<512x1024xbf16, #tpu.memory_space<vmem>>, vector<512x1024xbf16>
    %cst_33 = arith.constant dense<0.000000e+00> : vector<8x1024xf32>
    %76 = tpu.matmul %74, %75, %cst_33 {dimension_numbers = #tpu.dot_dimension_numbers<[1], [0], [0], [1], [0, 0, 1, 1], [], []>} : vector<8x512xbf16>, vector<512x1024xbf16>, vector<8x1024xf32> -> vector<8x1024xf32>
    %c0_34 = arith.constant 0 : index
    %c1664 = arith.constant 1664 : index
    %77 = vector.load %arg6[%c0_34, %c1664] : memref<1x3968xf32, #tpu.memory_space<vmem>>, vector<1x1024xf32>
    %c0_35 = arith.constant 0 : index
    %c2688 = arith.constant 2688 : index
    %78 = vector.load %arg6[%c0_35, %c2688] : memref<1x3968xf32, #tpu.memory_space<vmem>>, vector<1x1024xf32>
    %cst_36 = arith.constant dense<0.000000e+00> : vector<1024xf32>
    %79 = vector.multi_reduction <add>, %76, %cst_36 [0] : vector<8x1024xf32> to vector<1024xf32>
    %80 = vector.shape_cast %79 : vector<1024xf32> to vector<1x1024xf32>
    %cst_37 = arith.constant 8.000000e+00 : f32
    %81 = vector.broadcast %cst_37 : f32 to vector<1x1024xf32>
    %82 = arith.divf %80, %81 : vector<1x1024xf32>
    %83 = vector.broadcast %82 : vector<1x1024xf32> to vector<8x1024xf32>
    %84 = arith.subf %76, %83 : vector<8x1024xf32>
    %85 = arith.mulf %84, %84 : vector<8x1024xf32>
    %cst_38 = arith.constant dense<0.000000e+00> : vector<1024xf32>
    %86 = vector.multi_reduction <add>, %85, %cst_38 [0] : vector<8x1024xf32> to vector<1024xf32>
    %87 = vector.shape_cast %86 : vector<1024xf32> to vector<1x1024xf32>
    %cst_39 = arith.constant 8.000000e+00 : f32
    %88 = vector.broadcast %cst_39 : f32 to vector<1x1024xf32>
    %89 = arith.divf %87, %88 : vector<1x1024xf32>
    %cst_40 = arith.constant 8.000000e-01 : f32
    %90 = vector.broadcast %cst_40 : f32 to vector<1x1024xf32>
    %91 = arith.addf %89, %90 : vector<1x1024xf32>
    %92 = math.rsqrt %91 : vector<1x1024xf32>
    %93 = arith.mulf %77, %92 : vector<1x1024xf32>
    %94 = arith.mulf %82, %93 : vector<1x1024xf32>
    %95 = arith.subf %78, %94 : vector<1x1024xf32>
    %96 = vector.broadcast %93 : vector<1x1024xf32> to vector<8x1024xf32>
    %97 = arith.mulf %76, %96 : vector<8x1024xf32>
    %98 = vector.broadcast %95 : vector<1x1024xf32> to vector<8x1024xf32>
    %99 = arith.addf %97, %98 : vector<8x1024xf32>
    %cst_41 = arith.constant 0.000000e+00 : f32
    %100 = vector.broadcast %cst_41 : f32 to vector<8x1024xf32>
    %101 = arith.cmpf ogt, %99, %100 : vector<8x1024xf32>
    %cst_42 = arith.constant 2.000000e-01 : f32
    %102 = vector.broadcast %cst_42 : f32 to vector<8x1024xf32>
    %103 = arith.mulf %102, %99 : vector<8x1024xf32>
    %104 = arith.select %101, %99, %103 : vector<8x1024xi1>, vector<8x1024xf32>
    %105 = arith.truncf %104 : vector<8x1024xf32> to vector<8x1024xbf16>
    %c0_43 = arith.constant 0 : index
    %c0_44 = arith.constant 0 : index
    %106 = vector.load %arg5[%c0_43, %c0_44] : memref<1024x256xbf16, #tpu.memory_space<vmem>>, vector<1024x256xbf16>
    %cst_45 = arith.constant dense<0.000000e+00> : vector<8x256xf32>
    %107 = tpu.matmul %105, %106, %cst_45 {dimension_numbers = #tpu.dot_dimension_numbers<[1], [0], [0], [1], [0, 0, 1, 1], [], []>} : vector<8x1024xbf16>, vector<1024x256xbf16>, vector<8x256xf32> -> vector<8x256xf32>
    %c0_46 = arith.constant 0 : index
    %c3712 = arith.constant 3712 : index
    %108 = vector.load %arg6[%c0_46, %c3712] : memref<1x3968xf32, #tpu.memory_space<vmem>>, vector<1x256xf32>
    %109 = vector.broadcast %108 : vector<1x256xf32> to vector<8x256xf32>
    %110 = arith.addf %107, %109 : vector<8x256xf32>
    %111 = math.tanh %110 : vector<8x256xf32>
    %c0_47 = arith.constant 0 : index
    %c0_48 = arith.constant 0 : index
    %112 = vector.load %arg7[%c0_47, %c0_48] : memref<8x256xf32, #tpu.memory_space<vmem>>, vector<8x256xf32>
    tpu.vector_store %arg7[%c0_47, %c0_48], %111 {strides = array<i32>} : memref<8x256xf32, #tpu.memory_space<vmem>>, vector<8x256xf32>,
    return
  }
}

</mosaic_0001>

<llo_original>
// kernel: generator_forward.1
$region0: #{generator_forward.1}
  #allocation0 [shape = 'u32[]', space=smem, size = 0x4, offset = 0x4, fixed_abs, tag = 'smem constant byte address 0x4 - core index']
  #allocation1 [shape = 'u32[144,128]{1,0:T(1,128)}', space=vmem, size = 0x12000, scoped, tag = 'internal scratch']
  %s0 = inlined_call_operand.vmem [shape: f32[8,128], index: 0, kind: input, shape index: {}]
  %s1 = inlined_call_operand.hbm [shape: bf16[128,128], index: 1, kind: input, shape index: {}]
  %s2 = inlined_call_operand.hbm [shape: bf16[128,256], index: 2, kind: input, shape index: {}]
  %s3 = inlined_call_operand.hbm [shape: bf16[256,512], index: 3, kind: input, shape index: {}]
  %s4 = inlined_call_operand.hbm [shape: bf16[512,1024], index: 4, kind: input, shape index: {}]
  %s5 = inlined_call_operand.hbm [shape: bf16[1024,256], index: 5, kind: input, shape index: {}]
  %s6 = inlined_call_operand.vmem [shape: f32[1,3968], index: 6, kind: input, shape index: {}]
  %s7 = inlined_call_operand.vmem [shape: f32[8,256], index: 7, kind: output, shape index: {}]
  %s8 = sld [smem:[#allocation0]]
  $region58: #{generator_forward.1} parent=0
    _
  %s10 = ssub.s32 1, %s8
  %s11 = scalar_select 0, %s10, %s8
  $region1: #{generator_forward.1} parent=0
    #allocation2 [shape = 'u8[32768]{0}', space=vmem, size = 0x8000, scoped, tag = 'input window, operand 1, single buffered']
    #allocation3 [shape = 's32[1]{0}', space=sflag, size = 0x4, scoped, tag = 'scoped memory for generator_forward.1']
    #allocation4 [shape = 'u8[65536]{0}', space=vmem, size = 0x10000, scoped, tag = 'input window, operand 2, single buffered']
    #allocation5 [shape = 's32[1]{0}', space=sflag, size = 0x4, scoped, tag = 'scoped memory for generator_forward.1']
    #allocation6 [shape = 'u8[262144]{0}', space=vmem, size = 0x40000, scoped, tag = 'input window, operand 3, single buffered']
    #allocation7 [shape = 'u8[1048576]{0}', space=vmem, size = 0x100000, scoped, tag = 'input window, operand 4, single buffered']
    #allocation8 [shape = 's32[1]{0}', space=sflag, size = 0x4, scoped, tag = 'scoped memory for generator_forward.1']
    #allocation9 [shape = 'u8[524288]{0}', space=vmem, size = 0x80000, scoped, tag = 'input window, operand 5, single buffered']
    %12 = vsyncpa [#allocation3], 0
    %13 = vsyncpa [#allocation5], 0
    %14 = vsyncpa [#allocation8], 0
    // Predicated region
    $region2: #{generator_forward.1} parent=1 // pred_check
      _
    $region3: #{generator_forward.1} parent=1 // pred_check_branch
      %16 = sbr.rel (0) target = $region5
    $region4: #{generator_forward.1} parent=1 // pred_region
      _
    $region5: #{generator_forward.1} parent=1 // pred_fallthru
      _
    // Predicated region
    $region6: #{generator_forward.1} parent=1 // pred_check
      _
    $region7: #{generator_forward.1} parent=1 // pred_check_branch
      %18 = sbr.rel (0) target = $region9
    $region8: #{generator_forward.1} parent=1 // pred_region
      %s20 = ssub.s32 1024, 1024
      %21 = vsyncadd [#allocation3], %s20
      %s22 = sshll.u32 [#allocation2], 4
      %s23 = int_to_ptr.vmem [resolvable:$true] %s22
      %28 = dma.hbm_to_vmem [thread:$0]  %s1, 1024, %s23, [#allocation3], 64, 64, 4
    $region9: #{generator_forward.1} parent=1 // pred_fallthru
      _
    // Predicated region
    $region10: #{generator_forward.1} parent=1 // pred_check
      _
    $region11: #{generator_forward.1} parent=1 // pred_check_branch
      %30 = sbr.rel (0) target = $region13
    $region12: #{generator_forward.1} parent=1 // pred_region
      %s32 = ssub.s32 2048, 2048
      %33 = vsyncadd [#allocation5], %s32
      %s34 = sshll.u32 [#allocation4], 4
      %s35 = int_to_ptr.vmem [resolvable:$true] %s34
      %40 = dma.hbm_to_vmem [thread:$0]  %s2, 2048, %s35, [#allocation5], 128, 128, 8
    $region13: #{generator_forward.1} parent=1 // pred_fallthru
      _
    // Predicated region
    $region14: #{generator_forward.1} parent=1 // pred_check
      _
    $region15: #{generator_forward.1} parent=1 // pred_check_branch
      %42 = sbr.rel (0) target = $region17
    $region16: #{generator_forward.1} parent=1 // pred_region
      %s44 = ssub.s32 8192, 8192
      %45 = vsyncadd [#allocation5], %s44
      %s46 = sshll.u32 [#allocation6], 4
      %s47 = int_to_ptr.vmem [resolvable:$true] %s46
      %52 = dma.hbm_to_vmem [thread:$0]  %s3, 8192, %s47, [#allocation5], 256, 256, 16
    $region17: #{generator_forward.1} parent=1 // pred_fallthru
      _
    // Predicated region
    $region18: #{generator_forward.1} parent=1 // pred_check
      _
    $region19: #{generator_forward.1} parent=1 // pred_check_branch
      %54 = sbr.rel (0) target = $region21
    $region20: #{generator_forward.1} parent=1 // pred_region
      %s56 = ssub.s32 32768, 32768
      %57 = vsyncadd [#allocation8], %s56
      %s58 = sshll.u32 [#allocation7], 4
      %s59 = int_to_ptr.vmem [resolvable:$true] %s58
      %64 = dma.hbm_to_vmem [thread:$0]  %s4, 32768, %s59, [#allocation8], 512, 512, 32
    $region21: #{generator_forward.1} parent=1 // pred_fallthru
      _
    // Predicated region
    $region22: #{generator_forward.1} parent=1 // pred_check
      _
    $region23: #{generator_forward.1} parent=1 // pred_check_branch
      %66 = sbr.rel (0) target = $region25
    $region24: #{generator_forward.1} parent=1 // pred_region
      %s68 = ssub.s32 16384, 16384
      %69 = vsyncadd [#allocation8], %s68
      %s70 = sshll.u32 [#allocation9], 4
      %s71 = int_to_ptr.vmem [resolvable:$true] %s70
      %76 = dma.hbm_to_vmem [thread:$0]  %s5, 16384, %s71, [#allocation8], 128, 128, 8
    $region25: #{generator_forward.1} parent=1 // pred_fallthru
      _
    // Predicated region
    $region26: #{generator_forward.1} parent=1 // pred_check
      _
    $region27: #{generator_forward.1} parent=1 // pred_check_branch
      %78 = sbr.rel (0) target = $region29
    $region28: #{generator_forward.1} parent=1 // pred_region
      _
    $region29: #{generator_forward.1} parent=1 // pred_fallthru
      _
    // Predicated region
    $region30: #{generator_forward.1} parent=1 // pred_check
      _
    $region31: #{generator_forward.1} parent=1 // pred_check_branch
      %80 = sbr.rel (0) target = $region33
    $region32: #{generator_forward.1} parent=1 // pred_region
      %81 = dma.done [#allocation3], 1024
    $region33: #{generator_forward.1} parent=1 // pred_fallthru
      _
    // Predicated region
    $region34: #{generator_forward.1} parent=1 // pred_check
      _
    $region35: #{generator_forward.1} parent=1 // pred_check_branch
      %83 = sbr.rel (0) target = $region37
    $region36: #{generator_forward.1} parent=1 // pred_region
      %84 = dma.done [#allocation5], 2048
    $region37: #{generator_forward.1} parent=1 // pred_fallthru
      _
    // Predicated region
    $region38: #{generator_forward.1} parent=1 // pred_check
      _
    $region39: #{generator_forward.1} parent=1 // pred_check_branch
      %86 = sbr.rel (0) target = $region41
    $region40: #{generator_forward.1} parent=1 // pred_region
      %87 = dma.done [#allocation5], 8192
    $region41: #{generator_forward.1} parent=1 // pred_fallthru
      _
    // Predicated region
    $region42: #{generator_forward.1} parent=1 // pred_check
      _
    $region43: #{generator_forward.1} parent=1 // pred_check_branch
      %89 = sbr.rel (0) target = $region45
    $region44: #{generator_forward.1} parent=1 // pred_region
      %90 = dma.done [#allocation8], 32768
    $region45: #{generator_forward.1} parent=1 // pred_fallthru
      _
    // Predicated region
    $region46: #{generator_forward.1} parent=1 // pred_check
      _
    $region47: #{generator_forward.1} parent=1 // pred_check_branch
      %92 = sbr.rel (0) target = $region49
    $region48: #{generator_forward.1} parent=1 // pred_region
      %93 = dma.done [#allocation8], 16384
    $region49: #{generator_forward.1} parent=1 // pred_fallthru
      _
    %v95 = vld [vmem:[%s0] sm:$0xff]
    %v96 = vpack.c.bf16 %v95, %v95
    %v97 = vld [vmem:[#allocation2] sm:$0xf]
    %v98 = vld [vmem:[#allocation2 + $0x4] sm:$0xf]
    %v99 = vld [vmem:[#allocation2 + $0x8] sm:$0xf]
    %v100 = vld [vmem:[#allocation2 + $0xc] sm:$0xf]
    %v101 = vld [vmem:[#allocation2 + $0x10] sm:$0xf]
    %v102 = vld [vmem:[#allocation2 + $0x14] sm:$0xf]
    %v103 = vld [vmem:[#allocation2 + $0x18] sm:$0xf]
    %v104 = vld [vmem:[#allocation2 + $0x1c] sm:$0xf]
    %v105 = vld [vmem:[#allocation2 + $0x20] sm:$0xf]
    %v106 = vld [vmem:[#allocation2 + $0x24] sm:$0xf]
    %v107 = vld [vmem:[#allocation2 + $0x28] sm:$0xf]
    %v108 = vld [vmem:[#allocation2 + $0x2c] sm:$0xf]
    %v109 = vld [vmem:[#allocation2 + $0x30] sm:$0xf]
    %v110 = vld [vmem:[#allocation2 + $0x34] sm:$0xf]
    %v111 = vld [vmem:[#allocation2 + $0x38] sm:$0xf]
    %v112 = vld [vmem:[#allocation2 + $0x3c] sm:$0xf]
    %v113 = vld [vmem:[%s6] sm:$0x1]
    %v115 = vlaneseq
    %v116 = vshrl.u32 %v115, 7
    %v117 = vsub.s32 0, %v116
    %v118 = vrot.slane %v113, %v117
    %v136 = vunpack.c.l.b16 %v97
    %v137 = vunpack.c.l.b16 %v98
    %v138 = vunpack.c.l.b16 %v99
    %v139 = vunpack.c.l.b16 %v100
    %v140 = vunpack.c.l.b16 %v101
    %v141 = vunpack.c.l.b16 %v102
    %v142 = vunpack.c.l.b16 %v103
    %v143 = vunpack.c.l.b16 %v104
    %v144 = vunpack.c.l.b16 %v105
    %v145 = vunpack.c.l.b16 %v106
    %v146 = vunpack.c.l.b16 %v107
    %v147 = vunpack.c.l.b16 %v108
    %v148 = vunpack.c.l.b16 %v109
    %v149 = vunpack.c.l.b16 %v110
    %v150 = vunpack.c.l.b16 %v111
    %v151 = vunpack.c.l.b16 %v112
    %v152 = vpack.c.b16 %v137, %v136
    %v153 = vpack.c.b16 %v139, %v138
    %v154 = vpack.c.b16 %v141, %v140
    %v155 = vpack.c.b16 %v143, %v142
    %v156 = vpack.c.b16 %v145, %v144
    %v157 = vpack.c.b16 %v147, %v146
    %v158 = vpack.c.b16 %v149, %v148
    %v159 = vpack.c.b16 %v151, %v150
    %168 = vmatprep.subr.bf16.mxu0 0
    %169 = vmatpush1.bf16.msra.mxu0 %v152
    %170 = vmatprep.subr.bf16.mxu0 0
    %171 = vmatpush1.bf16.msra.mxu0 %v153
    %172 = vmatprep.subr.bf16.mxu0 0
    %173 = vmatpush1.bf16.msra.mxu0 %v154
    %174 = vmatprep.subr.bf16.mxu0 0
    %175 = vmatpush1.bf16.msra.mxu0 %v155
    %176 = vmatprep.subr.bf16.mxu0 0
    %177 = vmatpush1.bf16.msra.mxu0 %v156
    %178 = vmatprep.subr.bf16.mxu0 0
    %179 = vmatpush1.bf16.msra.mxu0 %v157
    %180 = vmatprep.subr.bf16.mxu0 0
    %181 = vmatpush1.bf16.msra.mxu0 %v158
    %182 = vmatprep.subr.bf16.mxu0 0
    %183 = vmatpush1.bf16.msra.mxu0 %v159
    %184 = vmatprep.subr.bf16.mxu0 0
    %185 = vmatpush1.bf16.msra.mxu0 0
    %186 = vmatprep.subr.bf16.mxu0 0
    %187 = vmatpush1.bf16.msra.mxu0 0
    %188 = vmatprep.subr.bf16.mxu0 0
    %189 = vmatpush1.bf16.msra.mxu0 0
    %190 = vmatprep.subr.bf16.mxu0 0
    %191 = vmatpush1.bf16.msra.mxu0 0
    %192 = vmatprep.subr.bf16.mxu0 0
    %193 = vmatpush1.bf16.msra.mxu0 0
    %194 = vmatprep.subr.bf16.mxu0 0
    %195 = vmatpush1.bf16.msra.mxu0 0
    %196 = vmatprep.subr.bf16.mxu0 0
    %197 = vmatpush1.bf16.msra.mxu0 0
    %198 = vmatprep.subr.bf16.mxu0 0
    %199 = vmatpush1.bf16.msra.mxu0 0
    %200 = vmatprep.mubr.bf16.mxu0 0
    %201 = vmatmul.mubr.bf16.gmra.mrb[0].mxu0 %v96
    %v202 = vpop.f32.mrb[0].mxu0
    %v203 = vadd.f32 %v118, %v202
    %v204 = vpop.f32.mrb[0].mxu0
    %v205 = vpop.f32.mrb[0].mxu0
    %v206 = vpop.f32.mrb[0].mxu0
    %207 = vdwg.mxu0
    %vm208 = vcmp.gt.f32.partialorder %v203, 0.0
    %v209 = vmul.f32 %v203, 0.2
    %v210 = vsel %vm208, %v203, %v209
    %v211 = vpack.c.bf16 %v210, %v210
    %v212 = vld [vmem:[#allocation4] sm:$0xff]
    %v213 = vld [vmem:[#allocation4 + $0x8] sm:$0xff]
    %v214 = vld [vmem:[#allocation4 + $0x10] sm:$0xff]
    %v215 = vld [vmem:[#allocation4 + $0x18] sm:$0xff]
    %v216 = vld [vmem:[#allocation4 + $0x20] sm:$0xff]
    %v217 = vld [vmem:[#allocation4 + $0x28] sm:$0xff]
    %v218 = vld [vmem:[#allocation4 + $0x30] sm:$0xff]
    %v219 = vld [vmem:[#allocation4 + $0x38] sm:$0xff]
    %v220 = vld [vmem:[#allocation4 + $0x40] sm:$0xff]
    %v221 = vld [vmem:[#allocation4 + $0x48] sm:$0xff]
    %v222 = vld [vmem:[#allocation4 + $0x50] sm:$0xff]
    %v223 = vld [vmem:[#allocation4 + $0x58] sm:$0xff]
    %v224 = vld [vmem:[#allocation4 + $0x60] sm:$0xff]
    %v225 = vld [vmem:[#allocation4 + $0x68] sm:$0xff]
    %v226 = vld [vmem:[#allocation4 + $0x70] sm:$0xff]
    %v227 = vld [vmem:[#allocation4 + $0x78] sm:$0xff]
    %v244 = vunpack.c.l.b16 %v212
    %v245 = vunpack.c.h.b16 %v212
    %v246 = vunpack.c.l.b16 %v213
    %v247 = vunpack.c.h.b16 %v213
    %v248 = vunpack.c.l.b16 %v214
    %v249 = vunpack.c.h.b16 %v214
    %v250 = vunpack.c.l.b16 %v215
    %v251 = vunpack.c.h.b16 %v215
    %v252 = vunpack.c.l.b16 %v216
    %v253 = vunpack.c.h.b16 %v216
    %v254 = vunpack.c.l.b16 %v217
    %v255 = vunpack.c.h.b16 %v217
    %v256 = vunpack.c.l.b16 %v218
    %v257 = vunpack.c.h.b16 %v218
    %v258 = vunpack.c.l.b16 %v219
    %v259 = vunpack.c.h.b16 %v219
    %v260 = vunpack.c.l.b16 %v220
    %v261 = vunpack.c.h.b16 %v220
    %v262 = vunpack.c.l.b16 %v221
    %v263 = vunpack.c.h.b16 %v221
    %v264 = vunpack.c.l.b16 %v222
    %v265 = vunpack.c.h.b16 %v222
    %v266 = vunpack.c.l.b16 %v223
    %v267 = vunpack.c.h.b16 %v223
    %v268 = vunpack.c.l.b16 %v224
    %v269 = vunpack.c.h.b16 %v224
    %v270 = vunpack.c.l.b16 %v225
    %v271 = vunpack.c.h.b16 %v225
    %v272 = vunpack.c.l.b16 %v226
    %v273 = vunpack.c.h.b16 %v226
    %v274 = vunpack.c.l.b16 %v227
    %v275 = vunpack.c.h.b16 %v227
    %v276 = vpack.c.b16 %v246, %v244
    %v277 = vpack.c.b16 %v247, %v245
    %v278 = vpack.c.b16 %v250, %v248
    %v279 = vpack.c.b16 %v251, %v249
    %v280 = vpack.c.b16 %v254, %v252
    %v281 = vpack.c.b16 %v255, %v253
    %v282 = vpack.c.b16 %v258, %v256
    %v283 = vpack.c.b16 %v259, %v257
    %v284 = vpack.c.b16 %v262, %v260
    %v285 = vpack.c.b16 %v263, %v261
    %v286 = vpack.c.b16 %v266, %v264
    %v287 = vpack.c.b16 %v267, %v265
    %v288 = vpack.c.b16 %v270, %v268
    %v289 = vpack.c.b16 %v271, %v269
    %v290 = vpack.c.b16 %v274, %v272
    %v291 = vpack.c.b16 %v275, %v273
    %308 = vmatprep.subr.bf16.mxu0 %v277
    %309 = vmatpush1.bf16.msra.mxu0 %v276
    %310 = vmatprep.subr.bf16.mxu0 %v279
    %311 = vmatpush1.bf16.msra.mxu0 %v278
    %312 = vmatprep.subr.bf16.mxu0 %v281
    %313 = vmatpush1.bf16.msra.mxu0 %v280
    %314 = vmatprep.subr.bf16.mxu0 %v283
    %315 = vmatpush1.bf16.msra.mxu0 %v282
    %316 = vmatprep.subr.bf16.mxu0 %v285
    %317 = vmatpush1.bf16.msra.mxu0 %v284
    %318 = vmatprep.subr.bf16.mxu0 %v287
    %319 = vmatpush1.bf16.msra.mxu0 %v286
    %320 = vmatprep.subr.bf16.mxu0 %v289
    %321 = vmatpush1.bf16.msra.mxu0 %v288
    %322 = vmatprep.subr.bf16.mxu0 %v291
    %323 = vmatpush1.bf16.msra.mxu0 %v290
    %324 = vmatprep.subr.bf16.mxu0 0
    %325 = vmatpush1.bf16.msra.mxu0 0
    %326 = vmatprep.subr.bf16.mxu0 0
    %327 = vmatpush1.bf16.msra.mxu0 0
    %328 = vmatprep.subr.bf16.mxu0 0
    %329 = vmatpush1.bf16.msra.mxu0 0
    %330 = vmatprep.subr.bf16.mxu0 0
    %331 = vmatpush1.bf16.msra.mxu0 0
    %332 = vmatprep.subr.bf16.mxu0 0
    %333 = vmatpush1.bf16.msra.mxu0 0
    %334 = vmatprep.subr.bf16.mxu0 0
    %335 = vmatpush1.bf16.msra.mxu0 0
    %336 = vmatprep.subr.bf16.mxu0 0
    %337 = vmatpush1.bf16.msra.mxu0 0
    %338 = vmatprep.subr.bf16.mxu0 0
    %339 = vmatpush1.bf16.msra.mxu0 0
    %340 = vmatprep.mubr.bf16.mxu0 0
    %341 = vmatmul.mubr.bf16.gmra.mrb[0].mxu0 %v211
    %v342 = vpop.f32.mrb[0].mxu0
    %v343 = vadd.f32 0.0, %v342
    %v344 = vpop.f32.mrb[0].mxu0
    %v345 = vadd.f32 0.0, %v344
    %v346 = vpop.f32.mrb[0].mxu0
    %v347 = vpop.f32.mrb[0].mxu0
    %348 = vdwg.mxu0
    %v349 = vld [vmem:[%s6 + $0x1] sm:$0x3]
    %v350 = vld [vmem:[%s6 + $0x3] sm:$0x3]
    %v351 = vrot.slane %v343, 4
    %v352 = vadd.f32 %v343, %v351
    %v353 = vrot.slane %v352, 2
    %v354 = vadd.f32 %v352, %v353
    %v355 = vrot.slane %v354, 1
    %v356 = vadd.f32 %v354, %v355
    %v357 = vrot.slane %v345, 4
    %v358 = vadd.f32 %v345, %v357
    %v359 = vrot.slane %v358, 2
    %v360 = vadd.f32 %v358, %v359
    %v361 = vrot.slane %v360, 1
    %v362 = vadd.f32 %v360, %v361
    %v363 = vrcp.pop 8.0
    %v364 = vmul.f32 %v356, %v363
    %v365 = vmul.f32 %v362, %v363
    %v366 = vsub.f32 %v343, %v364
    %v367 = vsub.f32 %v345, %v365
    %v368 = vmul.f32 %v366, %v366
    %v369 = vmul.f32 %v367, %v367
    %v370 = vrot.slane %v368, 4
    %v371 = vadd.f32 %v368, %v370
    %v372 = vrot.slane %v371, 2
    %v373 = vadd.f32 %v371, %v372
    %v374 = vrot.slane %v373, 1
    %v375 = vadd.f32 %v373, %v374
    %v376 = vrot.slane %v369, 4
    %v377 = vadd.f32 %v369, %v376
    %v378 = vrot.slane %v377, 2
    %v379 = vadd.f32 %v377, %v378
    %v380 = vrot.slane %v379, 1
    %v381 = vadd.f32 %v379, %v380
    %v382 = vmul.f32 %v375, %v363
    %v383 = vmul.f32 %v381, %v363
    %v384 = vadd.f32 %v382, 0.8
    %v385 = vadd.f32 %v383, 0.8
    %v386 = vrsqrt.pop %v384
    %v387 = vrsqrt.pop %v385
    %v390 = vcombine.low %v386, %v387
    %v392 = vunpack.c.l.s4 1966171168
    %v393 = vunpack.c.0.s8 %v392
    %v394 = vlaneseq
    %v395 = vshrl.u32 %v394, 7
    %v396 = vsub.s32 %v393, %v395
    %v397 = vrot.slane %v390, %v396
    %v399 = vunpack.c.l.s4 1966171168
    %v400 = vunpack.c.0.s8 %v399
    %v401 = vlaneseq
    %v402 = vshrl.u32 %v401, 7
    %v403 = vsub.s32 %v400, %v402
    %v404 = vrot.slane %v397, %v403
    %v406 = vmul.f32 %v349, %v404
    %v408 = vlaneseq
    %v409 = vshrl.u32 %v408, 7
    %v410 = vsub.s32 0, %v409
    %v411 = vrot.slane %v406, %v410
    %v412 = vlaneseq
    %v413 = vshrl.u32 %v412, 7
    %v414 = vsub.s32 1, %v413
    %v415 = vrot.slane %v406, %v414
    %v418 = vmul.f32 %v364, %v411
    %v419 = vmul.f32 %v365, %v415
    %v422 = vcombine.low %v418, %v419
    %v424 = vunpack.c.l.s4 1966171168
    %v425 = vunpack.c.0.s8 %v424
    %v426 = vlaneseq
    %v427 = vshrl.u32 %v426, 7
    %v428 = vsub.s32 %v425, %v427
    %v429 = vrot.slane %v422, %v428
    %v431 = vunpack.c.l.s4 1966171168
    %v432 = vunpack.c.0.s8 %v431
    %v433 = vlaneseq
    %v434 = vshrl.u32 %v433, 7
    %v435 = vsub.s32 %v432, %v434
    %v436 = vrot.slane %v429, %v435
    %v438 = vsub.f32 %v350, %v436
    %v439 = vmul.f32 %v343, %v411
    %v440 = vmul.f32 %v345, %v415
    %v442 = vlaneseq
    %v443 = vshrl.u32 %v442, 7
    %v444 = vsub.s32 0, %v443
    %v445 = vrot.slane %v438, %v444
    %v446 = vlaneseq
    %v447 = vshrl.u32 %v446, 7
    %v448 = vsub.s32 1, %v447
    %v449 = vrot.slane %v438, %v448
    %v452 = vadd.f32 %v439, %v445
    %v453 = vadd.f32 %v440, %v449
    %vm454 = vcmp.gt.f32.partialorder %v452, 0.0
    %vm455 = vcmp.gt.f32.partialorder %v453, 0.0
    %v456 = vmul.f32 %v452, 0.2
    %v457 = vmul.f32 %v453, 0.2
    %v458 = vsel %vm454, %v452, %v456
    %v459 = vsel %vm455, %v453, %v457
    %v460 = vpack.c.bf16 %v458, %v458
    %v461 = vpack.c.bf16 %v459, %v459
    %v462 = vld [vmem:[#allocation6] sm:$0xff]
    %v463 = vld [vmem:[#allocation6 + $0x8] sm:$0xff]
    %v464 = vld [vmem:[#allocation6 + $0x10] sm:$0xff]
    %v465 = vld [vmem:[#allocation6 + $0x18] sm:$0xff]
    %v466 = vld [vmem:[#allocation6 + $0x20] sm:$0xff]
    %v467 = vld [vmem:[#allocation6 + $0x28] sm:$0xff]
    %v468 = vld [vmem:[#allocation6 + $0x30] sm:$0xff]
    %v469 = vld [vmem:[#allocation6 + $0x38] sm:$0xff]
    %v470 = vld [vmem:[#allocation6 + $0x40] sm:$0xff]
    %v471 = vld [vmem:[#allocation6 + $0x48] sm:$0xff]
    %v472 = vld [vmem:[#allocation6 + $0x50] sm:$0xff]
    %v473 = vld [vmem:[#allocation6 + $0x58] sm:$0xff]
    %v474 = vld [vmem:[#allocation6 + $0x60] sm:$0xff]
    %v475 = vld [vmem:[#allocation6 + $0x68] sm:$0xff]
    %v476 = vld [vmem:[#allocation6 + $0x70] sm:$0xff]
    %v477 = vld [vmem:[#allocation6 + $0x78] sm:$0xff]
    %v478 = vld [vmem:[#allocation6 + $0x80] sm:$0xff]
    %v479 = vld [vmem:[#allocation6 + $0x88] sm:$0xff]
    %v480 = vld [vmem:[#allocation6 + $0x90] sm:$0xff]
    %v481 = vld [vmem:[#allocation6 + $0x98] sm:$0xff]
    %v482 = vld [vmem:[#allocation6 + $0xa0] sm:$0xff]
    %v483 = vld [vmem:[#allocation6 + $0xa8] sm:$0xff]
    %v484 = vld [vmem:[#allocation6 + $0xb0] sm:$0xff]
    %v485 = vld [vmem:[#allocation6 + $0xb8] sm:$0xff]
    %v486 = vld [vmem:[#allocation6 + $0xc0] sm:$0xff]
    %v487 = vld [vmem:[#allocation6 + $0xc8] sm:$0xff]
    %v488 = vld [vmem:[#allocation6 + $0xd0] sm:$0xff]
    %v489 = vld [vmem:[#allocation6 + $0xd8] sm:$0xff]
    %v490 = vld [vmem:[#allocation6 + $0xe0] sm:$0xff]
    %v491 = vld [vmem:[#allocation6 + $0xe8] sm:$0xff]
    %v492 = vld [vmem:[#allocation6 + $0xf0] sm:$0xff]
    %v493 = vld [vmem:[#allocation6 + $0xf8] sm:$0xff]
    %v494 = vld [vmem:[#allocation6 + $0x100] sm:$0xff]
    %v495 = vld [vmem:[#allocation6 + $0x108] sm:$0xff]
    %v496 = vld [vmem:[#allocation6 + $0x110] sm:$0xff]
    %v497 = vld [vmem:[#allocation6 + $0x118] sm:$0xff]
    %v498 = vld [vmem:[#allocation6 + $0x120] sm:$0xff]
    %v499 = vld [vmem:[#allocation6 + $0x128] sm:$0xff]
    %v500 = vld [vmem:[#allocation6 + $0x130] sm:$0xff]
    %v501 = vld [vmem:[#allocation6 + $0x138] sm:$0xff]
    %v502 = vld [vmem:[#allocation6 + $0x140] sm:$0xff]
    %v503 = vld [vmem:[#allocation6 + $0x148] sm:$0xff]
    %v504 = vld [vmem:[#allocation6 + $0x150] sm:$0xff]
    %v505 = vld [vmem:[#allocation6 + $0x158] sm:$0xff]
    %v506 = vld [vmem:[#allocation6 + $0x160] sm:$0xff]
    %v507 = vld [vmem:[#allocation6 + $0x168] sm:$0xff]
    %v508 = vld [vmem:[#allocation6 + $0x170] sm:$0xff]
    %v509 = vld [vmem:[#allocation6 + $0x178] sm:$0xff]
    %v510 = vld [vmem:[#allocation6 + $0x180] sm:$0xff]
    %v511 = vld [vmem:[#allocation6 + $0x188] sm:$0xff]
    %v512 = vld [vmem:[#allocation6 + $0x190] sm:$0xff]
    %v513 = vld [vmem:[#allocation6 + $0x198] sm:$0xff]
    %v514 = vld [vmem:[#allocation6 + $0x1a0] sm:$0xff]
    %v515 = vld [vmem:[#allocation6 + $0x1a8] sm:$0xff]
    %v516 = vld [vmem:[#allocation6 + $0x1b0] sm:$0xff]
    %v517 = vld [vmem:[#allocation6 + $0x1b8] sm:$0xff]
    %v518 = vld [vmem:[#allocation6 + $0x1c0] sm:$0xff]
    %v519 = vld [vmem:[#allocation6 + $0x1c8] sm:$0xff]
    %v520 = vld [vmem:[#allocation6 + $0x1d0] sm:$0xff]
    %v521 = vld [vmem:[#allocation6 + $0x1d8] sm:$0xff]
    %v522 = vld [vmem:[#allocation6 + $0x1e0] sm:$0xff]
    %v523 = vld [vmem:[#allocation6 + $0x1e8] sm:$0xff]
    %v524 = vld [vmem:[#allocation6 + $0x1f0] sm:$0xff]
    %v525 = vld [vmem:[#allocation6 + $0x1f8] sm:$0xff]
    %v590 = vunpack.c.l.b16 %v462
    %v591 = vunpack.c.h.b16 %v462
    %v592 = vunpack.c.l.b16 %v463
    %v593 = vunpack.c.h.b16 %v463
    %v594 = vunpack.c.l.b16 %v464
    %v595 = vunpack.c.h.b16 %v464
    %v596 = vunpack.c.l.b16 %v465
    %v597 = vunpack.c.h.b16 %v465
    %v598 = vunpack.c.l.b16 %v466
    %v599 = vunpack.c.h.b16 %v466
    %v600 = vunpack.c.l.b16 %v467
    %v601 = vunpack.c.h.b16 %v467
    %v602 = vunpack.c.l.b16 %v468
    %v603 = vunpack.c.h.b16 %v468
    %v604 = vunpack.c.l.b16 %v469
    %v605 = vunpack.c.h.b16 %v469
    %v606 = vunpack.c.l.b16 %v470
    %v607 = vunpack.c.h.b16 %v470
    %v608 = vunpack.c.l.b16 %v471
    %v609 = vunpack.c.h.b16 %v471
    %v610 = vunpack.c.l.b16 %v472
    %v611 = vunpack.c.h.b16 %v472
    %v612 = vunpack.c.l.b16 %v473
    %v613 = vunpack.c.h.b16 %v473
    %v614 = vunpack.c.l.b16 %v474
    %v615 = vunpack.c.h.b16 %v474
    %v616 = vunpack.c.l.b16 %v475
    %v617 = vunpack.c.h.b16 %v475
    %v618 = vunpack.c.l.b16 %v476
    %v619 = vunpack.c.h.b16 %v476
    %v620 = vunpack.c.l.b16 %v477
    %v621 = vunpack.c.h.b16 %v477
    %v622 = vunpack.c.l.b16 %v478
    %v623 = vunpack.c.h.b16 %v478
    %v624 = vunpack.c.l.b16 %v479
    %v625 = vunpack.c.h.b16 %v479
    %v626 = vunpack.c.l.b16 %v480
    %v627 = vunpack.c.h.b16 %v480
    %v628 = vunpack.c.l.b16 %v481
    %v629 = vunpack.c.h.b16 %v481
    %v630 = vunpack.c.l.b16 %v482
    %v631 = vunpack.c.h.b16 %v482
    %v632 = vunpack.c.l.b16 %v483
    %v633 = vunpack.c.h.b16 %v483
    %v634 = vunpack.c.l.b16 %v484
    %v635 = vunpack.c.h.b16 %v484
    %v636 = vunpack.c.l.b16 %v485
    %v637 = vunpack.c.h.b16 %v485
    %v638 = vunpack.c.l.b16 %v486
    %v639 = vunpack.c.h.b16 %v486
    %v640 = vunpack.c.l.b16 %v487
    %v641 = vunpack.c.h.b16 %v487
    %v642 = vunpack.c.l.b16 %v488
    %v643 = vunpack.c.h.b16 %v488
    %v644 = vunpack.c.l.b16 %v489
    %v645 = vunpack.c.h.b16 %v489
    %v646 = vunpack.c.l.b16 %v490
    %v647 = vunpack.c.h.b16 %v490
    %v648 = vunpack.c.l.b16 %v491
    %v649 = vunpack.c.h.b16 %v491
    %v650 = vunpack.c.l.b16 %v492
    %v651 = vunpack.c.h.b16 %v492
    %v652 = vunpack.c.l.b16 %v493
    %v653 = vunpack.c.h.b16 %v493
    %v654 = vunpack.c.l.b16 %v494
    %v655 = vunpack.c.h.b16 %v494
    %v656 = vunpack.c.l.b16 %v495
    %v657 = vunpack.c.h.b16 %v495
    %v658 = vunpack.c.l.b16 %v496
    %v659 = vunpack.c.h.b16 %v496
    %v660 = vunpack.c.l.b16 %v497
    %v661 = vunpack.c.h.b16 %v497
    %v662 = vunpack.c.l.b16 %v498
    %v663 = vunpack.c.h.b16 %v498
    %v664 = vunpack.c.l.b16 %v499
    %v665 = vunpack.c.h.b16 %v499
    %v666 = vunpack.c.l.b16 %v500
    %v667 = vunpack.c.h.b16 %v500
    %v668 = vunpack.c.l.b16 %v501
    %v669 = vunpack.c.h.b16 %v501
    %v670 = vunpack.c.l.b16 %v502
    %v671 = vunpack.c.h.b16 %v502
    %v672 = vunpack.c.l.b16 %v503
    %v673 = vunpack.c.h.b16 %v503
    %v674 = vunpack.c.l.b16 %v504
    %v675 = vunpack.c.h.b16 %v504
    %v676 = vunpack.c.l.b16 %v505
    %v677 = vunpack.c.h.b16 %v505
    %v678 = vunpack.c.l.b16 %v506
    %v679 = vunpack.c.h.b16 %v506
    %v680 = vunpack.c.l.b16 %v507
    %v681 = vunpack.c.h.b16 %v507
    %v682 = vunpack.c.l.b16 %v508
    %v683 = vunpack.c.h.b16 %v508
    %v684 = vunpack.c.l.b16 %v509
    %v685 = vunpack.c.h.b16 %v509
    %v686 = vunpack.c.l.b16 %v510
    %v687 = vunpack.c.h.b16 %v510
    %v688 = vunpack.c.l.b16 %v511
    %v689 = vunpack.c.h.b16 %v511
    %v690 = vunpack.c.l.b16 %v512
    %v691 = vunpack.c.h.b16 %v512
    %v692 = vunpack.c.l.b16 %v513
    %v693 = vunpack.c.h.b16 %v513
    %v694 = vunpack.c.l.b16 %v514
    %v695 = vunpack.c.h.b16 %v514
    %v696 = vunpack.c.l.b16 %v515
    %v697 = vunpack.c.h.b16 %v515
    %v698 = vunpack.c.l.b16 %v516
    %v699 = vunpack.c.h.b16 %v516
    %v700 = vunpack.c.l.b16 %v517
    %v701 = vunpack.c.h.b16 %v517
    %v702 = vunpack.c.l.b16 %v518
    %v703 = vunpack.c.h.b16 %v518
    %v704 = vunpack.c.l.b16 %v519
    %v705 = vunpack.c.h.b16 %v519
    %v706 = vunpack.c.l.b16 %v520
    %v707 = vunpack.c.h.b16 %v520
    %v708 = vunpack.c.l.b16 %v521
    %v709 = vunpack.c.h.b16 %v521
    %v710 = vunpack.c.l.b16 %v522
    %v711 = vunpack.c.h.b16 %v522
    %v712 = vunpack.c.l.b16 %v523
    %v713 = vunpack.c.h.b16 %v523
    %v714 = vunpack.c.l.b16 %v524
    %v715 = vunpack.c.h.b16 %v524
    %v716 = vunpack.c.l.b16 %v525
    %v717 = vunpack.c.h.b16 %v525
    %v718 = vpack.c.b16 %v594, %v590
    %v719 = vpack.c.b16 %v595, %v591
    %v720 = vpack.c.b16 %v596, %v592
    %v721 = vpack.c.b16 %v597, %v593
    %v722 = vpack.c.b16 %v602, %v598
    %v723 = vpack.c.b16 %v603, %v599
    %v724 = vpack.c.b16 %v604, %v600
    %v725 = vpack.c.b16 %v605, %v601
    %v726 = vpack.c.b16 %v610, %v606
    %v727 = vpack.c.b16 %v611, %v607
    %v728 = vpack.c.b16 %v612, %v608
    %v729 = vpack.c.b16 %v613, %v609
    %v730 = vpack.c.b16 %v618, %v614
    %v731 = vpack.c.b16 %v619, %v615
    %v732 = vpack.c.b16 %v620, %v616
    %v733 = vpack.c.b16 %v621, %v617
    %v734 = vpack.c.b16 %v626, %v622
    %v735 = vpack.c.b16 %v627, %v623
    %v736 = vpack.c.b16 %v628, %v624
    %v737 = vpack.c.b16 %v629, %v625
    %v738 = vpack.c.b16 %v634, %v630
    %v739 = vpack.c.b16 %v635, %v631
    %v740 = vpack.c.b16 %v636, %v632
    %v741 = vpack.c.b16 %v637, %v633
    %v742 = vpack.c.b16 %v642, %v638
    %v743 = vpack.c.b16 %v643, %v639
    %v744 = vpack.c.b16 %v644, %v640
    %v745 = vpack.c.b16 %v645, %v641
    %v746 = vpack.c.b16 %v650, %v646
    %v747 = vpack.c.b16 %v651, %v647
    %v748 = vpack.c.b16 %v652, %v648
    %v749 = vpack.c.b16 %v653, %v649
    %v750 = vpack.c.b16 %v658, %v654
    %v751 = vpack.c.b16 %v659, %v655
    %v752 = vpack.c.b16 %v660, %v656
    %v753 = vpack.c.b16 %v661, %v657
    %v754 = vpack.c.b16 %v666, %v662
    %v755 = vpack.c.b16 %v667, %v663
    %v756 = vpack.c.b16 %v668, %v664
    %v757 = vpack.c.b16 %v669, %v665
    %v758 = vpack.c.b16 %v674, %v670
    %v759 = vpack.c.b16 %v675, %v671
    %v760 = vpack.c.b16 %v676, %v672
    %v761 = vpack.c.b16 %v677, %v673
    %v762 = vpack.c.b16 %v682, %v678
    %v763 = vpack.c.b16 %v683, %v679
    %v764 = vpack.c.b16 %v684, %v680
    %v765 = vpack.c.b16 %v685, %v681
    %v766 = vpack.c.b16 %v690, %v686
    %v767 = vpack.c.b16 %v691, %v687
    %v768 = vpack.c.b16 %v692, %v688
    %v769 = vpack.c.b16 %v693, %v689
    %v770 = vpack.c.b16 %v698, %v694
    %v771 = vpack.c.b16 %v699, %v695
    %v772 = vpack.c.b16 %v700, %v696
    %v773 = vpack.c.b16 %v701, %v697
    %v774 = vpack.c.b16 %v706, %v702
    %v775 = vpack.c.b16 %v707, %v703
    %v776 = vpack.c.b16 %v708, %v704
    %v777 = vpack.c.b16 %v709, %v705
    %v778 = vpack.c.b16 %v714, %v710
    %v779 = vpack.c.b16 %v715, %v711
    %v780 = vpack.c.b16 %v716, %v712
    %v781 = vpack.c.b16 %v717, %v713
    %846 = vmatprep.subr.bf16.mxu0 %v719
    %847 = vmatpush1.bf16.msra.mxu0 %v718
    %848 = vmatprep.subr.bf16.mxu0 %v723
    %849 = vmatpush1.bf16.msra.mxu0 %v722
    %850 = vmatprep.subr.bf16.mxu0 %v727
    %851 = vmatpush1.bf16.msra.mxu0 %v726
    %852 = vmatprep.subr.bf16.mxu0 %v731
    %853 = vmatpush1.bf16.msra.mxu0 %v730
    %854 = vmatprep.subr.bf16.mxu0 %v735
    %855 = vmatpush1.bf16.msra.mxu0 %v734
    %856 = vmatprep.subr.bf16.mxu0 %v739
    %857 = vmatpush1.bf16.msra.mxu0 %v738
    %858 = vmatprep.subr.bf16.mxu0 %v743
    %859 = vmatpush1.bf16.msra.mxu0 %v742
    %860 = vmatprep.subr.bf16.mxu0 %v747
    %861 = vmatpush1.bf16.msra.mxu0 %v746
    %862 = vmatprep.subr.bf16.mxu0 %v751
    %863 = vmatpush1.bf16.msra.mxu0 %v750
    %864 = vmatprep.subr.bf16.mxu0 %v755
    %865 = vmatpush1.bf16.msra.mxu0 %v754
    %866 = vmatprep.subr.bf16.mxu0 %v759
    %867 = vmatpush1.bf16.msra.mxu0 %v758
    %868 = vmatprep.subr.bf16.mxu0 %v763
    %869 = vmatpush1.bf16.msra.mxu0 %v762
    %870 = vmatprep.subr.bf16.mxu0 %v767
    %871 = vmatpush1.bf16.msra.mxu0 %v766
    %872 = vmatprep.subr.bf16.mxu0 %v771
    %873 = vmatpush1.bf16.msra.mxu0 %v770
    %874 = vmatprep.subr.bf16.mxu0 %v775
    %875 = vmatpush1.bf16.msra.mxu0 %v774
    %876 = vmatprep.subr.bf16.mxu0 %v779
    %877 = vmatpush1.bf16.msra.mxu0 %v778
    %878 = vmatprep.mubr.bf16.mxu0 %v461
    %879 = vmatmul.mubr.bf16.gmra.mrb[0].mxu0 %v460
    %v880 = vpop.f32.mrb[0].mxu0
    %v881 = vadd.f32 0.0, %v880
    %v882 = vpop.f32.mrb[0].mxu0
    %v883 = vadd.f32 0.0, %v882
    %v884 = vpop.f32.mrb[0].mxu0
    %v885 = vpop.f32.mrb[0].mxu0
    %886 = vdwg.mxu0
    %887 = vmatprep.subr.bf16.mxu0 %v721
    %888 = vmatpush1.bf16.msra.mxu0 %v720
    %889 = vmatprep.subr.bf16.mxu0 %v725
    %890 = vmatpush1.bf16.msra.mxu0 %v724
    %891 = vmatprep.subr.bf16.mxu0 %v729
    %892 = vmatpush1.bf16.msra.mxu0 %v728
    %893 = vmatprep.subr.bf16.mxu0 %v733
    %894 = vmatpush1.bf16.msra.mxu0 %v732
    %895 = vmatprep.subr.bf16.mxu0 %v737
    %896 = vmatpush1.bf16.msra.mxu0 %v736
    %897 = vmatprep.subr.bf16.mxu0 %v741
    %898 = vmatpush1.bf16.msra.mxu0 %v740
    %899 = vmatprep.subr.bf16.mxu0 %v745
    %900 = vmatpush1.bf16.msra.mxu0 %v744
    %901 = vmatprep.subr.bf16.mxu0 %v749
    %902 = vmatpush1.bf16.msra.mxu0 %v748
    %903 = vmatprep.subr.bf16.mxu0 %v753
    %904 = vmatpush1.bf16.msra.mxu0 %v752
    %905 = vmatprep.subr.bf16.mxu0 %v757
    %906 = vmatpush1.bf16.msra.mxu0 %v756
    %907 = vmatprep.subr.bf16.mxu0 %v761
    %908 = vmatpush1.bf16.msra.mxu0 %v760
    %909 = vmatprep.subr.bf16.mxu0 %v765
    %910 = vmatpush1.bf16.msra.mxu0 %v764
    %911 = vmatprep.subr.bf16.mxu0 %v769
    %912 = vmatpush1.bf16.msra.mxu0 %v768
    %913 = vmatprep.subr.bf16.mxu0 %v773
    %914 = vmatpush1.bf16.msra.mxu0 %v772
    %915 = vmatprep.subr.bf16.mxu0 %v777
    %916 = vmatpush1.bf16.msra.mxu0 %v776
    %917 = vmatprep.subr.bf16.mxu0 %v781
    %918 = vmatpush1.bf16.msra.mxu0 %v780
    %919 = vmatprep.mubr.bf16.mxu0 %v461
    %920 = vmatmul.mubr.bf16.gmra.mrb[0].mxu0 %v460
    %v921 = vpop.f32.mrb[0].mxu0
    %v922 = vadd.f32 0.0, %v921
    %v923 = vpop.f32.mrb[0].mxu0
    %v924 = vadd.f32 0.0, %v923
    %v925 = vpop.f32.mrb[0].mxu0
    %v926 = vpop.f32.mrb[0].mxu0
    %927 = vdwg.mxu0
    %v928 = vld [vmem:[%s6 + $0x5] sm:$0xf]
    %v929 = vld [vmem:[%s6 + $0x9] sm:$0xf]
    %v930 = vrot.slane %v881, 4
    %v931 = vadd.f32 %v881, %v930
    %v932 = vrot.slane %v931, 2
    %v933 = vadd.f32 %v931, %v932
    %v934 = vrot.slane %v933, 1
    %v935 = vadd.f32 %v933, %v934
    %v936 = vrot.slane %v883, 4
    %v937 = vadd.f32 %v883, %v936
    %v938 = vrot.slane %v937, 2
    %v939 = vadd.f32 %v937, %v938
    %v940 = vrot.slane %v939, 1
    %v941 = vadd.f32 %v939, %v940
    %v942 = vrot.slane %v922, 4
    %v943 = vadd.f32 %v922, %v942
    %v944 = vrot.slane %v943, 2
    %v945 = vadd.f32 %v943, %v944
    %v946 = vrot.slane %v945, 1
    %v947 = vadd.f32 %v945, %v946
    %v948 = vrot.slane %v924, 4
    %v949 = vadd.f32 %v924, %v948
    %v950 = vrot.slane %v949, 2
    %v951 = vadd.f32 %v949, %v950
    %v952 = vrot.slane %v951, 1
    %v953 = vadd.f32 %v951, %v952
    %v954 = vmul.f32 %v935, %v363
    %v955 = vmul.f32 %v941, %v363
    %v956 = vmul.f32 %v947, %v363
    %v957 = vmul.f32 %v953, %v363
    %v958 = vsub.f32 %v881, %v954
    %v959 = vsub.f32 %v883, %v955
    %v960 = vsub.f32 %v922, %v956
    %v961 = vsub.f32 %v924, %v957
    %v962 = vmul.f32 %v958, %v958
    %v963 = vmul.f32 %v959, %v959
    %v964 = vmul.f32 %v960, %v960
    %v965 = vmul.f32 %v961, %v961
    %v966 = vrot.slane %v962, 4
    %v967 = vadd.f32 %v962, %v966
    %v968 = vrot.slane %v967, 2
    %v969 = vadd.f32 %v967, %v968
    %v970 = vrot.slane %v969, 1
    %v971 = vadd.f32 %v969, %v970
    %v972 = vrot.slane %v963, 4
    %v973 = vadd.f32 %v963, %v972
    %v974 = vrot.slane %v973, 2
    %v975 = vadd.f32 %v973, %v974
    %v976 = vrot.slane %v975, 1
    %v977 = vadd.f32 %v975, %v976
    %v978 = vrot.slane %v964, 4
    %v979 = vadd.f32 %v964, %v978
    %v980 = vrot.slane %v979, 2
    %v981 = vadd.f32 %v979, %v980
    %v982 = vrot.slane %v981, 1
    %v983 = vadd.f32 %v981, %v982
    %v984 = vrot.slane %v965, 4
    %v985 = vadd.f32 %v965, %v984
    %v986 = vrot.slane %v985, 2
    %v987 = vadd.f32 %v985, %v986
    %v988 = vrot.slane %v987, 1
    %v989 = vadd.f32 %v987, %v988
    %v990 = vmul.f32 %v971, %v363
    %v991 = vmul.f32 %v977, %v363
    %v992 = vmul.f32 %v983, %v363
    %v993 = vmul.f32 %v989, %v363
    %v994 = vadd.f32 %v990, 0.8
    %v995 = vadd.f32 %v991, 0.8
    %v996 = vadd.f32 %v992, 0.8
    %v997 = vadd.f32 %v993, 0.8
    %v998 = vrsqrt.pop %v994
    %v999 = vrsqrt.pop %v995
    %v1000 = vrsqrt.pop %v996
    %v1001 = vrsqrt.pop %v997
    %v1006 = vcombine.low %v998, %v999
    %v1007 = vcombine.low %v1000, %v1001
    %v1009 = vunpack.c.l.s4 1966171168
    %v1010 = vunpack.c.0.s8 %v1009
    %v1011 = vlaneseq
    %v1012 = vshrl.u32 %v1011, 7
    %v1013 = vsub.s32 %v1010, %v1012
    %v1014 = vrot.slane %v1006, %v1013
    %v1016 = vunpack.c.l.s4 1966171168
    %v1017 = vunpack.c.0.s8 %v1016
    %v1018 = vlaneseq
    %v1019 = vshrl.u32 %v1018, 7
    %v1020 = vsub.s32 %v1017, %v1019
    %v1021 = vrot.slane %v1007, %v1020
    %v1022 = vcombine.low %v1014, %v1021
    %v1024 = vunpack.c.l.s4 1966171168
    %v1025 = vunpack.c.0.s8 %v1024
    %v1026 = vlaneseq
    %v1027 = vshrl.u32 %v1026, 7
    %v1028 = vsub.s32 %v1025, %v1027
    %v1029 = vrot.slane %v1022, %v1028
    %v1031 = vmul.f32 %v928, %v1029
    %v1033 = vlaneseq
    %v1034 = vshrl.u32 %v1033, 7
    %v1035 = vsub.s32 0, %v1034
    %v1036 = vrot.slane %v1031, %v1035
    %v1037 = vlaneseq
    %v1038 = vshrl.u32 %v1037, 7
    %v1039 = vsub.s32 1, %v1038
    %v1040 = vrot.slane %v1031, %v1039
    %v1041 = vlaneseq
    %v1042 = vshrl.u32 %v1041, 7
    %v1043 = vsub.s32 2, %v1042
    %v1044 = vrot.slane %v1031, %v1043
    %v1045 = vlaneseq
    %v1046 = vshrl.u32 %v1045, 7
    %v1047 = vsub.s32 3, %v1046
    %v1048 = vrot.slane %v1031, %v1047
    %v1053 = vmul.f32 %v954, %v1036
    %v1054 = vmul.f32 %v955, %v1040
    %v1055 = vmul.f32 %v956, %v1044
    %v1056 = vmul.f32 %v957, %v1048
    %v1061 = vcombine.low %v1053, %v1054
    %v1062 = vcombine.low %v1055, %v1056
    %v1064 = vunpack.c.l.s4 1966171168
    %v1065 = vunpack.c.0.s8 %v1064
    %v1066 = vlaneseq
    %v1067 = vshrl.u32 %v1066, 7
    %v1068 = vsub.s32 %v1065, %v1067
    %v1069 = vrot.slane %v1061, %v1068
    %v1071 = vunpack.c.l.s4 1966171168
    %v1072 = vunpack.c.0.s8 %v1071
    %v1073 = vlaneseq
    %v1074 = vshrl.u32 %v1073, 7
    %v1075 = vsub.s32 %v1072, %v1074
    %v1076 = vrot.slane %v1062, %v1075
    %v1077 = vcombine.low %v1069, %v1076
    %v1079 = vunpack.c.l.s4 1966171168
    %v1080 = vunpack.c.0.s8 %v1079
    %v1081 = vlaneseq
    %v1082 = vshrl.u32 %v1081, 7
    %v1083 = vsub.s32 %v1080, %v1082
    %v1084 = vrot.slane %v1077, %v1083
    %v1086 = vsub.f32 %v929, %v1084
    %v1087 = vmul.f32 %v881, %v1036
    %v1088 = vmul.f32 %v883, %v1040
    %v1089 = vmul.f32 %v922, %v1044
    %v1090 = vmul.f32 %v924, %v1048
    %v1092 = vlaneseq
    %v1093 = vshrl.u32 %v1092, 7
    %v1094 = vsub.s32 0, %v1093
    %v1095 = vrot.slane %v1086, %v1094
    %v1096 = vlaneseq
    %v1097 = vshrl.u32 %v1096, 7
    %v1098 = vsub.s32 1, %v1097
    %v1099 = vrot.slane %v1086, %v1098
    %v1100 = vlaneseq
    %v1101 = vshrl.u32 %v1100, 7
    %v1102 = vsub.s32 2, %v1101
    %v1103 = vrot.slane %v1086, %v1102
    %v1104 = vlaneseq
    %v1105 = vshrl.u32 %v1104, 7
    %v1106 = vsub.s32 3, %v1105
    %v1107 = vrot.slane %v1086, %v1106
    %v1112 = vadd.f32 %v1087, %v1095
    %v1113 = vadd.f32 %v1088, %v1099
    %v1114 = vadd.f32 %v1089, %v1103
    %v1115 = vadd.f32 %v1090, %v1107
    %vm1116 = vcmp.gt.f32.partialorder %v1112, 0.0
    %vm1117 = vcmp.gt.f32.partialorder %v1113, 0.0
    %vm1118 = vcmp.gt.f32.partialorder %v1114, 0.0
    %vm1119 = vcmp.gt.f32.partialorder %v1115, 0.0
    %v1120 = vmul.f32 %v1112, 0.2
    %v1121 = vmul.f32 %v1113, 0.2
    %v1122 = vmul.f32 %v1114, 0.2
    %v1123 = vmul.f32 %v1115, 0.2
    %v1124 = vsel %vm1116, %v1112, %v1120
    %v1125 = vsel %vm1117, %v1113, %v1121
    %v1126 = vsel %vm1118, %v1114, %v1122
    %v1127 = vsel %vm1119, %v1115, %v1123
    %v1128 = vpack.c.bf16 %v1124, %v1124
    %v1129 = vpack.c.bf16 %v1125, %v1125
    %v1130 = vpack.c.bf16 %v1126, %v1126
    %v1131 = vpack.c.bf16 %v1127, %v1127
    %v1132 = vld [vmem:[#allocation7] sm:$0xff]
    %v1133 = vld [vmem:[#allocation7 + $0x8] sm:$0xff]
    %v1134 = vld [vmem:[#allocation7 + $0x10] sm:$0xff]
    %v1135 = vld [vmem:[#allocation7 + $0x18] sm:$0xff]
    %v1136 = vld [vmem:[#allocation7 + $0x20] sm:$0xff]
    %v1137 = vld [vmem:[#allocation7 + $0x28] sm:$0xff]
    %v1138 = vld [vmem:[#allocation7 + $0x30] sm:$0xff]
    %v1139 = vld [vmem:[#allocation7 + $0x38] sm:$0xff]
    %v1140 = vld [vmem:[#allocation7 + $0x40] sm:$0xff]
    %v1141 = vld [vmem:[#allocation7 + $0x48] sm:$0xff]
    %v1142 = vld [vmem:[#allocation7 + $0x50] sm:$0xff]
    %v1143 = vld [vmem:[#allocation7 + $0x58] sm:$0xff]
    %v1144 = vld [vmem:[#allocation7 + $0x60] sm:$0xff]
    %v1145 = vld [vmem:[#allocation7 + $0x68] sm:$0xff]
    %v1146 = vld [vmem:[#allocation7 + $0x70] sm:$0xff]
    %v1147 = vld [vmem:[#allocation7 + $0x78] sm:$0xff]
    %v1148 = vld [vmem:[#allocation7 + $0x80] sm:$0xff]
    %v1149 = vld [vmem:[#allocation7 + $0x88] sm:$0xff]
    %v1150 = vld [vmem:[#allocation7 + $0x90] sm:$0xff]
    %v1151 = vld [vmem:[#allocation7 + $0x98] sm:$0xff]
    %v1152 = vld [vmem:[#allocation7 + $0xa0] sm:$0xff]
    %v1153 = vld [vmem:[#allocation7 + $0xa8] sm:$0xff]
    %v1154 = vld [vmem:[#allocation7 + $0xb0] sm:$0xff]
    %v1155 = vld [vmem:[#allocation7 + $0xb8] sm:$0xff]
    %v1156 = vld [vmem:[#allocation7 + $0xc0] sm:$0xff]
    %v1157 = vld [vmem:[#allocation7 + $0xc8] sm:$0xff]
    %v1158 = vld [vmem:[#allocation7 + $0xd0] sm:$0xff]
    %v1159 = vld [vmem:[#allocation7 + $0xd8] sm:$0xff]
    %v1160 = vld [vmem:[#allocation7 + $0xe0] sm:$0xff]
    %v1161 = vld [vmem:[#allocation7 + $0xe8] sm:$0xff]
    %v1162 = vld [vmem:[#allocation7 + $0xf0] sm:$0xff]
    %v1163 = vld [vmem:[#allocation7 + $0xf8] sm:$0xff]
    %v1164 = vld [vmem:[#allocation7 + $0x100] sm:$0xff]
    %v1165 = vld [vmem:[#allocation7 + $0x108] sm:$0xff]
    %v1166 = vld [vmem:[#allocation7 + $0x110] sm:$0xff]
    %v1167 = vld [vmem:[#allocation7 + $0x118] sm:$0xff]
    %v1168 = vld [vmem:[#allocation7 + $0x120] sm:$0xff]
    %v1169 = vld [vmem:[#allocation7 + $0x128] sm:$0xff]
    %v1170 = vld [vmem:[#allocation7 + $0x130] sm:$0xff]
    %v1171 = vld [vmem:[#allocation7 + $0x138] sm:$0xff]
    %v1172 = vld [vmem:[#allocation7 + $0x140] sm:$0xff]
    %v1173 = vld [vmem:[#allocation7 + $0x148] sm:$0xff]
    %v1174 = vld [vmem:[#allocation7 + $0x150] sm:$0xff]
    %v1175 = vld [vmem:[#allocation7 + $0x158] sm:$0xff]
    %v1176 = vld [vmem:[#allocation7 + $0x160] sm:$0xff]
    %v1177 = vld [vmem:[#allocation7 + $0x168] sm:$0xff]
    %v1178 = vld [vmem:[#allocation7 + $0x170] sm:$0xff]
    %v1179 = vld [vmem:[#allocation7 + $0x178] sm:$0xff]
    %v1180 = vld [vmem:[#allocation7 + $0x180] sm:$0xff]
    %v1181 = vld [vmem:[#allocation7 + $0x188] sm:$0xff]
    %v1182 = vld [vmem:[#allocation7 + $0x190] sm:$0xff]
    %v1183 = vld [vmem:[#allocation7 + $0x198] sm:$0xff]
    %v1184 = vld [vmem:[#allocation7 + $0x1a0] sm:$0xff]
    %v1185 = vld [vmem:[#allocation7 + $0x1a8] sm:$0xff]
    %v1186 = vld [vmem:[#allocation7 + $0x1b0] sm:$0xff]
    %v1187 = vld [vmem:[#allocation7 + $0x1b8] sm:$0xff]
    %v1188 = vld [vmem:[#allocation7 + $0x1c0] sm:$0xff]
    %v1189 = vld [vmem:[#allocation7 + $0x1c8] sm:$0xff]
    %v1190 = vld [vmem:[#allocation7 + $0x1d0] sm:$0xff]
    %v1191 = vld [vmem:[#allocation7 + $0x1d8] sm:$0xff]
    %v1192 = vld [vmem:[#allocation7 + $0x1e0] sm:$0xff]
    %v1193 = vld [vmem:[#allocation7 + $0x1e8] sm:$0xff]
    %v1194 = vld [vmem:[#allocation7 + $0x1f0] sm:$0xff]
    %v1195 = vld [vmem:[#allocation7 + $0x1f8] sm:$0xff]
    %v1196 = vld [vmem:[#allocation7 + $0x200] sm:$0xff]
    %v1197 = vld [vmem:[#allocation7 + $0x208] sm:$0xff]
    %v1198 = vld [vmem:[#allocation7 + $0x210] sm:$0xff]
    %v1199 = vld [vmem:[#allocation7 + $0x218] sm:$0xff]
    %v1200 = vld [vmem:[#allocation7 + $0x220] sm:$0xff]
    %v1201 = vld [vmem:[#allocation7 + $0x228] sm:$0xff]
    %v1202 = vld [vmem:[#allocation7 + $0x230] sm:$0xff]
    %v1203 = vld [vmem:[#allocation7 + $0x238] sm:$0xff]
    %v1204 = vld [vmem:[#allocation7 + $0x240] sm:$0xff]
    %v1205 = vld [vmem:[#allocation7 + $0x248] sm:$0xff]
    %v1206 = vld [vmem:[#allocation7 + $0x250] sm:$0xff]
    %v1207 = vld [vmem:[#allocation7 + $0x258] sm:$0xff]
    %v1208 = vld [vmem:[#allocation7 + $0x260] sm:$0xff]
    %v1209 = vld [vmem:[#allocation7 + $0x268] sm:$0xff]
    %v1210 = vld [vmem:[#allocation7 + $0x270] sm:$0xff]
    %v1211 = vld [vmem:[#allocation7 + $0x278] sm:$0xff]
    %v1212 = vld [vmem:[#allocation7 + $0x280] sm:$0xff]
    %v1213 = vld [vmem:[#allocation7 + $0x288] sm:$0xff]
    %v1214 = vld [vmem:[#allocation7 + $0x290] sm:$0xff]
    %v1215 = vld [vmem:[#allocation7 + $0x298] sm:$0xff]
    %v1216 = vld [vmem:[#allocation7 + $0x2a0] sm:$0xff]
    %v1217 = vld [vmem:[#allocation7 + $0x2a8] sm:$0xff]
    %v1218 = vld [vmem:[#allocation7 + $0x2b0] sm:$0xff]
    %v1219 = vld [vmem:[#allocation7 + $0x2b8] sm:$0xff]
    %v1220 = vld [vmem:[#allocation7 + $0x2c0] sm:$0xff]
    %v1221 = vld [vmem:[#allocation7 + $0x2c8] sm:$0xff]
    %v1222 = vld [vmem:[#allocation7 + $0x2d0] sm:$0xff]
    %v1223 = vld [vmem:[#allocation7 + $0x2d8] sm:$0xff]
    %v1224 = vld [vmem:[#allocation7 + $0x2e0] sm:$0xff]
    %v1225 = vld [vmem:[#allocation7 + $0x2e8] sm:$0xff]
    %v1226 = vld [vmem:[#allocation7 + $0x2f0] sm:$0xff]
    %v1227 = vld [vmem:[#allocation7 + $0x2f8] sm:$0xff]
    %v1228 = vld [vmem:[#allocation7 + $0x300] sm:$0xff]
    %v1229 = vld [vmem:[#allocation7 + $0x308] sm:$0xff]
    %v1230 = vld [vmem:[#allocation7 + $0x310] sm:$0xff]
    %v1231 = vld [vmem:[#allocation7 + $0x318] sm:$0xff]
    %v1232 = vld [vmem:[#allocation7 + $0x320] sm:$0xff]
    %v1233 = vld [vmem:[#allocation7 + $0x328] sm:$0xff]
    %v1234 = vld [vmem:[#allocation7 + $0x330] sm:$0xff]
    %v1235 = vld [vmem:[#allocation7 + $0x338] sm:$0xff]
    %v1236 = vld [vmem:[#allocation7 + $0x340] sm:$0xff]
    %v1237 = vld [vmem:[#allocation7 + $0x348] sm:$0xff]
    %v1238 = vld [vmem:[#allocation7 + $0x350] sm:$0xff]
    %v1239 = vld [vmem:[#allocation7 + $0x358] sm:$0xff]
    %v1240 = vld [vmem:[#allocation7 + $0x360] sm:$0xff]
    %v1241 = vld [vmem:[#allocation7 + $0x368] sm:$0xff]
    %v1242 = vld [vmem:[#allocation7 + $0x370] sm:$0xff]
    %v1243 = vld [vmem:[#allocation7 + $0x378] sm:$0xff]
    %v1244 = vld [vmem:[#allocation7 + $0x380] sm:$0xff]
    %v1245 = vld [vmem:[#allocation7 + $0x388] sm:$0xff]
    %v1246 = vld [vmem:[#allocation7 + $0x390] sm:$0xff]
    %v1247 = vld [vmem:[#allocation7 + $0x398] sm:$0xff]
    %v1248 = vld [vmem:[#allocation7 + $0x3a0] sm:$0xff]
    %v1249 = vld [vmem:[#allocation7 + $0x3a8] sm:$0xff]
    %v1250 = vld [vmem:[#allocation7 + $0x3b0] sm:$0xff]
    %v1251 = vld [vmem:[#allocation7 + $0x3b8] sm:$0xff]
    %v1252 = vld [vmem:[#allocation7 + $0x3c0] sm:$0xff]
    %v1253 = vld [vmem:[#allocation7 + $0x3c8] sm:$0xff]
    %v1254 = vld [vmem:[#allocation7 + $0x3d0] sm:$0xff]
    %v1255 = vld [vmem:[#allocation7 + $0x3d8] sm:$0xff]
    %v1256 = vld [vmem:[#allocation7 + $0x3e0] sm:$0xff]
    %v1257 = vld [vmem:[#allocation7 + $0x3e8] sm:$0xff]
    %v1258 = vld [vmem:[#allocation7 + $0x3f0] sm:$0xff]
    %v1259 = vld [vmem:[#allocation7 + $0x3f8] sm:$0xff]
    %v1260 = vld [vmem:[#allocation7 + $0x400] sm:$0xff]
    %v1261 = vld [vmem:[#allocation7 + $0x408] sm:$0xff]
    %v1262 = vld [vmem:[#allocation7 + $0x410] sm:$0xff]
    %v1263 = vld [vmem:[#allocation7 + $0x418] sm:$0xff]
    %v1264 = vld [vmem:[#allocation7 + $0x420] sm:$0xff]
    %v1265 = vld [vmem:[#allocation7 + $0x428] sm:$0xff]
    %v1266 = vld [vmem:[#allocation7 + $0x430] sm:$0xff]
    %v1267 = vld [vmem:[#allocation7 + $0x438] sm:$0xff]
    %v1268 = vld [vmem:[#allocation7 + $0x440] sm:$0xff]
    %v1269 = vld [vmem:[#allocation7 + $0x448] sm:$0xff]
    %v1270 = vld [vmem:[#allocation7 + $0x450] sm:$0xff]
    %v1271 = vld [vmem:[#allocation7 + $0x458] sm:$0xff]
    %v1272 = vld [vmem:[#allocation7 + $0x460] sm:$0xff]
    %v1273 = vld [vmem:[#allocation7 + $0x468] sm:$0xff]
    %v1274 = vld [vmem:[#allocation7 + $0x470] sm:$0xff]
    %v1275 = vld [vmem:[#allocation7 + $0x478] sm:$0xff]
    %v1276 = vld [vmem:[#allocation7 + $0x480] sm:$0xff]
    %v1277 = vld [vmem:[#allocation7 + $0x488] sm:$0xff]
    %v1278 = vld [vmem:[#allocation7 + $0x490] sm:$0xff]
    %v1279 = vld [vmem:[#allocation7 + $0x498] sm:$0xff]
    %v1280 = vld [vmem:[#allocation7 + $0x4a0] sm:$0xff]
    %v1281 = vld [vmem:[#allocation7 + $0x4a8] sm:$0xff]
    %v1282 = vld [vmem:[#allocation7 + $0x4b0] sm:$0xff]
    %v1283 = vld [vmem:[#allocation7 + $0x4b8] sm:$0xff]
    %v1284 = vld [vmem:[#allocation7 + $0x4c0] sm:$0xff]
    %v1285 = vld [vmem:[#allocation7 + $0x4c8] sm:$0xff]
    %v1286 = vld [vmem:[#allocation7 + $0x4d0] sm:$0xff]
    %v1287 = vld [vmem:[#allocation7 + $0x4d8] sm:$0xff]
    %v1288 = vld [vmem:[#allocation7 + $0x4e0] sm:$0xff]
    %v1289 = vld [vmem:[#allocation7 + $0x4e8] sm:$0xff]
    %v1290 = vld [vmem:[#allocation7 + $0x4f0] sm:$0xff]
    %v1291 = vld [vmem:[#allocation7 + $0x4f8] sm:$0xff]
    %v1292 = vld [vmem:[#allocation7 + $0x500] sm:$0xff]
    %v1293 = vld [vmem:[#allocation7 + $0x508] sm:$0xff]
    %v1294 = vld [vmem:[#allocation7 + $0x510] sm:$0xff]
    %v1295 = vld [vmem:[#allocation7 + $0x518] sm:$0xff]
    %v1296 = vld [vmem:[#allocation7 + $0x520] sm:$0xff]
    %v1297 = vld [vmem:[#allocation7 + $0x528] sm:$0xff]
    %v1298 = vld [vmem:[#allocation7 + $0x530] sm:$0xff]
    %v1299 = vld [vmem:[#allocation7 + $0x538] sm:$0xff]
    %v1300 = vld [vmem:[#allocation7 + $0x540] sm:$0xff]
    %v1301 = vld [vmem:[#allocation7 + $0x548] sm:$0xff]
    %v1302 = vld [vmem:[#allocation7 + $0x550] sm:$0xff]
    %v1303 = vld [vmem:[#allocation7 + $0x558] sm:$0xff]
    %v1304 = vld [vmem:[#allocation7 + $0x560] sm:$0xff]
    %v1305 = vld [vmem:[#allocation7 + $0x568] sm:$0xff]
    %v1306 = vld [vmem:[#allocation7 + $0x570] sm:$0xff]
    %v1307 = vld [vmem:[#allocation7 + $0x578] sm:$0xff]
    %v1308 = vld [vmem:[#allocation7 + $0x580] sm:$0xff]
    %v1309 = vld [vmem:[#allocation7 + $0x588] sm:$0xff]
    %v1310 = vld [vmem:[#allocation7 + $0x590] sm:$0xff]
    %v1311 = vld [vmem:[#allocation7 + $0x598] sm:$0xff]
    %v1312 = vld [vmem:[#allocation7 + $0x5a0] sm:$0xff]
    %v1313 = vld [vmem:[#allocation7 + $0x5a8] sm:$0xff]
    %v1314 = vld [vmem:[#allocation7 + $0x5b0] sm:$0xff]
    %v1315 = vld [vmem:[#allocation7 + $0x5b8] sm:$0xff]
    %v1316 = vld [vmem:[#allocation7 + $0x5c0] sm:$0xff]
    %v1317 = vld [vmem:[#allocation7 + $0x5c8] sm:$0xff]
    %v1318 = vld [vmem:[#allocation7 + $0x5d0] sm:$0xff]
    %v1319 = vld [vmem:[#allocation7 + $0x5d8] sm:$0xff]
    %v1320 = vld [vmem:[#allocation7 + $0x5e0] sm:$0xff]
    %v1321 = vld [vmem:[#allocation7 + $0x5e8] sm:$0xff]
    %v1322 = vld [vmem:[#allocation7 + $0x5f0] sm:$0xff]
    %v1323 = vld [vmem:[#allocation7 + $0x5f8] sm:$0xff]
    %v1324 = vld [vmem:[#allocation7 + $0x600] sm:$0xff]
    %v1325 = vld [vmem:[#allocation7 + $0x608] sm:$0xff]
    %v1326 = vld [vmem:[#allocation7 + $0x610] sm:$0xff]
    %v1327 = vld [vmem:[#allocation7 + $0x618] sm:$0xff]
    %v1328 = vld [vmem:[#allocation7 + $0x620] sm:$0xff]
    %v1329 = vld [vmem:[#allocation7 + $0x628] sm:$0xff]
    %v1330 = vld [vmem:[#allocation7 + $0x630] sm:$0xff]
    %v1331 = vld [vmem:[#allocation7 + $0x638] sm:$0xff]
    %v1332 = vld [vmem:[#allocation7 + $0x640] sm:$0xff]
    %v1333 = vld [vmem:[#allocation7 + $0x648] sm:$0xff]
    %v1334 = vld [vmem:[#allocation7 + $0x650] sm:$0xff]
    %v1335 = vld [vmem:[#allocation7 + $0x658] sm:$0xff]
    %v1336 = vld [vmem:[#allocation7 + $0x660] sm:$0xff]
    %v1337 = vld [vmem:[#allocation7 + $0x668] sm:$0xff]
    %v1338 = vld [vmem:[#allocation7 + $0x670] sm:$0xff]
    %v1339 = vld [vmem:[#allocation7 + $0x678] sm:$0xff]
    %v1340 = vld [vmem:[#allocation7 + $0x680] sm:$0xff]
    %v1341 = vld [vmem:[#allocation7 + $0x688] sm:$0xff]
    %v1342 = vld [vmem:[#allocation7 + $0x690] sm:$0xff]
    %v1343 = vld [vmem:[#allocation7 + $0x698] sm:$0xff]
    %v1344 = vld [vmem:[#allocation7 + $0x6a0] sm:$0xff]
    %v1345 = vld [vmem:[#allocation7 + $0x6a8] sm:$0xff]
    %v1346 = vld [vmem:[#allocation7 + $0x6b0] sm:$0xff]
    %v1347 = vld [vmem:[#allocation7 + $0x6b8] sm:$0xff]
    %v1348 = vld [vmem:[#allocation7 + $0x6c0] sm:$0xff]
    %v1349 = vld [vmem:[#allocation7 + $0x6c8] sm:$0xff]
    %v1350 = vld [vmem:[#allocation7 + $0x6d0] sm:$0xff]
    %v1351 = vld [vmem:[#allocation7 + $0x6d8] sm:$0xff]
    %v1352 = vld [vmem:[#allocation7 + $0x6e0] sm:$0xff]
    %v1353 = vld [vmem:[#allocation7 + $0x6e8] sm:$0xff]
    %v1354 = vld [vmem:[#allocation7 + $0x6f0] sm:$0xff]
    %v1355 = vld [vmem:[#allocation7 + $0x6f8] sm:$0xff]
    %v1356 = vld [vmem:[#allocation7 + $0x700] sm:$0xff]
    %v1357 = vld [vmem:[#allocation7 + $0x708] sm:$0xff]
    %v1358 = vld [vmem:[#allocation7 + $0x710] sm:$0xff]
    %v1359 = vld [vmem:[#allocation7 + $0x718] sm:$0xff]
    %v1360 = vld [vmem:[#allocation7 + $0x720] sm:$0xff]
    %v1361 = vld [vmem:[#allocation7 + $0x728] sm:$0xff]
    %v1362 = vld [vmem:[#allocation7 + $0x730] sm:$0xff]
    %v1363 = vld [vmem:[#allocation7 + $0x738] sm:$0xff]
    %v1364 = vld [vmem:[#allocation7 + $0x740] sm:$0xff]
    %v1365 = vld [vmem:[#allocation7 + $0x748] sm:$0xff]
    %v1366 = vld [vmem:[#allocation7 + $0x750] sm:$0xff]
    %v1367 = vld [vmem:[#allocation7 + $0x758] sm:$0xff]
    %v1368 = vld [vmem:[#allocation7 + $0x760] sm:$0xff]
    %v1369 = vld [vmem:[#allocation7 + $0x768] sm:$0xff]
    %v1370 = vld [vmem:[#allocation7 + $0x770] sm:$0xff]
    %v1371 = vld [vmem:[#allocation7 + $0x778] sm:$0xff]
    %v1372 = vld [vmem:[#allocation7 + $0x780] sm:$0xff]
    %v1373 = vld [vmem:[#allocation7 + $0x788] sm:$0xff]
    %v1374 = vld [vmem:[#allocation7 + $0x790] sm:$0xff]
    %v1375 = vld [vmem:[#allocation7 + $0x798] sm:$0xff]
    %v1376 = vld [vmem:[#allocation7 + $0x7a0] sm:$0xff]
    %v1377 = vld [vmem:[#allocation7 + $0x7a8] sm:$0xff]
    %v1378 = vld [vmem:[#allocation7 + $0x7b0] sm:$0xff]
    %v1379 = vld [vmem:[#allocation7 + $0x7b8] sm:$0xff]
    %v1380 = vld [vmem:[#allocation7 + $0x7c0] sm:$0xff]
    %v1381 = vld [vmem:[#allocation7 + $0x7c8] sm:$0xff]
    %v1382 = vld [vmem:[#allocation7 + $0x7d0] sm:$0xff]
    %v1383 = vld [vmem:[#allocation7 + $0x7d8] sm:$0xff]
    %v1384 = vld [vmem:[#allocation7 + $0x7e0] sm:$0xff]
    %v1385 = vld [vmem:[#allocation7 + $0x7e8] sm:$0xff]
    %v1386 = vld [vmem:[#allocation7 + $0x7f0] sm:$0xff]
    %v1387 = vld [vmem:[#allocation7 + $0x7f8] sm:$0xff]
    %v1644 = vunpack.c.l.b16 %v1132
    %v1645 = vunpack.c.h.b16 %v1132
    %v1646 = vunpack.c.l.b16 %v1133
    %v1647 = vunpack.c.h.b16 %v1133
    %v1648 = vunpack.c.l.b16 %v1134
    %v1649 = vunpack.c.h.b16 %v1134
    %v1650 = vunpack.c.l.b16 %v1135
    %v1651 = vunpack.c.h.b16 %v1135
    %v1652 = vunpack.c.l.b16 %v1136
    %v1653 = vunpack.c.h.b16 %v1136
    %v1654 = vunpack.c.l.b16 %v1137
    %v1655 = vunpack.c.h.b16 %v1137
    %v1656 = vunpack.c.l.b16 %v1138
    %v1657 = vunpack.c.h.b16 %v1138
    %v1658 = vunpack.c.l.b16 %v1139
    %v1659 = vunpack.c.h.b16 %v1139
    %v1660 = vunpack.c.l.b16 %v1140
    %v1661 = vunpack.c.h.b16 %v1140
    %v1662 = vunpack.c.l.b16 %v1141
    %v1663 = vunpack.c.h.b16 %v1141
    %v1664 = vunpack.c.l.b16 %v1142
    %v1665 = vunpack.c.h.b16 %v1142
    %v1666 = vunpack.c.l.b16 %v1143
    %v1667 = vunpack.c.h.b16 %v1143
    %v1668 = vunpack.c.l.b16 %v1144
    %v1669 = vunpack.c.h.b16 %v1144
    %v1670 = vunpack.c.l.b16 %v1145
    %v1671 = vunpack.c.h.b16 %v1145
    %v1672 = vunpack.c.l.b16 %v1146
    %v1673 = vunpack.c.h.b16 %v1146
    %v1674 = vunpack.c.l.b16 %v1147
    %v1675 = vunpack.c.h.b16 %v1147
    %v1676 = vunpack.c.l.b16 %v1148
    %v1677 = vunpack.c.h.b16 %v1148
    %v1678 = vunpack.c.l.b16 %v1149
    %v1679 = vunpack.c.h.b16 %v1149
    %v1680 = vunpack.c.l.b16 %v1150
    %v1681 = vunpack.c.h.b16 %v1150
    %v1682 = vunpack.c.l.b16 %v1151
    %v1683 = vunpack.c.h.b16 %v1151
    %v1684 = vunpack.c.l.b16 %v1152
    %v1685 = vunpack.c.h.b16 %v1152
    %v1686 = vunpack.c.l.b16 %v1153
    %v1687 = vunpack.c.h.b16 %v1153
    %v1688 = vunpack.c.l.b16 %v1154
    %v1689 = vunpack.c.h.b16 %v1154
    %v1690 = vunpack.c.l.b16 %v1155
    %v1691 = vunpack.c.h.b16 %v1155
    %v1692 = vunpack.c.l.b16 %v1156
    %v1693 = vunpack.c.h.b16 %v1156
    %v1694 = vunpack.c.l.b16 %v1157
    %v1695 = vunpack.c.h.b16 %v1157
    %v1696 = vunpack.c.l.b16 %v1158
    %v1697 = vunpack.c.h.b16 %v1158
    %v1698 = vunpack.c.l.b16 %v1159
    %v1699 = vunpack.c.h.b16 %v1159
    %v1700 = vunpack.c.l.b16 %v1160
    %v1701 = vunpack.c.h.b16 %v1160
    %v1702 = vunpack.c.l.b16 %v1161
    %v1703 = vunpack.c.h.b16 %v1161
    %v1704 = vunpack.c.l.b16 %v1162
    %v1705 = vunpack.c.h.b16 %v1162
    %v1706 = vunpack.c.l.b16 %v1163
    %v1707 = vunpack.c.h.b16 %v1163
    %v1708 = vunpack.c.l.b16 %v1164
    %v1709 = vunpack.c.h.b16 %v1164
    %v1710 = vunpack.c.l.b16 %v1165
    %v1711 = vunpack.c.h.b16 %v1165
    %v1712 = vunpack.c.l.b16 %v1166
    %v1713 = vunpack.c.h.b16 %v1166
    %v1714 = vunpack.c.l.b16 %v1167
    %v1715 = vunpack.c.h.b16 %v1167
    %v1716 = vunpack.c.l.b16 %v1168
    %v1717 = vunpack.c.h.b16 %v1168
    %v1718 = vunpack.c.l.b16 %v1169
    %v1719 = vunpack.c.h.b16 %v1169
    %v1720 = vunpack.c.l.b16 %v1170
    %v1721 = vunpack.c.h.b16 %v1170
    %v1722 = vunpack.c.l.b16 %v1171
    %v1723 = vunpack.c.h.b16 %v1171
    %v1724 = vunpack.c.l.b16 %v1172
    %v1725 = vunpack.c.h.b16 %v1172
    %v1726 = vunpack.c.l.b16 %v1173
    %v1727 = vunpack.c.h.b16 %v1173
    %v1728 = vunpack.c.l.b16 %v1174
    %v1729 = vunpack.c.h.b16 %v1174
    %v1730 = vunpack.c.l.b16 %v1175
    %v1731 = vunpack.c.h.b16 %v1175
    %v1732 = vunpack.c.l.b16 %v1176
    %v1733 = vunpack.c.h.b16 %v1176
    %v1734 = vunpack.c.l.b16 %v1177
    %v1735 = vunpack.c.h.b16 %v1177
    %v1736 = vunpack.c.l.b16 %v1178
    %v1737 = vunpack.c.h.b16 %v1178
    %v1738 = vunpack.c.l.b16 %v1179
    %v1739 = vunpack.c.h.b16 %v1179
    %v1740 = vunpack.c.l.b16 %v1180
    %v1741 = vunpack.c.h.b16 %v1180
    %v1742 = vunpack.c.l.b16 %v1181
    %v1743 = vunpack.c.h.b16 %v1181
    %v1744 = vunpack.c.l.b16 %v1182
    %v1745 = vunpack.c.h.b16 %v1182
    %v1746 = vunpack.c.l.b16 %v1183
    %v1747 = vunpack.c.h.b16 %v1183
    %v1748 = vunpack.c.l.b16 %v1184
    %v1749 = vunpack.c.h.b16 %v1184
    %v1750 = vunpack.c.l.b16 %v1185
    %v1751 = vunpack.c.h.b16 %v1185
    %v1752 = vunpack.c.l.b16 %v1186
    %v1753 = vunpack.c.h.b16 %v1186
    %v1754 = vunpack.c.l.b16 %v1187
    %v1755 = vunpack.c.h.b16 %v1187
    %v1756 = vunpack.c.l.b16 %v1188
    %v1757 = vunpack.c.h.b16 %v1188
    %v1758 = vunpack.c.l.b16 %v1189
    %v1759 = vunpack.c.h.b16 %v1189
    %v1760 = vunpack.c.l.b16 %v1190
    %v1761 = vunpack.c.h.b16 %v1190
    %v1762 = vunpack.c.l.b16 %v1191
    %v1763 = vunpack.c.h.b16 %v1191
    %v1764 = vunpack.c.l.b16 %v1192
    %v1765 = vunpack.c.h.b16 %v1192
    %v1766 = vunpack.c.l.b16 %v1193
    %v1767 = vunpack.c.h.b16 %v1193
    %v1768 = vunpack.c.l.b16 %v1194
    %v1769 = vunpack.c.h.b16 %v1194
    %v1770 = vunpack.c.l.b16 %v1195
    %v1771 = vunpack.c.h.b16 %v1195
    %v1772 = vunpack.c.l.b16 %v1196
    %v1773 = vunpack.c.h.b16 %v1196
    %v1774 = vunpack.c.l.b16 %v1197
    %v1775 = vunpack.c.h.b16 %v1197
    %v1776 = vunpack.c.l.b16 %v1198
    %v1777 = vunpack.c.h.b16 %v1198
    %v1778 = vunpack.c.l.b16 %v1199
    %v1779 = vunpack.c.h.b16 %v1199
    %v1780 = vunpack.c.l.b16 %v1200
    %v1781 = vunpack.c.h.b16 %v1200
    %v1782 = vunpack.c.l.b16 %v1201
    %v1783 = vunpack.c.h.b16 %v1201
    %v1784 = vunpack.c.l.b16 %v1202
    %v1785 = vunpack.c.h.b16 %v1202
    %v1786 = vunpack.c.l.b16 %v1203
    %v1787 = vunpack.c.h.b16 %v1203
    %v1788 = vunpack.c.l.b16 %v1204
    %v1789 = vunpack.c.h.b16 %v1204
    %v1790 = vunpack.c.l.b16 %v1205
    %v1791 = vunpack.c.h.b16 %v1205
    %v1792 = vunpack.c.l.b16 %v1206
    %v1793 = vunpack.c.h.b16 %v1206
    %v1794 = vunpack.c.l.b16 %v1207
    %v1795 = vunpack.c.h.b16 %v1207
    %v1796 = vunpack.c.l.b16 %v1208
    %v1797 = vunpack.c.h.b16 %v1208
    %v1798 = vunpack.c.l.b16 %v1209
    %v1799 = vunpack.c.h.b16 %v1209
    %v1800 = vunpack.c.l.b16 %v1210
    %v1801 = vunpack.c.h.b16 %v1210
    %v1802 = vunpack.c.l.b16 %v1211
    %v1803 = vunpack.c.h.b16 %v1211
    %v1804 = vunpack.c.l.b16 %v1212
    %v1805 = vunpack.c.h.b16 %v1212
    %v1806 = vunpack.c.l.b16 %v1213
    %v1807 = vunpack.c.h.b16 %v1213
    %v1808 = vunpack.c.l.b16 %v1214
    %v1809 = vunpack.c.h.b16 %v1214
    %v1810 = vunpack.c.l.b16 %v1215
    %v1811 = vunpack.c.h.b16 %v1215
    %v1812 = vunpack.c.l.b16 %v1216
    %v1813 = vunpack.c.h.b16 %v1216
    %v1814 = vunpack.c.l.b16 %v1217
    %v1815 = vunpack.c.h.b16 %v1217
    %v1816 = vunpack.c.l.b16 %v1218
    %v1817 = vunpack.c.h.b16 %v1218
    %v1818 = vunpack.c.l.b16 %v1219
    %v1819 = vunpack.c.h.b16 %v1219
    %v1820 = vunpack.c.l.b16 %v1220
    %v1821 = vunpack.c.h.b16 %v1220
    %v1822 = vunpack.c.l.b16 %v1221
    %v1823 = vunpack.c.h.b16 %v1221
    %v1824 = vunpack.c.l.b16 %v1222
    %v1825 = vunpack.c.h.b16 %v1222
    %v1826 = vunpack.c.l.b16 %v1223
    %v1827 = vunpack.c.h.b16 %v1223
    %v1828 = vunpack.c.l.b16 %v1224
    %v1829 = vunpack.c.h.b16 %v1224
    %v1830 = vunpack.c.l.b16 %v1225
    %v1831 = vunpack.c.h.b16 %v1225
    %v1832 = vunpack.c.l.b16 %v1226
    %v1833 = vunpack.c.h.b16 %v1226
    %v1834 = vunpack.c.l.b16 %v1227
    %v1835 = vunpack.c.h.b16 %v1227
    %v1836 = vunpack.c.l.b16 %v1228
    %v1837 = vunpack.c.h.b16 %v1228
    %v1838 = vunpack.c.l.b16 %v1229
    %v1839 = vunpack.c.h.b16 %v1229
    %v1840 = vunpack.c.l.b16 %v1230
    %v1841 = vunpack.c.h.b16 %v1230
    %v1842 = vunpack.c.l.b16 %v1231
    %v1843 = vunpack.c.h.b16 %v1231
    %v1844 = vunpack.c.l.b16 %v1232
    %v1845 = vunpack.c.h.b16 %v1232
    %v1846 = vunpack.c.l.b16 %v1233
    %v1847 = vunpack.c.h.b16 %v1233
    %v1848 = vunpack.c.l.b16 %v1234
    %v1849 = vunpack.c.h.b16 %v1234
    %v1850 = vunpack.c.l.b16 %v1235
    %v1851 = vunpack.c.h.b16 %v1235
    %v1852 = vunpack.c.l.b16 %v1236
    %v1853 = vunpack.c.h.b16 %v1236
    %v1854 = vunpack.c.l.b16 %v1237
    %v1855 = vunpack.c.h.b16 %v1237
    %v1856 = vunpack.c.l.b16 %v1238
    %v1857 = vunpack.c.h.b16 %v1238
    %v1858 = vunpack.c.l.b16 %v1239
    %v1859 = vunpack.c.h.b16 %v1239
    %v1860 = vunpack.c.l.b16 %v1240
    %v1861 = vunpack.c.h.b16 %v1240
    %v1862 = vunpack.c.l.b16 %v1241
    %v1863 = vunpack.c.h.b16 %v1241
    %v1864 = vunpack.c.l.b16 %v1242
    %v1865 = vunpack.c.h.b16 %v1242
    %v1866 = vunpack.c.l.b16 %v1243
    %v1867 = vunpack.c.h.b16 %v1243
    %v1868 = vunpack.c.l.b16 %v1244
    %v1869 = vunpack.c.h.b16 %v1244
    %v1870 = vunpack.c.l.b16 %v1245
    %v1871 = vunpack.c.h.b16 %v1245
    %v1872 = vunpack.c.l.b16 %v1246
    %v1873 = vunpack.c.h.b16 %v1246
    %v1874 = vunpack.c.l.b16 %v1247
    %v1875 = vunpack.c.h.b16 %v1247
    %v1876 = vunpack.c.l.b16 %v1248
    %v1877 = vunpack.c.h.b16 %v1248
    %v1878 = vunpack.c.l.b16 %v1249
    %v1879 = vunpack.c.h.b16 %v1249
    %v1880 = vunpack.c.l.b16 %v1250
    %v1881 = vunpack.c.h.b16 %v1250
    %v1882 = vunpack.c.l.b16 %v1251
    %v1883 = vunpack.c.h.b16 %v1251
    %v1884 = vunpack.c.l.b16 %v1252
    %v1885 = vunpack.c.h.b16 %v1252
    %v1886 = vunpack.c.l.b16 %v1253
    %v1887 = vunpack.c.h.b16 %v1253
    %v1888 = vunpack.c.l.b16 %v1254
    %v1889 = vunpack.c.h.b16 %v1254
    %v1890 = vunpack.c.l.b16 %v1255
    %v1891 = vunpack.c.h.b16 %v1255
    %v1892 = vunpack.c.l.b16 %v1256
    %v1893 = vunpack.c.h.b16 %v1256
    %v1894 = vunpack.c.l.b16 %v1257
    %v1895 = vunpack.c.h.b16 %v1257
    %v1896 = vunpack.c.l.b16 %v1258
    %v1897 = vunpack.c.h.b16 %v1258
    %v1898 = vunpack.c.l.b16 %v1259
    %v1899 = vunpack.c.h.b16 %v1259
    %v1900 = vunpack.c.l.b16 %v1260
    %v1901 = vunpack.c.h.b16 %v1260
    %v1902 = vunpack.c.l.b16 %v1261
    %v1903 = vunpack.c.h.b16 %v1261
    %v1904 = vunpack.c.l.b16 %v1262
    %v1905 = vunpack.c.h.b16 %v1262
    %v1906 = vunpack.c.l.b16 %v1263
    %v1907 = vunpack.c.h.b16 %v1263
    %v1908 = vunpack.c.l.b16 %v1264
    %v1909 = vunpack.c.h.b16 %v1264
    %v1910 = vunpack.c.l.b16 %v1265
    %v1911 = vunpack.c.h.b16 %v1265
    %v1912 = vunpack.c.l.b16 %v1266
    %v1913 = vunpack.c.h.b16 %v1266
    %v1914 = vunpack.c.l.b16 %v1267
    %v1915 = vunpack.c.h.b16 %v1267
    %v1916 = vunpack.c.l.b16 %v1268
    %v1917 = vunpack.c.h.b16 %v1268
    %v1918 = vunpack.c.l.b16 %v1269
    %v1919 = vunpack.c.h.b16 %v1269
    %v1920 = vunpack.c.l.b16 %v1270
    %v1921 = vunpack.c.h.b16 %v1270
    %v1922 = vunpack.c.l.b16 %v1271
    %v1923 = vunpack.c.h.b16 %v1271
    %v1924 = vunpack.c.l.b16 %v1272
    %v1925 = vunpack.c.h.b16 %v1272
    %v1926 = vunpack.c.l.b16 %v1273
    %v1927 = vunpack.c.h.b16 %v1273
    %v1928 = vunpack.c.l.b16 %v1274
    %v1929 = vunpack.c.h.b16 %v1274
    %v1930 = vunpack.c.l.b16 %v1275
    %v1931 = vunpack.c.h.b16 %v1275
    %v1932 = vunpack.c.l.b16 %v1276
    %v1933 = vunpack.c.h.b16 %v1276
    %v1934 = vunpack.c.l.b16 %v1277
    %v1935 = vunpack.c.h.b16 %v1277
    %v1936 = vunpack.c.l.b16 %v1278
    %v1937 = vunpack.c.h.b16 %v1278
    %v1938 = vunpack.c.l.b16 %v1279
    %v1939 = vunpack.c.h.b16 %v1279
    %v1940 = vunpack.c.l.b16 %v1280
    %v1941 = vunpack.c.h.b16 %v1280
    %v1942 = vunpack.c.l.b16 %v1281
    %v1943 = vunpack.c.h.b16 %v1281
    %v1944 = vunpack.c.l.b16 %v1282
    %v1945 = vunpack.c.h.b16 %v1282
    %v1946 = vunpack.c.l.b16 %v1283
    %v1947 = vunpack.c.h.b16 %v1283
    %v1948 = vunpack.c.l.b16 %v1284
    %v1949 = vunpack.c.h.b16 %v1284
    %v1950 = vunpack.c.l.b16 %v1285
    %v1951 = vunpack.c.h.b16 %v1285
    %v1952 = vunpack.c.l.b16 %v1286
    %v1953 = vunpack.c.h.b16 %v1286
    %v1954 = vunpack.c.l.b16 %v1287
    %v1955 = vunpack.c.h.b16 %v1287
    %v1956 = vunpack.c.l.b16 %v1288
    %v1957 = vunpack.c.h.b16 %v1288
    %v1958 = vunpack.c.l.b16 %v1289
    %v1959 = vunpack.c.h.b16 %v1289
    %v1960 = vunpack.c.l.b16 %v1290
    %v1961 = vunpack.c.h.b16 %v1290
    %v1962 = vunpack.c.l.b16 %v1291
    %v1963 = vunpack.c.h.b16 %v1291
    %v1964 = vunpack.c.l.b16 %v1292
    %v1965 = vunpack.c.h.b16 %v1292
    %v1966 = vunpack.c.l.b16 %v1293
    %v1967 = vunpack.c.h.b16 %v1293
    %v1968 = vunpack.c.l.b16 %v1294
    %v1969 = vunpack.c.h.b16 %v1294
    %v1970 = vunpack.c.l.b16 %v1295
    %v1971 = vunpack.c.h.b16 %v1295
    %v1972 = vunpack.c.l.b16 %v1296
    %v1973 = vunpack.c.h.b16 %v1296
    %v1974 = vunpack.c.l.b16 %v1297
    %v1975 = vunpack.c.h.b16 %v1297
    %v1976 = vunpack.c.l.b16 %v1298
    %v1977 = vunpack.c.h.b16 %v1298
    %v1978 = vunpack.c.l.b16 %v1299
    %v1979 = vunpack.c.h.b16 %v1299
    %v1980 = vunpack.c.l.b16 %v1300
    %v1981 = vunpack.c.h.b16 %v1300
    %v1982 = vunpack.c.l.b16 %v1301
    %v1983 = vunpack.c.h.b16 %v1301
    %v1984 = vunpack.c.l.b16 %v1302
    %v1985 = vunpack.c.h.b16 %v1302
    %v1986 = vunpack.c.l.b16 %v1303
    %v1987 = vunpack.c.h.b16 %v1303
    %v1988 = vunpack.c.l.b16 %v1304
    %v1989 = vunpack.c.h.b16 %v1304
    %v1990 = vunpack.c.l.b16 %v1305
    %v1991 = vunpack.c.h.b16 %v1305
    %v1992 = vunpack.c.l.b16 %v1306
    %v1993 = vunpack.c.h.b16 %v1306
    %v1994 = vunpack.c.l.b16 %v1307
    %v1995 = vunpack.c.h.b16 %v1307
    %v1996 = vunpack.c.l.b16 %v1308
    %v1997 = vunpack.c.h.b16 %v1308
    %v1998 = vunpack.c.l.b16 %v1309
    %v1999 = vunpack.c.h.b16 %v1309
    %v2000 = vunpack.c.l.b16 %v1310
    %v2001 = vunpack.c.h.b16 %v1310
    %v2002 = vunpack.c.l.b16 %v1311
    %v2003 = vunpack.c.h.b16 %v1311
    %v2004 = vunpack.c.l.b16 %v1312
    %v2005 = vunpack.c.h.b16 %v1312
    %v2006 = vunpack.c.l.b16 %v1313
    %v2007 = vunpack.c.h.b16 %v1313
    %v2008 = vunpack.c.l.b16 %v1314
    %v2009 = vunpack.c.h.b16 %v1314
    %v2010 = vunpack.c.l.b16 %v1315
    %v2011 = vunpack.c.h.b16 %v1315
    %v2012 = vunpack.c.l.b16 %v1316
    %v2013 = vunpack.c.h.b16 %v1316
    %v2014 = vunpack.c.l.b16 %v1317
    %v2015 = vunpack.c.h.b16 %v1317
    %v2016 = vunpack.c.l.b16 %v1318
    %v2017 = vunpack.c.h.b16 %v1318
    %v2018 = vunpack.c.l.b16 %v1319
    %v2019 = vunpack.c.h.b16 %v1319
    %v2020 = vunpack.c.l.b16 %v1320
    %v2021 = vunpack.c.h.b16 %v1320
    %v2022 = vunpack.c.l.b16 %v1321
    %v2023 = vunpack.c.h.b16 %v1321
    %v2024 = vunpack.c.l.b16 %v1322
    %v2025 = vunpack.c.h.b16 %v1322
    %v2026 = vunpack.c.l.b16 %v1323
    %v2027 = vunpack.c.h.b16 %v1323
    %v2028 = vunpack.c.l.b16 %v1324
    %v2029 = vunpack.c.h.b16 %v1324
    %v2030 = vunpack.c.l.b16 %v1325
    %v2031 = vunpack.c.h.b16 %v1325
    %v2032 = vunpack.c.l.b16 %v1326
    %v2033 = vunpack.c.h.b16 %v1326
    %v2034 = vunpack.c.l.b16 %v1327
    %v2035 = vunpack.c.h.b16 %v1327
    %v2036 = vunpack.c.l.b16 %v1328
    %v2037 = vunpack.c.h.b16 %v1328
    %v2038 = vunpack.c.l.b16 %v1329
    %v2039 = vunpack.c.h.b16 %v1329
    %v2040 = vunpack.c.l.b16 %v1330
    %v2041 = vunpack.c.h.b16 %v1330
    %v2042 = vunpack.c.l.b16 %v1331
    %v2043 = vunpack.c.h.b16 %v1331
    %v2044 = vunpack.c.l.b16 %v1332
    %v2045 = vunpack.c.h.b16 %v1332
    %v2046 = vunpack.c.l.b16 %v1333
    %v2047 = vunpack.c.h.b16 %v1333
    %v2048 = vunpack.c.l.b16 %v1334
    %v2049 = vunpack.c.h.b16 %v1334
    %v2050 = vunpack.c.l.b16 %v1335
    %v2051 = vunpack.c.h.b16 %v1335
    %v2052 = vunpack.c.l.b16 %v1336
    %v2053 = vunpack.c.h.b16 %v1336
    %v2054 = vunpack.c.l.b16 %v1337
    %v2055 = vunpack.c.h.b16 %v1337
    %v2056 = vunpack.c.l.b16 %v1338
    %v2057 = vunpack.c.h.b16 %v1338
    %v2058 = vunpack.c.l.b16 %v1339
    %v2059 = vunpack.c.h.b16 %v1339
    %v2060 = vunpack.c.l.b16 %v1340
    %v2061 = vunpack.c.h.b16 %v1340
    %v2062 = vunpack.c.l.b16 %v1341
    %v2063 = vunpack.c.h.b16 %v1341
    %v2064 = vunpack.c.l.b16 %v1342
    %v2065 = vunpack.c.h.b16 %v1342
    %v2066 = vunpack.c.l.b16 %v1343
    %v2067 = vunpack.c.h.b16 %v1343
    %v2068 = vunpack.c.l.b16 %v1344
    %v2069 = vunpack.c.h.b16 %v1344
    %v2070 = vunpack.c.l.b16 %v1345
    %v2071 = vunpack.c.h.b16 %v1345
    %v2072 = vunpack.c.l.b16 %v1346
    %v2073 = vunpack.c.h.b16 %v1346
    %v2074 = vunpack.c.l.b16 %v1347
    %v2075 = vunpack.c.h.b16 %v1347
    %v2076 = vunpack.c.l.b16 %v1348
    %v2077 = vunpack.c.h.b16 %v1348
    %v2078 = vunpack.c.l.b16 %v1349
    %v2079 = vunpack.c.h.b16 %v1349
    %v2080 = vunpack.c.l.b16 %v1350
    %v2081 = vunpack.c.h.b16 %v1350
    %v2082 = vunpack.c.l.b16 %v1351
    %v2083 = vunpack.c.h.b16 %v1351
    %v2084 = vunpack.c.l.b16 %v1352
    %v2085 = vunpack.c.h.b16 %v1352
    %v2086 = vunpack.c.l.b16 %v1353
    %v2087 = vunpack.c.h.b16 %v1353
    %v2088 = vunpack.c.l.b16 %v1354
    %v2089 = vunpack.c.h.b16 %v1354
    %v2090 = vunpack.c.l.b16 %v1355
    %v2091 = vunpack.c.h.b16 %v1355
    %v2092 = vunpack.c.l.b16 %v1356
    %v2093 = vunpack.c.h.b16 %v1356
    %v2094 = vunpack.c.l.b16 %v1357
    %v2095 = vunpack.c.h.b16 %v1357
    %v2096 = vunpack.c.l.b16 %v1358
    %v2097 = vunpack.c.h.b16 %v1358
    %v2098 = vunpack.c.l.b16 %v1359
    %v2099 = vunpack.c.h.b16 %v1359
    %v2100 = vunpack.c.l.b16 %v1360
    %v2101 = vunpack.c.h.b16 %v1360
    %v2102 = vunpack.c.l.b16 %v1361
    %v2103 = vunpack.c.h.b16 %v1361
    %v2104 = vunpack.c.l.b16 %v1362
    %v2105 = vunpack.c.h.b16 %v1362
    %v2106 = vunpack.c.l.b16 %v1363
    %v2107 = vunpack.c.h.b16 %v1363
    %v2108 = vunpack.c.l.b16 %v1364
    %v2109 = vunpack.c.h.b16 %v1364
    %v2110 = vunpack.c.l.b16 %v1365
    %v2111 = vunpack.c.h.b16 %v1365
    %v2112 = vunpack.c.l.b16 %v1366
    %v2113 = vunpack.c.h.b16 %v1366
    %v2114 = vunpack.c.l.b16 %v1367
    %v2115 = vunpack.c.h.b16 %v1367
    %v2116 = vunpack.c.l.b16 %v1368
    %v2117 = vunpack.c.h.b16 %v1368
    %v2118 = vunpack.c.l.b16 %v1369
    %v2119 = vunpack.c.h.b16 %v1369
    %v2120 = vunpack.c.l.b16 %v1370
    %v2121 = vunpack.c.h.b16 %v1370
    %v2122 = vunpack.c.l.b16 %v1371
    %v2123 = vunpack.c.h.b16 %v1371
    %v2124 = vunpack.c.l.b16 %v1372
    %v2125 = vunpack.c.h.b16 %v1372
    %v2126 = vunpack.c.l.b16 %v1373
    %v2127 = vunpack.c.h.b16 %v1373
    %v2128 = vunpack.c.l.b16 %v1374
    %v2129 = vunpack.c.h.b16 %v1374
    %v2130 = vunpack.c.l.b16 %v1375
    %v2131 = vunpack.c.h.b16 %v1375
    %v2132 = vunpack.c.l.b16 %v1376
    %v2133 = vunpack.c.h.b16 %v1376
    %v2134 = vunpack.c.l.b16 %v1377
    %v2135 = vunpack.c.h.b16 %v1377
    %v2136 = vunpack.c.l.b16 %v1378
    %v2137 = vunpack.c.h.b16 %v1378
    %v2138 = vunpack.c.l.b16 %v1379
    %v2139 = vunpack.c.h.b16 %v1379
    %v2140 = vunpack.c.l.b16 %v1380
    %v2141 = vunpack.c.h.b16 %v1380
    %v2142 = vunpack.c.l.b16 %v1381
    %v2143 = vunpack.c.h.b16 %v1381
    %v2144 = vunpack.c.l.b16 %v1382
    %v2145 = vunpack.c.h.b16 %v1382
    %v2146 = vunpack.c.l.b16 %v1383
    %v2147 = vunpack.c.h.b16 %v1383
    %v2148 = vunpack.c.l.b16 %v1384
    %v2149 = vunpack.c.h.b16 %v1384
    %v2150 = vunpack.c.l.b16 %v1385
    %v2151 = vunpack.c.h.b16 %v1385
    %v2152 = vunpack.c.l.b16 %v1386
    %v2153 = vunpack.c.h.b16 %v1386
    %v2154 = vunpack.c.l.b16 %v1387
    %v2155 = vunpack.c.h.b16 %v1387
    %v2156 = vpack.c.b16 %v1652, %v1644
    %v2157 = vpack.c.b16 %v1653, %v1645
    %v2158 = vpack.c.b16 %v1654, %v1646
    %v2159 = vpack.c.b16 %v1655, %v1647
    %v2160 = vpack.c.b16 %v1656, %v1648
    %v2161 = vpack.c.b16 %v1657, %v1649
    %v2162 = vpack.c.b16 %v1658, %v1650
    %v2163 = vpack.c.b16 %v1659, %v1651
    %v2164 = vpack.c.b16 %v1668, %v1660
    %v2165 = vpack.c.b16 %v1669, %v1661
    %v2166 = vpack.c.b16 %v1670, %v1662
    %v2167 = vpack.c.b16 %v1671, %v1663
    %v2168 = vpack.c.b16 %v1672, %v1664
    %v2169 = vpack.c.b16 %v1673, %v1665
    %v2170 = vpack.c.b16 %v1674, %v1666
    %v2171 = vpack.c.b16 %v1675, %v1667
    %v2172 = vpack.c.b16 %v1684, %v1676
    %v2173 = vpack.c.b16 %v1685, %v1677
    %v2174 = vpack.c.b16 %v1686, %v1678
    %v2175 = vpack.c.b16 %v1687, %v1679
    %v2176 = vpack.c.b16 %v1688, %v1680
    %v2177 = vpack.c.b16 %v1689, %v1681
    %v2178 = vpack.c.b16 %v1690, %v1682
    %v2179 = vpack.c.b16 %v1691, %v1683
    %v2180 = vpack.c.b16 %v1700, %v1692
    %v2181 = vpack.c.b16 %v1701, %v1693
    %v2182 = vpack.c.b16 %v1702, %v1694
    %v2183 = vpack.c.b16 %v1703, %v1695
    %v2184 = vpack.c.b16 %v1704, %v1696
    %v2185 = vpack.c.b16 %v1705, %v1697
    %v2186 = vpack.c.b16 %v1706, %v1698
    %v2187 = vpack.c.b16 %v1707, %v1699
    %v2188 = vpack.c.b16 %v1716, %v1708
    %v2189 = vpack.c.b16 %v1717, %v1709
    %v2190 = vpack.c.b16 %v1718, %v1710
    %v2191 = vpack.c.b16 %v1719, %v1711
    %v2192 = vpack.c.b16 %v1720, %v1712
    %v2193 = vpack.c.b16 %v1721, %v1713
    %v2194 = vpack.c.b16 %v1722, %v1714
    %v2195 = vpack.c.b16 %v1723, %v1715
    %v2196 = vpack.c.b16 %v1732, %v1724
    %v2197 = vpack.c.b16 %v1733, %v1725
    %v2198 = vpack.c.b16 %v1734, %v1726
    %v2199 = vpack.c.b16 %v1735, %v1727
    %v2200 = vpack.c.b16 %v1736, %v1728
    %v2201 = vpack.c.b16 %v1737, %v1729
    %v2202 = vpack.c.b16 %v1738, %v1730
    %v2203 = vpack.c.b16 %v1739, %v1731
    %v2204 = vpack.c.b16 %v1748, %v1740
    %v2205 = vpack.c.b16 %v1749, %v1741
    %v2206 = vpack.c.b16 %v1750, %v1742
    %v2207 = vpack.c.b16 %v1751, %v1743
    %v2208 = vpack.c.b16 %v1752, %v1744
    %v2209 = vpack.c.b16 %v1753, %v1745
    %v2210 = vpack.c.b16 %v1754, %v1746
    %v2211 = vpack.c.b16 %v1755, %v1747
    %v2212 = vpack.c.b16 %v1764, %v1756
    %v2213 = vpack.c.b16 %v1765, %v1757
    %v2214 = vpack.c.b16 %v1766, %v1758
    %v2215 = vpack.c.b16 %v1767, %v1759
    %v2216 = vpack.c.b16 %v1768, %v1760
    %v2217 = vpack.c.b16 %v1769, %v1761
    %v2218 = vpack.c.b16 %v1770, %v1762
    %v2219 = vpack.c.b16 %v1771, %v1763
    %v2220 = vpack.c.b16 %v1780, %v1772
    %v2221 = vpack.c.b16 %v1781, %v1773
    %v2222 = vpack.c.b16 %v1782, %v1774
    %v2223 = vpack.c.b16 %v1783, %v1775
    %v2224 = vpack.c.b16 %v1784, %v1776
    %v2225 = vpack.c.b16 %v1785, %v1777
    %v2226 = vpack.c.b16 %v1786, %v1778
    %v2227 = vpack.c.b16 %v1787, %v1779
    %v2228 = vpack.c.b16 %v1796, %v1788
    %v2229 = vpack.c.b16 %v1797, %v1789
    %v2230 = vpack.c.b16 %v1798, %v1790
    %v2231 = vpack.c.b16 %v1799, %v1791
    %v2232 = vpack.c.b16 %v1800, %v1792
    %v2233 = vpack.c.b16 %v1801, %v1793
    %v2234 = vpack.c.b16 %v1802, %v1794
    %v2235 = vpack.c.b16 %v1803, %v1795
    %v2236 = vpack.c.b16 %v1812, %v1804
    %v2237 = vpack.c.b16 %v1813, %v1805
    %v2238 = vpack.c.b16 %v1814, %v1806
    %v2239 = vpack.c.b16 %v1815, %v1807
    %v2240 = vpack.c.b16 %v1816, %v1808
    %v2241 = vpack.c.b16 %v1817, %v1809
    %v2242 = vpack.c.b16 %v1818, %v1810
    %v2243 = vpack.c.b16 %v1819, %v1811
    %v2244 = vpack.c.b16 %v1828, %v1820
    %v2245 = vpack.c.b16 %v1829, %v1821
    %v2246 = vpack.c.b16 %v1830, %v1822
    %v2247 = vpack.c.b16 %v1831, %v1823
    %v2248 = vpack.c.b16 %v1832, %v1824
    %v2249 = vpack.c.b16 %v1833, %v1825
    %v2250 = vpack.c.b16 %v1834, %v1826
    %v2251 = vpack.c.b16 %v1835, %v1827
    %v2252 = vpack.c.b16 %v1844, %v1836
    %v2253 = vpack.c.b16 %v1845, %v1837
    %v2254 = vpack.c.b16 %v1846, %v1838
    %v2255 = vpack.c.b16 %v1847, %v1839
    %v2256 = vpack.c.b16 %v1848, %v1840
    %v2257 = vpack.c.b16 %v1849, %v1841
    %v2258 = vpack.c.b16 %v1850, %v1842
    %v2259 = vpack.c.b16 %v1851, %v1843
    %v2260 = vpack.c.b16 %v1860, %v1852
    %v2261 = vpack.c.b16 %v1861, %v1853
    %v2262 = vpack.c.b16 %v1862, %v1854
    %v2263 = vpack.c.b16 %v1863, %v1855
    %v2264 = vpack.c.b16 %v1864, %v1856
    %v2265 = vpack.c.b16 %v1865, %v1857
    %v2266 = vpack.c.b16 %v1866, %v1858
    %v2267 = vpack.c.b16 %v1867, %v1859
    %v2268 = vpack.c.b16 %v1876, %v1868
    %v2269 = vpack.c.b16 %v1877, %v1869
    %v2270 = vpack.c.b16 %v1878, %v1870
    %v2271 = vpack.c.b16 %v1879, %v1871
    %v2272 = vpack.c.b16 %v1880, %v1872
    %v2273 = vpack.c.b16 %v1881, %v1873
    %v2274 = vpack.c.b16 %v1882, %v1874
    %v2275 = vpack.c.b16 %v1883, %v1875
    %v2276 = vpack.c.b16 %v1892, %v1884
    %v2277 = vpack.c.b16 %v1893, %v1885
    %v2278 = vpack.c.b16 %v1894, %v1886
    %v2279 = vpack.c.b16 %v1895, %v1887
    %v2280 = vpack.c.b16 %v1896, %v1888
    %v2281 = vpack.c.b16 %v1897, %v1889
    %v2282 = vpack.c.b16 %v1898, %v1890
    %v2283 = vpack.c.b16 %v1899, %v1891
    %v2284 = vpack.c.b16 %v1908, %v1900
    %v2285 = vpack.c.b16 %v1909, %v1901
    %v2286 = vpack.c.b16 %v1910, %v1902
    %v2287 = vpack.c.b16 %v1911, %v1903
    %v2288 = vpack.c.b16 %v1912, %v1904
    %v2289 = vpack.c.b16 %v1913, %v1905
    %v2290 = vpack.c.b16 %v1914, %v1906
    %v2291 = vpack.c.b16 %v1915, %v1907
    %v2292 = vpack.c.b16 %v1924, %v1916
    %v2293 = vpack.c.b16 %v1925, %v1917
    %v2294 = vpack.c.b16 %v1926, %v1918
    %v2295 = vpack.c.b16 %v1927, %v1919
    %v2296 = vpack.c.b16 %v1928, %v1920
    %v2297 = vpack.c.b16 %v1929, %v1921
    %v2298 = vpack.c.b16 %v1930, %v1922
    %v2299 = vpack.c.b16 %v1931, %v1923
    %v2300 = vpack.c.b16 %v1940, %v1932
    %v2301 = vpack.c.b16 %v1941, %v1933
    %v2302 = vpack.c.b16 %v1942, %v1934
    %v2303 = vpack.c.b16 %v1943, %v1935
    %v2304 = vpack.c.b16 %v1944, %v1936
    %v2305 = vpack.c.b16 %v1945, %v1937
    %v2306 = vpack.c.b16 %v1946, %v1938
    %v2307 = vpack.c.b16 %v1947, %v1939
    %v2308 = vpack.c.b16 %v1956, %v1948
    %v2309 = vpack.c.b16 %v1957, %v1949
    %v2310 = vpack.c.b16 %v1958, %v1950
    %v2311 = vpack.c.b16 %v1959, %v1951
    %v2312 = vpack.c.b16 %v1960, %v1952
    %v2313 = vpack.c.b16 %v1961, %v1953
    %v2314 = vpack.c.b16 %v1962, %v1954
    %v2315 = vpack.c.b16 %v1963, %v1955
    %v2316 = vpack.c.b16 %v1972, %v1964
    %v2317 = vpack.c.b16 %v1973, %v1965
    %v2318 = vpack.c.b16 %v1974, %v1966
    %v2319 = vpack.c.b16 %v1975, %v1967
    %v2320 = vpack.c.b16 %v1976, %v1968
    %v2321 = vpack.c.b16 %v1977, %v1969
    %v2322 = vpack.c.b16 %v1978, %v1970
    %v2323 = vpack.c.b16 %v1979, %v1971
    %v2324 = vpack.c.b16 %v1988, %v1980
    %v2325 = vpack.c.b16 %v1989, %v1981
    %v2326 = vpack.c.b16 %v1990, %v1982
    %v2327 = vpack.c.b16 %v1991, %v1983
    %v2328 = vpack.c.b16 %v1992, %v1984
    %v2329 = vpack.c.b16 %v1993, %v1985
    %v2330 = vpack.c.b16 %v1994, %v1986
    %v2331 = vpack.c.b16 %v1995, %v1987
    %v2332 = vpack.c.b16 %v2004, %v1996
    %v2333 = vpack.c.b16 %v2005, %v1997
    %v2334 = vpack.c.b16 %v2006, %v1998
    %v2335 = vpack.c.b16 %v2007, %v1999
    %v2336 = vpack.c.b16 %v2008, %v2000
    %v2337 = vpack.c.b16 %v2009, %v2001
    %v2338 = vpack.c.b16 %v2010, %v2002
    %v2339 = vpack.c.b16 %v2011, %v2003
    %v2340 = vpack.c.b16 %v2020, %v2012
    %v2341 = vpack.c.b16 %v2021, %v2013
    %v2342 = vpack.c.b16 %v2022, %v2014
    %v2343 = vpack.c.b16 %v2023, %v2015
    %v2344 = vpack.c.b16 %v2024, %v2016
    %v2345 = vpack.c.b16 %v2025, %v2017
    %v2346 = vpack.c.b16 %v2026, %v2018
    %v2347 = vpack.c.b16 %v2027, %v2019
    %v2348 = vpack.c.b16 %v2036, %v2028
    %v2349 = vpack.c.b16 %v2037, %v2029
    %v2350 = vpack.c.b16 %v2038, %v2030
    %v2351 = vpack.c.b16 %v2039, %v2031
    %v2352 = vpack.c.b16 %v2040, %v2032
    %v2353 = vpack.c.b16 %v2041, %v2033
    %v2354 = vpack.c.b16 %v2042, %v2034
    %v2355 = vpack.c.b16 %v2043, %v2035
    %v2356 = vpack.c.b16 %v2052, %v2044
    %v2357 = vpack.c.b16 %v2053, %v2045
    %v2358 = vpack.c.b16 %v2054, %v2046
    %v2359 = vpack.c.b16 %v2055, %v2047
    %v2360 = vpack.c.b16 %v2056, %v2048
    %v2361 = vpack.c.b16 %v2057, %v2049
    %v2362 = vpack.c.b16 %v2058, %v2050
    %v2363 = vpack.c.b16 %v2059, %v2051
    %v2364 = vpack.c.b16 %v2068, %v2060
    %v2365 = vpack.c.b16 %v2069, %v2061
    %v2366 = vpack.c.b16 %v2070, %v2062
    %v2367 = vpack.c.b16 %v2071, %v2063
    %v2368 = vpack.c.b16 %v2072, %v2064
    %v2369 = vpack.c.b16 %v2073, %v2065
    %v2370 = vpack.c.b16 %v2074, %v2066
    %v2371 = vpack.c.b16 %v2075, %v2067
    %v2372 = vpack.c.b16 %v2084, %v2076
    %v2373 = vpack.c.b16 %v2085, %v2077
    %v2374 = vpack.c.b16 %v2086, %v2078
    %v2375 = vpack.c.b16 %v2087, %v2079
    %v2376 = vpack.c.b16 %v2088, %v2080
    %v2377 = vpack.c.b16 %v2089, %v2081
    %v2378 = vpack.c.b16 %v2090, %v2082
    %v2379 = vpack.c.b16 %v2091, %v2083
    %v2380 = vpack.c.b16 %v2100, %v2092
    %v2381 = vpack.c.b16 %v2101, %v2093
    %v2382 = vpack.c.b16 %v2102, %v2094
    %v2383 = vpack.c.b16 %v2103, %v2095
    %v2384 = vpack.c.b16 %v2104, %v2096
    %v2385 = vpack.c.b16 %v2105, %v2097
    %v2386 = vpack.c.b16 %v2106, %v2098
    %v2387 = vpack.c.b16 %v2107, %v2099
    %v2388 = vpack.c.b16 %v2116, %v2108
    %v2389 = vpack.c.b16 %v2117, %v2109
    %v2390 = vpack.c.b16 %v2118, %v2110
    %v2391 = vpack.c.b16 %v2119, %v2111
    %v2392 = vpack.c.b16 %v2120, %v2112
    %v2393 = vpack.c.b16 %v2121, %v2113
    %v2394 = vpack.c.b16 %v2122, %v2114
    %v2395 = vpack.c.b16 %v2123, %v2115
    %v2396 = vpack.c.b16 %v2132, %v2124
    %v2397 = vpack.c.b16 %v2133, %v2125
    %v2398 = vpack.c.b16 %v2134, %v2126
    %v2399 = vpack.c.b16 %v2135, %v2127
    %v2400 = vpack.c.b16 %v2136, %v2128
    %v2401 = vpack.c.b16 %v2137, %v2129
    %v2402 = vpack.c.b16 %v2138, %v2130
    %v2403 = vpack.c.b16 %v2139, %v2131
    %v2404 = vpack.c.b16 %v2148, %v2140
    %v2405 = vpack.c.b16 %v2149, %v2141
    %v2406 = vpack.c.b16 %v2150, %v2142
    %v2407 = vpack.c.b16 %v2151, %v2143
    %v2408 = vpack.c.b16 %v2152, %v2144
    %v2409 = vpack.c.b16 %v2153, %v2145
    %v2410 = vpack.c.b16 %v2154, %v2146
    %v2411 = vpack.c.b16 %v2155, %v2147
    %2668 = vmatprep.subr.bf16.mxu0 %v2157
    %2669 = vmatpush1.bf16.msra.mxu0 %v2156
    %2670 = vmatprep.subr.bf16.mxu0 %v2165
    %2671 = vmatpush1.bf16.msra.mxu0 %v2164
    %2672 = vmatprep.subr.bf16.mxu0 %v2173
    %2673 = vmatpush1.bf16.msra.mxu0 %v2172
    %2674 = vmatprep.subr.bf16.mxu0 %v2181
    %2675 = vmatpush1.bf16.msra.mxu0 %v2180
    %2676 = vmatprep.subr.bf16.mxu0 %v2189
    %2677 = vmatpush1.bf16.msra.mxu0 %v2188
    %2678 = vmatprep.subr.bf16.mxu0 %v2197
    %2679 = vmatpush1.bf16.msra.mxu0 %v2196
    %2680 = vmatprep.subr.bf16.mxu0 %v2205
    %2681 = vmatpush1.bf16.msra.mxu0 %v2204
    %2682 = vmatprep.subr.bf16.mxu0 %v2213
    %2683 = vmatpush1.bf16.msra.mxu0 %v2212
    %2684 = vmatprep.subr.bf16.mxu0 %v2221
    %2685 = vmatpush1.bf16.msra.mxu0 %v2220
    %2686 = vmatprep.subr.bf16.mxu0 %v2229
    %2687 = vmatpush1.bf16.msra.mxu0 %v2228
    %2688 = vmatprep.subr.bf16.mxu0 %v2237
    %2689 = vmatpush1.bf16.msra.mxu0 %v2236
    %2690 = vmatprep.subr.bf16.mxu0 %v2245
    %2691 = vmatpush1.bf16.msra.mxu0 %v2244
    %2692 = vmatprep.subr.bf16.mxu0 %v2253
    %2693 = vmatpush1.bf16.msra.mxu0 %v2252
    %2694 = vmatprep.subr.bf16.mxu0 %v2261
    %2695 = vmatpush1.bf16.msra.mxu0 %v2260
    %2696 = vmatprep.subr.bf16.mxu0 %v2269
    %2697 = vmatpush1.bf16.msra.mxu0 %v2268
    %2698 = vmatprep.subr.bf16.mxu0 %v2277
    %2699 = vmatpush1.bf16.msra.mxu0 %v2276
    %2700 = vmatprep.mubr.bf16.mxu0 %v1129
    %2701 = vmatmul.mubr.bf16.gmra.mrb[0].mxu0 %v1128
    %v2702 = vpop.f32.mrb[0].mxu0
    %v2703 = vadd.f32 0.0, %v2702
    %v2704 = vpop.f32.mrb[0].mxu0
    %v2705 = vadd.f32 0.0, %v2704
    %v2706 = vpop.f32.mrb[0].mxu0
    %v2707 = vpop.f32.mrb[0].mxu0
    %2708 = vdwg.mxu0
    %2709 = vmatprep.subr.bf16.mxu0 %v2285
    %2710 = vmatpush1.bf16.msra.mxu0 %v2284
    %2711 = vmatprep.subr.bf16.mxu0 %v2293
    %2712 = vmatpush1.bf16.msra.mxu0 %v2292
    %2713 = vmatprep.subr.bf16.mxu0 %v2301
    %2714 = vmatpush1.bf16.msra.mxu0 %v2300
    %2715 = vmatprep.subr.bf16.mxu0 %v2309
    %2716 = vmatpush1.bf16.msra.mxu0 %v2308
    %2717 = vmatprep.subr.bf16.mxu0 %v2317
    %2718 = vmatpush1.bf16.msra.mxu0 %v2316
    %2719 = vmatprep.subr.bf16.mxu0 %v2325
    %2720 = vmatpush1.bf16.msra.mxu0 %v2324
    %2721 = vmatprep.subr.bf16.mxu0 %v2333
    %2722 = vmatpush1.bf16.msra.mxu0 %v2332
    %2723 = vmatprep.subr.bf16.mxu0 %v2341
    %2724 = vmatpush1.bf16.msra.mxu0 %v2340
    %2725 = vmatprep.subr.bf16.mxu0 %v2349
    %2726 = vmatpush1.bf16.msra.mxu0 %v2348
    %2727 = vmatprep.subr.bf16.mxu0 %v2357
    %2728 = vmatpush1.bf16.msra.mxu0 %v2356
    %2729 = vmatprep.subr.bf16.mxu0 %v2365
    %2730 = vmatpush1.bf16.msra.mxu0 %v2364
    %2731 = vmatprep.subr.bf16.mxu0 %v2373
    %2732 = vmatpush1.bf16.msra.mxu0 %v2372
    %2733 = vmatprep.subr.bf16.mxu0 %v2381
    %2734 = vmatpush1.bf16.msra.mxu0 %v2380
    %2735 = vmatprep.subr.bf16.mxu0 %v2389
    %2736 = vmatpush1.bf16.msra.mxu0 %v2388
    %2737 = vmatprep.subr.bf16.mxu0 %v2397
    %2738 = vmatpush1.bf16.msra.mxu0 %v2396
    %2739 = vmatprep.subr.bf16.mxu0 %v2405
    %2740 = vmatpush1.bf16.msra.mxu0 %v2404
    %2741 = vmatprep.mubr.bf16.mxu0 %v1131
    %2742 = vmatmul.mubr.bf16.gmra.mrb[0].mxu0 %v1130
    %v2743 = vpop.f32.mrb[0].mxu0
    %v2744 = vadd.f32 %v2703, %v2743
    %v2745 = vpop.f32.mrb[0].mxu0
    %v2746 = vadd.f32 %v2705, %v2745
    %v2747 = vpop.f32.mrb[0].mxu0
    %v2748 = vpop.f32.mrb[0].mxu0
    %2749 = vdwg.mxu0
    %2750 = vmatprep.subr.bf16.mxu0 %v2159
    %2751 = vmatpush1.bf16.msra.mxu0 %v2158
    %2752 = vmatprep.subr.bf16.mxu0 %v2167
    %2753 = vmatpush1.bf16.msra.mxu0 %v2166
    %2754 = vmatprep.subr.bf16.mxu0 %v2175
    %2755 = vmatpush1.bf16.msra.mxu0 %v2174
    %2756 = vmatprep.subr.bf16.mxu0 %v2183
    %2757 = vmatpush1.bf16.msra.mxu0 %v2182
    %2758 = vmatprep.subr.bf16.mxu0 %v2191
    %2759 = vmatpush1.bf16.msra.mxu0 %v2190
    %2760 = vmatprep.subr.bf16.mxu0 %v2199
    %2761 = vmatpush1.bf16.msra.mxu0 %v2198
    %2762 = vmatprep.subr.bf16.mxu0 %v2207
    %2763 = vmatpush1.bf16.msra.mxu0 %v2206
    %2764 = vmatprep.subr.bf16.mxu0 %v2215
    %2765 = vmatpush1.bf16.msra.mxu0 %v2214
    %2766 = vmatprep.subr.bf16.mxu0 %v2223
    %2767 = vmatpush1.bf16.msra.mxu0 %v2222
    %2768 = vmatprep.subr.bf16.mxu0 %v2231
    %2769 = vmatpush1.bf16.msra.mxu0 %v2230
    %2770 = vmatprep.subr.bf16.mxu0 %v2239
    %2771 = vmatpush1.bf16.msra.mxu0 %v2238
    %2772 = vmatprep.subr.bf16.mxu0 %v2247
    %2773 = vmatpush1.bf16.msra.mxu0 %v2246
    %2774 = vmatprep.subr.bf16.mxu0 %v2255
    %2775 = vmatpush1.bf16.msra.mxu0 %v2254
    %2776 = vmatprep.subr.bf16.mxu0 %v2263
    %2777 = vmatpush1.bf16.msra.mxu0 %v2262
    %2778 = vmatprep.subr.bf16.mxu0 %v2271
    %2779 = vmatpush1.bf16.msra.mxu0 %v2270
    %2780 = vmatprep.subr.bf16.mxu0 %v2279
    %2781 = vmatpush1.bf16.msra.mxu0 %v2278
    %2782 = vmatprep.mubr.bf16.mxu0 %v1129
    %2783 = vmatmul.mubr.bf16.gmra.mrb[0].mxu0 %v1128
    %v2784 = vpop.f32.mrb[0].mxu0
    %v2785 = vadd.f32 0.0, %v2784
    %v2786 = vpop.f32.mrb[0].mxu0
    %v2787 = vadd.f32 0.0, %v2786
    %v2788 = vpop.f32.mrb[0].mxu0
    %v2789 = vpop.f32.mrb[0].mxu0
    %2790 = vdwg.mxu0
    %2791 = vmatprep.subr.bf16.mxu0 %v2287
    %2792 = vmatpush1.bf16.msra.mxu0 %v2286
    %2793 = vmatprep.subr.bf16.mxu0 %v2295
    %2794 = vmatpush1.bf16.msra.mxu0 %v2294
    %2795 = vmatprep.subr.bf16.mxu0 %v2303
    %2796 = vmatpush1.bf16.msra.mxu0 %v2302
    %2797 = vmatprep.subr.bf16.mxu0 %v2311
    %2798 = vmatpush1.bf16.msra.mxu0 %v2310
    %2799 = vmatprep.subr.bf16.mxu0 %v2319
    %2800 = vmatpush1.bf16.msra.mxu0 %v2318
    %2801 = vmatprep.subr.bf16.mxu0 %v2327
    %2802 = vmatpush1.bf16.msra.mxu0 %v2326
    %2803 = vmatprep.subr.bf16.mxu0 %v2335
    %2804 = vmatpush1.bf16.msra.mxu0 %v2334
    %2805 = vmatprep.subr.bf16.mxu0 %v2343
    %2806 = vmatpush1.bf16.msra.mxu0 %v2342
    %2807 = vmatprep.subr.bf16.mxu0 %v2351
    %2808 = vmatpush1.bf16.msra.mxu0 %v2350
    %2809 = vmatprep.subr.bf16.mxu0 %v2359
    %2810 = vmatpush1.bf16.msra.mxu0 %v2358
    %2811 = vmatprep.subr.bf16.mxu0 %v2367
    %2812 = vmatpush1.bf16.msra.mxu0 %v2366
    %2813 = vmatprep.subr.bf16.mxu0 %v2375
    %2814 = vmatpush1.bf16.msra.mxu0 %v2374
    %2815 = vmatprep.subr.bf16.mxu0 %v2383
    %2816 = vmatpush1.bf16.msra.mxu0 %v2382
    %2817 = vmatprep.subr.bf16.mxu0 %v2391
    %2818 = vmatpush1.bf16.msra.mxu0 %v2390
    %2819 = vmatprep.subr.bf16.mxu0 %v2399
    %2820 = vmatpush1.bf16.msra.mxu0 %v2398
    %2821 = vmatprep.subr.bf16.mxu0 %v2407
    %2822 = vmatpush1.bf16.msra.mxu0 %v2406
    %2823 = vmatprep.mubr.bf16.mxu0 %v1131
    %2824 = vmatmul.mubr.bf16.gmra.mrb[0].mxu0 %v1130
    %v2825 = vpop.f32.mrb[0].mxu0
    %v2826 = vadd.f32 %v2785, %v2825
    %v2827 = vpop.f32.mrb[0].mxu0
    %v2828 = vadd.f32 %v2787, %v2827
    %v2829 = vpop.f32.mrb[0].mxu0
    %v2830 = vpop.f32.mrb[0].mxu0
    %2831 = vdwg.mxu0
    %2832 = vmatprep.subr.bf16.mxu0 %v2161
    %2833 = vmatpush1.bf16.msra.mxu0 %v2160
    %2834 = vmatprep.subr.bf16.mxu0 %v2169
    %2835 = vmatpush1.bf16.msra.mxu0 %v2168
    %2836 = vmatprep.subr.bf16.mxu0 %v2177
    %2837 = vmatpush1.bf16.msra.mxu0 %v2176
    %2838 = vmatprep.subr.bf16.mxu0 %v2185
    %2839 = vmatpush1.bf16.msra.mxu0 %v2184
    %2840 = vmatprep.subr.bf16.mxu0 %v2193
    %2841 = vmatpush1.bf16.msra.mxu0 %v2192
    %2842 = vmatprep.subr.bf16.mxu0 %v2201
    %2843 = vmatpush1.bf16.msra.mxu0 %v2200
    %2844 = vmatprep.subr.bf16.mxu0 %v2209
    %2845 = vmatpush1.bf16.msra.mxu0 %v2208
    %2846 = vmatprep.subr.bf16.mxu0 %v2217
    %2847 = vmatpush1.bf16.msra.mxu0 %v2216
    %2848 = vmatprep.subr.bf16.mxu0 %v2225
    %2849 = vmatpush1.bf16.msra.mxu0 %v2224
    %2850 = vmatprep.subr.bf16.mxu0 %v2233
    %2851 = vmatpush1.bf16.msra.mxu0 %v2232
    %2852 = vmatprep.subr.bf16.mxu0 %v2241
    %2853 = vmatpush1.bf16.msra.mxu0 %v2240
    %2854 = vmatprep.subr.bf16.mxu0 %v2249
    %2855 = vmatpush1.bf16.msra.mxu0 %v2248
    %2856 = vmatprep.subr.bf16.mxu0 %v2257
    %2857 = vmatpush1.bf16.msra.mxu0 %v2256
    %2858 = vmatprep.subr.bf16.mxu0 %v2265
    %2859 = vmatpush1.bf16.msra.mxu0 %v2264
    %2860 = vmatprep.subr.bf16.mxu0 %v2273
    %2861 = vmatpush1.bf16.msra.mxu0 %v2272
    %2862 = vmatprep.subr.bf16.mxu0 %v2281
    %2863 = vmatpush1.bf16.msra.mxu0 %v2280
    %2864 = vmatprep.mubr.bf16.mxu0 %v1129
    %2865 = vmatmul.mubr.bf16.gmra.mrb[0].mxu0 %v1128
    %v2866 = vpop.f32.mrb[0].mxu0
    %v2867 = vadd.f32 0.0, %v2866
    %v2868 = vpop.f32.mrb[0].mxu0
    %v2869 = vadd.f32 0.0, %v2868
    %v2870 = vpop.f32.mrb[0].mxu0
    %v2871 = vpop.f32.mrb[0].mxu0
    %2872 = vdwg.mxu0
    %2873 = vmatprep.subr.bf16.mxu0 %v2289
    %2874 = vmatpush1.bf16.msra.mxu0 %v2288
    %2875 = vmatprep.subr.bf16.mxu0 %v2297
    %2876 = vmatpush1.bf16.msra.mxu0 %v2296
    %2877 = vmatprep.subr.bf16.mxu0 %v2305
    %2878 = vmatpush1.bf16.msra.mxu0 %v2304
    %2879 = vmatprep.subr.bf16.mxu0 %v2313
    %2880 = vmatpush1.bf16.msra.mxu0 %v2312
    %2881 = vmatprep.subr.bf16.mxu0 %v2321
    %2882 = vmatpush1.bf16.msra.mxu0 %v2320
    %2883 = vmatprep.subr.bf16.mxu0 %v2329
    %2884 = vmatpush1.bf16.msra.mxu0 %v2328
    %2885 = vmatprep.subr.bf16.mxu0 %v2337
    %2886 = vmatpush1.bf16.msra.mxu0 %v2336
    %2887 = vmatprep.subr.bf16.mxu0 %v2345
    %2888 = vmatpush1.bf16.msra.mxu0 %v2344
    %2889 = vmatprep.subr.bf16.mxu0 %v2353
    %2890 = vmatpush1.bf16.msra.mxu0 %v2352
    %2891 = vmatprep.subr.bf16.mxu0 %v2361
    %2892 = vmatpush1.bf16.msra.mxu0 %v2360
    %2893 = vmatprep.subr.bf16.mxu0 %v2369
    %2894 = vmatpush1.bf16.msra.mxu0 %v2368
    %2895 = vmatprep.subr.bf16.mxu0 %v2377
    %2896 = vmatpush1.bf16.msra.mxu0 %v2376
    %2897 = vmatprep.subr.bf16.mxu0 %v2385
    %2898 = vmatpush1.bf16.msra.mxu0 %v2384
    %2899 = vmatprep.subr.bf16.mxu0 %v2393
    %2900 = vmatpush1.bf16.msra.mxu0 %v2392
    %2901 = vmatprep.subr.bf16.mxu0 %v2401
    %2902 = vmatpush1.bf16.msra.mxu0 %v2400
    %2903 = vmatprep.subr.bf16.mxu0 %v2409
    %2904 = vmatpush1.bf16.msra.mxu0 %v2408
    %2905 = vmatprep.mubr.bf16.mxu0 %v1131
    %2906 = vmatmul.mubr.bf16.gmra.mrb[0].mxu0 %v1130
    %v2907 = vpop.f32.mrb[0].mxu0
    %v2908 = vadd.f32 %v2867, %v2907
    %v2909 = vpop.f32.mrb[0].mxu0
    %v2910 = vadd.f32 %v2869, %v2909
    %v2911 = vpop.f32.mrb[0].mxu0
    %v2912 = vpop.f32.mrb[0].mxu0
    %2913 = vdwg.mxu0
    %2914 = vmatprep.subr.bf16.mxu0 %v2163
    %2915 = vmatpush1.bf16.msra.mxu0 %v2162
    %2916 = vmatprep.subr.bf16.mxu0 %v2171
    %2917 = vmatpush1.bf16.msra.mxu0 %v2170
    %2918 = vmatprep.subr.bf16.mxu0 %v2179
    %2919 = vmatpush1.bf16.msra.mxu0 %v2178
    %2920 = vmatprep.subr.bf16.mxu0 %v2187
    %2921 = vmatpush1.bf16.msra.mxu0 %v2186
    %2922 = vmatprep.subr.bf16.mxu0 %v2195
    %2923 = vmatpush1.bf16.msra.mxu0 %v2194
    %2924 = vmatprep.subr.bf16.mxu0 %v2203
    %2925 = vmatpush1.bf16.msra.mxu0 %v2202
    %2926 = vmatprep.subr.bf16.mxu0 %v2211
    %2927 = vmatpush1.bf16.msra.mxu0 %v2210
    %2928 = vmatprep.subr.bf16.mxu0 %v2219
    %2929 = vmatpush1.bf16.msra.mxu0 %v2218
    %2930 = vmatprep.subr.bf16.mxu0 %v2227
    %2931 = vmatpush1.bf16.msra.mxu0 %v2226
    %2932 = vmatprep.subr.bf16.mxu0 %v2235
    %2933 = vmatpush1.bf16.msra.mxu0 %v2234
    %2934 = vmatprep.subr.bf16.mxu0 %v2243
    %2935 = vmatpush1.bf16.msra.mxu0 %v2242
    %2936 = vmatprep.subr.bf16.mxu0 %v2251
    %2937 = vmatpush1.bf16.msra.mxu0 %v2250
    %2938 = vmatprep.subr.bf16.mxu0 %v2259
    %2939 = vmatpush1.bf16.msra.mxu0 %v2258
    %2940 = vmatprep.subr.bf16.mxu0 %v2267
    %2941 = vmatpush1.bf16.msra.mxu0 %v2266
    %2942 = vmatprep.subr.bf16.mxu0 %v2275
    %2943 = vmatpush1.bf16.msra.mxu0 %v2274
    %2944 = vmatprep.subr.bf16.mxu0 %v2283
    %2945 = vmatpush1.bf16.msra.mxu0 %v2282
    %2946 = vmatprep.mubr.bf16.mxu0 %v1129
    %2947 = vmatmul.mubr.bf16.gmra.mrb[0].mxu0 %v1128
    %v2948 = vpop.f32.mrb[0].mxu0
    %v2949 = vadd.f32 0.0, %v2948
    %v2950 = vpop.f32.mrb[0].mxu0
    %v2951 = vadd.f32 0.0, %v2950
    %v2952 = vpop.f32.mrb[0].mxu0
    %v2953 = vpop.f32.mrb[0].mxu0
    %2954 = vdwg.mxu0
    %2955 = vmatprep.subr.bf16.mxu0 %v2291
    %2956 = vmatpush1.bf16.msra.mxu0 %v2290
    %2957 = vmatprep.subr.bf16.mxu0 %v2299
    %2958 = vmatpush1.bf16.msra.mxu0 %v2298
    %2959 = vmatprep.subr.bf16.mxu0 %v2307
    %2960 = vmatpush1.bf16.msra.mxu0 %v2306
    %2961 = vmatprep.subr.bf16.mxu0 %v2315
    %2962 = vmatpush1.bf16.msra.mxu0 %v2314
    %2963 = vmatprep.subr.bf16.mxu0 %v2323
    %2964 = vmatpush1.bf16.msra.mxu0 %v2322
    %2965 = vmatprep.subr.bf16.mxu0 %v2331
    %2966 = vmatpush1.bf16.msra.mxu0 %v2330
    %2967 = vmatprep.subr.bf16.mxu0 %v2339
    %2968 = vmatpush1.bf16.msra.mxu0 %v2338
    %2969 = vmatprep.subr.bf16.mxu0 %v2347
    %2970 = vmatpush1.bf16.msra.mxu0 %v2346
    %2971 = vmatprep.subr.bf16.mxu0 %v2355
    %2972 = vmatpush1.bf16.msra.mxu0 %v2354
    %2973 = vmatprep.subr.bf16.mxu0 %v2363
    %2974 = vmatpush1.bf16.msra.mxu0 %v2362
    %2975 = vmatprep.subr.bf16.mxu0 %v2371
    %2976 = vmatpush1.bf16.msra.mxu0 %v2370
    %2977 = vmatprep.subr.bf16.mxu0 %v2379
    %2978 = vmatpush1.bf16.msra.mxu0 %v2378
    %2979 = vmatprep.subr.bf16.mxu0 %v2387
    %2980 = vmatpush1.bf16.msra.mxu0 %v2386
    %2981 = vmatprep.subr.bf16.mxu0 %v2395
    %2982 = vmatpush1.bf16.msra.mxu0 %v2394
    %2983 = vmatprep.subr.bf16.mxu0 %v2403
    %2984 = vmatpush1.bf16.msra.mxu0 %v2402
    %2985 = vmatprep.subr.bf16.mxu0 %v2411
    %2986 = vmatpush1.bf16.msra.mxu0 %v2410
    %2987 = vmatprep.mubr.bf16.mxu0 %v1131
    %2988 = vmatmul.mubr.bf16.gmra.mrb[0].mxu0 %v1130
    %v2989 = vpop.f32.mrb[0].mxu0
    %v2990 = vadd.f32 %v2949, %v2989
    %v2991 = vpop.f32.mrb[0].mxu0
    %v2992 = vadd.f32 %v2951, %v2991
    %v2993 = vpop.f32.mrb[0].mxu0
    %v2994 = vpop.f32.mrb[0].mxu0
    %2995 = vdwg.mxu0
    %v2996 = vld [vmem:[%s6 + $0xd] sm:$0xff]
    %v2997 = vld [vmem:[%s6 + $0x15] sm:$0xff]
    %v2998 = vrot.slane %v2744, 4
    %v2999 = vadd.f32 %v2744, %v2998
    %v3000 = vrot.slane %v2999, 2
    %v3001 = vadd.f32 %v2999, %v3000
    %v3002 = vrot.slane %v3001, 1
    %v3003 = vadd.f32 %v3001, %v3002
    %v3004 = vrot.slane %v2746, 4
    %v3005 = vadd.f32 %v2746, %v3004
    %v3006 = vrot.slane %v3005, 2
    %v3007 = vadd.f32 %v3005, %v3006
    %v3008 = vrot.slane %v3007, 1
    %v3009 = vadd.f32 %v3007, %v3008
    %v3010 = vrot.slane %v2826, 4
    %v3011 = vadd.f32 %v2826, %v3010
    %v3012 = vrot.slane %v3011, 2
    %v3013 = vadd.f32 %v3011, %v3012
    %v3014 = vrot.slane %v3013, 1
    %v3015 = vadd.f32 %v3013, %v3014
    %v3016 = vrot.slane %v2828, 4
    %v3017 = vadd.f32 %v2828, %v3016
    %v3018 = vrot.slane %v3017, 2
    %v3019 = vadd.f32 %v3017, %v3018
    %v3020 = vrot.slane %v3019, 1
    %v3021 = vadd.f32 %v3019, %v3020
    %v3022 = vrot.slane %v2908, 4
    %v3023 = vadd.f32 %v2908, %v3022
    %v3024 = vrot.slane %v3023, 2
    %v3025 = vadd.f32 %v3023, %v3024
    %v3026 = vrot.slane %v3025, 1
    %v3027 = vadd.f32 %v3025, %v3026
    %v3028 = vrot.slane %v2910, 4
    %v3029 = vadd.f32 %v2910, %v3028
    %v3030 = vrot.slane %v3029, 2
    %v3031 = vadd.f32 %v3029, %v3030
    %v3032 = vrot.slane %v3031, 1
    %v3033 = vadd.f32 %v3031, %v3032
    %v3034 = vrot.slane %v2990, 4
    %v3035 = vadd.f32 %v2990, %v3034
    %v3036 = vrot.slane %v3035, 2
    %v3037 = vadd.f32 %v3035, %v3036
    %v3038 = vrot.slane %v3037, 1
    %v3039 = vadd.f32 %v3037, %v3038
    %v3040 = vrot.slane %v2992, 4
    %v3041 = vadd.f32 %v2992, %v3040
    %v3042 = vrot.slane %v3041, 2
    %v3043 = vadd.f32 %v3041, %v3042
    %v3044 = vrot.slane %v3043, 1
    %v3045 = vadd.f32 %v3043, %v3044
    %v3046 = vmul.f32 %v3003, %v363
    %v3047 = vmul.f32 %v3009, %v363
    %v3048 = vmul.f32 %v3015, %v363
    %v3049 = vmul.f32 %v3021, %v363
    %v3050 = vmul.f32 %v3027, %v363
    %v3051 = vmul.f32 %v3033, %v363
    %v3052 = vmul.f32 %v3039, %v363
    %v3053 = vmul.f32 %v3045, %v363
    %v3054 = vsub.f32 %v2744, %v3046
    %v3055 = vsub.f32 %v2746, %v3047
    %v3056 = vsub.f32 %v2826, %v3048
    %v3057 = vsub.f32 %v2828, %v3049
    %v3058 = vsub.f32 %v2908, %v3050
    %v3059 = vsub.f32 %v2910, %v3051
    %v3060 = vsub.f32 %v2990, %v3052
    %v3061 = vsub.f32 %v2992, %v3053
    %v3062 = vmul.f32 %v3054, %v3054
    %v3063 = vmul.f32 %v3055, %v3055
    %v3064 = vmul.f32 %v3056, %v3056
    %v3065 = vmul.f32 %v3057, %v3057
    %v3066 = vmul.f32 %v3058, %v3058
    %v3067 = vmul.f32 %v3059, %v3059
    %v3068 = vmul.f32 %v3060, %v3060
    %v3069 = vmul.f32 %v3061, %v3061
    %v3070 = vrot.slane %v3062, 4
    %v3071 = vadd.f32 %v3062, %v3070
    %v3072 = vrot.slane %v3071, 2
    %v3073 = vadd.f32 %v3071, %v3072
    %v3074 = vrot.slane %v3073, 1
    %v3075 = vadd.f32 %v3073, %v3074
    %v3076 = vrot.slane %v3063, 4
    %v3077 = vadd.f32 %v3063, %v3076
    %v3078 = vrot.slane %v3077, 2
    %v3079 = vadd.f32 %v3077, %v3078
    %v3080 = vrot.slane %v3079, 1
    %v3081 = vadd.f32 %v3079, %v3080
    %v3082 = vrot.slane %v3064, 4
    %v3083 = vadd.f32 %v3064, %v3082
    %v3084 = vrot.slane %v3083, 2
    %v3085 = vadd.f32 %v3083, %v3084
    %v3086 = vrot.slane %v3085, 1
    %v3087 = vadd.f32 %v3085, %v3086
    %v3088 = vrot.slane %v3065, 4
    %v3089 = vadd.f32 %v3065, %v3088
    %v3090 = vrot.slane %v3089, 2
    %v3091 = vadd.f32 %v3089, %v3090
    %v3092 = vrot.slane %v3091, 1
    %v3093 = vadd.f32 %v3091, %v3092
    %v3094 = vrot.slane %v3066, 4
    %v3095 = vadd.f32 %v3066, %v3094
    %v3096 = vrot.slane %v3095, 2
    %v3097 = vadd.f32 %v3095, %v3096
    %v3098 = vrot.slane %v3097, 1
    %v3099 = vadd.f32 %v3097, %v3098
    %v3100 = vrot.slane %v3067, 4
    %v3101 = vadd.f32 %v3067, %v3100
    %v3102 = vrot.slane %v3101, 2
    %v3103 = vadd.f32 %v3101, %v3102
    %v3104 = vrot.slane %v3103, 1
    %v3105 = vadd.f32 %v3103, %v3104
    %v3106 = vrot.slane %v3068, 4
    %v3107 = vadd.f32 %v3068, %v3106
    %v3108 = vrot.slane %v3107, 2
    %v3109 = vadd.f32 %v3107, %v3108
    %v3110 = vrot.slane %v3109, 1
    %v3111 = vadd.f32 %v3109, %v3110
    %v3112 = vrot.slane %v3069, 4
    %v3113 = vadd.f32 %v3069, %v3112
    %v3114 = vrot.slane %v3113, 2
    %v3115 = vadd.f32 %v3113, %v3114
    %v3116 = vrot.slane %v3115, 1
    %v3117 = vadd.f32 %v3115, %v3116
    %v3118 = vmul.f32 %v3075, %v363
    %v3119 = vmul.f32 %v3081, %v363
    %v3120 = vmul.f32 %v3087, %v363
    %v3121 = vmul.f32 %v3093, %v363
    %v3122 = vmul.f32 %v3099, %v363
    %v3123 = vmul.f32 %v3105, %v363
    %v3124 = vmul.f32 %v3111, %v363
    %v3125 = vmul.f32 %v3117, %v363
    %v3126 = vadd.f32 %v3118, 0.8
    %v3127 = vadd.f32 %v3119, 0.8
    %v3128 = vadd.f32 %v3120, 0.8
    %v3129 = vadd.f32 %v3121, 0.8
    %v3130 = vadd.f32 %v3122, 0.8
    %v3131 = vadd.f32 %v3123, 0.8
    %v3132 = vadd.f32 %v3124, 0.8
    %v3133 = vadd.f32 %v3125, 0.8
    %v3134 = vrsqrt.pop %v3126
    %v3135 = vrsqrt.pop %v3127
    %v3136 = vrsqrt.pop %v3128
    %v3137 = vrsqrt.pop %v3129
    %v3138 = vrsqrt.pop %v3130
    %v3139 = vrsqrt.pop %v3131
    %v3140 = vrsqrt.pop %v3132
    %v3141 = vrsqrt.pop %v3133
    %v3150 = vcombine.low %v3134, %v3135
    %v3151 = vcombine.low %v3136, %v3137
    %v3152 = vcombine.low %v3138, %v3139
    %v3153 = vcombine.low %v3140, %v3141
    %v3155 = vunpack.c.l.s4 1966171168
    %v3156 = vunpack.c.0.s8 %v3155
    %v3157 = vlaneseq
    %v3158 = vshrl.u32 %v3157, 7
    %v3159 = vsub.s32 %v3156, %v3158
    %v3160 = vrot.slane %v3150, %v3159
    %v3162 = vunpack.c.l.s4 1966171168
    %v3163 = vunpack.c.0.s8 %v3162
    %v3164 = vlaneseq
    %v3165 = vshrl.u32 %v3164, 7
    %v3166 = vsub.s32 %v3163, %v3165
    %v3167 = vrot.slane %v3151, %v3166
    %v3169 = vunpack.c.l.s4 1966171168
    %v3170 = vunpack.c.0.s8 %v3169
    %v3171 = vlaneseq
    %v3172 = vshrl.u32 %v3171, 7
    %v3173 = vsub.s32 %v3170, %v3172
    %v3174 = vrot.slane %v3152, %v3173
    %v3176 = vunpack.c.l.s4 1966171168
    %v3177 = vunpack.c.0.s8 %v3176
    %v3178 = vlaneseq
    %v3179 = vshrl.u32 %v3178, 7
    %v3180 = vsub.s32 %v3177, %v3179
    %v3181 = vrot.slane %v3153, %v3180
    %v3182 = vcombine.low %v3160, %v3167
    %v3183 = vcombine.low %v3174, %v3181
    %v3185 = vunpack.c.l.s4 1966171168
    %v3186 = vunpack.c.0.s8 %v3185
    %v3187 = vlaneseq
    %v3188 = vshrl.u32 %v3187, 7
    %v3189 = vsub.s32 %v3186, %v3188
    %v3190 = vrot.slane %v3182, %v3189
    %v3192 = vunpack.c.l.s4 1966171168
    %v3193 = vunpack.c.0.s8 %v3192
    %v3194 = vlaneseq
    %v3195 = vshrl.u32 %v3194, 7
    %v3196 = vsub.s32 %v3193, %v3195
    %v3197 = vrot.slane %v3183, %v3196
    %v3198 = vcombine.low %v3190, %v3197
    %v3200 = vmul.f32 %v2996, %v3198
    %v3202 = vlaneseq
    %v3203 = vshrl.u32 %v3202, 7
    %v3204 = vsub.s32 0, %v3203
    %v3205 = vrot.slane %v3200, %v3204
    %v3206 = vlaneseq
    %v3207 = vshrl.u32 %v3206, 7
    %v3208 = vsub.s32 1, %v3207
    %v3209 = vrot.slane %v3200, %v3208
    %v3210 = vlaneseq
    %v3211 = vshrl.u32 %v3210, 7
    %v3212 = vsub.s32 2, %v3211
    %v3213 = vrot.slane %v3200, %v3212
    %v3214 = vlaneseq
    %v3215 = vshrl.u32 %v3214, 7
    %v3216 = vsub.s32 3, %v3215
    %v3217 = vrot.slane %v3200, %v3216
    %v3218 = vlaneseq
    %v3219 = vshrl.u32 %v3218, 7
    %v3220 = vsub.s32 4, %v3219
    %v3221 = vrot.slane %v3200, %v3220
    %v3222 = vlaneseq
    %v3223 = vshrl.u32 %v3222, 7
    %v3224 = vsub.s32 5, %v3223
    %v3225 = vrot.slane %v3200, %v3224
    %v3226 = vlaneseq
    %v3227 = vshrl.u32 %v3226, 7
    %v3228 = vsub.s32 6, %v3227
    %v3229 = vrot.slane %v3200, %v3228
    %v3230 = vlaneseq
    %v3231 = vshrl.u32 %v3230, 7
    %v3232 = vsub.s32 7, %v3231
    %v3233 = vrot.slane %v3200, %v3232
    %v3242 = vmul.f32 %v3046, %v3205
    %v3243 = vmul.f32 %v3047, %v3209
    %v3244 = vmul.f32 %v3048, %v3213
    %v3245 = vmul.f32 %v3049, %v3217
    %v3246 = vmul.f32 %v3050, %v3221
    %v3247 = vmul.f32 %v3051, %v3225
    %v3248 = vmul.f32 %v3052, %v3229
    %v3249 = vmul.f32 %v3053, %v3233
    %v3258 = vcombine.low %v3242, %v3243
    %v3259 = vcombine.low %v3244, %v3245
    %v3260 = vcombine.low %v3246, %v3247
    %v3261 = vcombine.low %v3248, %v3249
    %v3263 = vunpack.c.l.s4 1966171168
    %v3264 = vunpack.c.0.s8 %v3263
    %v3265 = vlaneseq
    %v3266 = vshrl.u32 %v3265, 7
    %v3267 = vsub.s32 %v3264, %v3266
    %v3268 = vrot.slane %v3258, %v3267
    %v3270 = vunpack.c.l.s4 1966171168
    %v3271 = vunpack.c.0.s8 %v3270
    %v3272 = vlaneseq
    %v3273 = vshrl.u32 %v3272, 7
    %v3274 = vsub.s32 %v3271, %v3273
    %v3275 = vrot.slane %v3259, %v3274
    %v3277 = vunpack.c.l.s4 1966171168
    %v3278 = vunpack.c.0.s8 %v3277
    %v3279 = vlaneseq
    %v3280 = vshrl.u32 %v3279, 7
    %v3281 = vsub.s32 %v3278, %v3280
    %v3282 = vrot.slane %v3260, %v3281
    %v3284 = vunpack.c.l.s4 1966171168
    %v3285 = vunpack.c.0.s8 %v3284
    %v3286 = vlaneseq
    %v3287 = vshrl.u32 %v3286, 7
    %v3288 = vsub.s32 %v3285, %v3287
    %v3289 = vrot.slane %v3261, %v3288
    %v3290 = vcombine.low %v3268, %v3275
    %v3291 = vcombine.low %v3282, %v3289
    %v3293 = vunpack.c.l.s4 1966171168
    %v3294 = vunpack.c.0.s8 %v3293
    %v3295 = vlaneseq
    %v3296 = vshrl.u32 %v3295, 7
    %v3297 = vsub.s32 %v3294, %v3296
    %v3298 = vrot.slane %v3290, %v3297
    %v3300 = vunpack.c.l.s4 1966171168
    %v3301 = vunpack.c.0.s8 %v3300
    %v3302 = vlaneseq
    %v3303 = vshrl.u32 %v3302, 7
    %v3304 = vsub.s32 %v3301, %v3303
    %v3305 = vrot.slane %v3291, %v3304
    %v3306 = vcombine.low %v3298, %v3305
    %v3308 = vsub.f32 %v2997, %v3306
    %v3309 = vmul.f32 %v2744, %v3205
    %v3310 = vmul.f32 %v2746, %v3209
    %v3311 = vmul.f32 %v2826, %v3213
    %v3312 = vmul.f32 %v2828, %v3217
    %v3313 = vmul.f32 %v2908, %v3221
    %v3314 = vmul.f32 %v2910, %v3225
    %v3315 = vmul.f32 %v2990, %v3229
    %v3316 = vmul.f32 %v2992, %v3233
    %v3318 = vlaneseq
    %v3319 = vshrl.u32 %v3318, 7
    %v3320 = vsub.s32 0, %v3319
    %v3321 = vrot.slane %v3308, %v3320
    %v3322 = vlaneseq
    %v3323 = vshrl.u32 %v3322, 7
    %v3324 = vsub.s32 1, %v3323
    %v3325 = vrot.slane %v3308, %v3324
    %v3326 = vlaneseq
    %v3327 = vshrl.u32 %v3326, 7
    %v3328 = vsub.s32 2, %v3327
    %v3329 = vrot.slane %v3308, %v3328
    %v3330 = vlaneseq
    %v3331 = vshrl.u32 %v3330, 7
    %v3332 = vsub.s32 3, %v3331
    %v3333 = vrot.slane %v3308, %v3332
    %v3334 = vlaneseq
    %v3335 = vshrl.u32 %v3334, 7
    %v3336 = vsub.s32 4, %v3335
    %v3337 = vrot.slane %v3308, %v3336
    %v3338 = vlaneseq
    %v3339 = vshrl.u32 %v3338, 7
    %v3340 = vsub.s32 5, %v3339
    %v3341 = vrot.slane %v3308, %v3340
    %v3342 = vlaneseq
    %v3343 = vshrl.u32 %v3342, 7
    %v3344 = vsub.s32 6, %v3343
    %v3345 = vrot.slane %v3308, %v3344
    %v3346 = vlaneseq
    %v3347 = vshrl.u32 %v3346, 7
    %v3348 = vsub.s32 7, %v3347
    %v3349 = vrot.slane %v3308, %v3348
    %v3358 = vadd.f32 %v3309, %v3321
    %v3359 = vadd.f32 %v3310, %v3325
    %v3360 = vadd.f32 %v3311, %v3329
    %v3361 = vadd.f32 %v3312, %v3333
    %v3362 = vadd.f32 %v3313, %v3337
    %v3363 = vadd.f32 %v3314, %v3341
    %v3364 = vadd.f32 %v3315, %v3345
    %v3365 = vadd.f32 %v3316, %v3349
    %vm3366 = vcmp.gt.f32.partialorder %v3358, 0.0
    %vm3367 = vcmp.gt.f32.partialorder %v3359, 0.0
    %vm3368 = vcmp.gt.f32.partialorder %v3360, 0.0
    %vm3369 = vcmp.gt.f32.partialorder %v3361, 0.0
    %vm3370 = vcmp.gt.f32.partialorder %v3362, 0.0
    %vm3371 = vcmp.gt.f32.partialorder %v3363, 0.0
    %vm3372 = vcmp.gt.f32.partialorder %v3364, 0.0
    %vm3373 = vcmp.gt.f32.partialorder %v3365, 0.0
    %v3374 = vmul.f32 %v3358, 0.2
    %v3375 = vmul.f32 %v3359, 0.2
    %v3376 = vmul.f32 %v3360, 0.2
    %v3377 = vmul.f32 %v3361, 0.2
    %v3378 = vmul.f32 %v3362, 0.2
    %v3379 = vmul.f32 %v3363, 0.2
    %v3380 = vmul.f32 %v3364, 0.2
    %v3381 = vmul.f32 %v3365, 0.2
    %v3382 = vsel %vm3366, %v3358, %v3374
    %v3383 = vsel %vm3367, %v3359, %v3375
    %v3384 = vsel %vm3368, %v3360, %v3376
    %v3385 = vsel %vm3369, %v3361, %v3377
    %v3386 = vsel %vm3370, %v3362, %v3378
    %v3387 = vsel %vm3371, %v3363, %v3379
    %v3388 = vsel %vm3372, %v3364, %v3380
    %v3389 = vsel %vm3373, %v3365, %v3381
    %v3390 = vpack.c.bf16 %v3382, %v3382
    %v3391 = vpack.c.bf16 %v3383, %v3383
    %v3392 = vpack.c.bf16 %v3384, %v3384
    %v3393 = vpack.c.bf16 %v3385, %v3385
    %v3394 = vpack.c.bf16 %v3386, %v3386
    %v3395 = vpack.c.bf16 %v3387, %v3387
    %v3396 = vpack.c.bf16 %v3388, %v3388
    %v3397 = vpack.c.bf16 %v3389, %v3389
    %v3398 = vld [vmem:[#allocation9] sm:$0xff]
    %v3399 = vld [vmem:[#allocation9 + $0x8] sm:$0xff]
    %v3400 = vld [vmem:[#allocation9 + $0x10] sm:$0xff]
    %v3401 = vld [vmem:[#allocation9 + $0x18] sm:$0xff]
    %v3402 = vld [vmem:[#allocation9 + $0x20] sm:$0xff]
    %v3403 = vld [vmem:[#allocation9 + $0x28] sm:$0xff]
    %v3404 = vld [vmem:[#allocation9 + $0x30] sm:$0xff]
    %v3405 = vld [vmem:[#allocation9 + $0x38] sm:$0xff]
    %v3406 = vld [vmem:[#allocation9 + $0x40] sm:$0xff]
    %v3407 = vld [vmem:[#allocation9 + $0x48] sm:$0xff]
    %v3408 = vld [vmem:[#allocation9 + $0x50] sm:$0xff]
    %v3409 = vld [vmem:[#allocation9 + $0x58] sm:$0xff]
    %v3410 = vld [vmem:[#allocation9 + $0x60] sm:$0xff]
    %v3411 = vld [vmem:[#allocation9 + $0x68] sm:$0xff]
    %v3412 = vld [vmem:[#allocation9 + $0x70] sm:$0xff]
    %v3413 = vld [vmem:[#allocation9 + $0x78] sm:$0xff]
    %v3414 = vld [vmem:[#allocation9 + $0x80] sm:$0xff]
    %v3415 = vld [vmem:[#allocation9 + $0x88] sm:$0xff]
    %v3416 = vld [vmem:[#allocation9 + $0x90] sm:$0xff]
    %v3417 = vld [vmem:[#allocation9 + $0x98] sm:$0xff]
    %v3418 = vld [vmem:[#allocation9 + $0xa0] sm:$0xff]
    %v3419 = vld [vmem:[#allocation9 + $0xa8] sm:$0xff]
    %v3420 = vld [vmem:[#allocation9 + $0xb0] sm:$0xff]
    %v3421 = vld [vmem:[#allocation9 + $0xb8] sm:$0xff]
    %v3422 = vld [vmem:[#allocation9 + $0xc0] sm:$0xff]
    %v3423 = vld [vmem:[#allocation9 + $0xc8] sm:$0xff]
    %v3424 = vld [vmem:[#allocation9 + $0xd0] sm:$0xff]
    %v3425 = vld [vmem:[#allocation9 + $0xd8] sm:$0xff]
    %v3426 = vld [vmem:[#allocation9 + $0xe0] sm:$0xff]
    %v3427 = vld [vmem:[#allocation9 + $0xe8] sm:$0xff]
    %v3428 = vld [vmem:[#allocation9 + $0xf0] sm:$0xff]
    %v3429 = vld [vmem:[#allocation9 + $0xf8] sm:$0xff]
    %v3430 = vld [vmem:[#allocation9 + $0x100] sm:$0xff]
    %v3431 = vld [vmem:[#allocation9 + $0x108] sm:$0xff]
    %v3432 = vld [vmem:[#allocation9 + $0x110] sm:$0xff]
    %v3433 = vld [vmem:[#allocation9 + $0x118] sm:$0xff]
    %v3434 = vld [vmem:[#allocation9 + $0x120] sm:$0xff]
    %v3435 = vld [vmem:[#allocation9 + $0x128] sm:$0xff]
    %v3436 = vld [vmem:[#allocation9 + $0x130] sm:$0xff]
    %v3437 = vld [vmem:[#allocation9 + $0x138] sm:$0xff]
    %v3438 = vld [vmem:[#allocation9 + $0x140] sm:$0xff]
    %v3439 = vld [vmem:[#allocation9 + $0x148] sm:$0xff]
    %v3440 = vld [vmem:[#allocation9 + $0x150] sm:$0xff]
    %v3441 = vld [vmem:[#allocation9 + $0x158] sm:$0xff]
    %v3442 = vld [vmem:[#allocation9 + $0x160] sm:$0xff]
    %v3443 = vld [vmem:[#allocation9 + $0x168] sm:$0xff]
    %v3444 = vld [vmem:[#allocation9 + $0x170] sm:$0xff]
    %v3445 = vld [vmem:[#allocation9 + $0x178] sm:$0xff]
    %v3446 = vld [vmem:[#allocation9 + $0x180] sm:$0xff]
    %v3447 = vld [vmem:[#allocation9 + $0x188] sm:$0xff]
    %v3448 = vld [vmem:[#allocation9 + $0x190] sm:$0xff]
    %v3449 = vld [vmem:[#allocation9 + $0x198] sm:$0xff]
    %v3450 = vld [vmem:[#allocation9 + $0x1a0] sm:$0xff]
    %v3451 = vld [vmem:[#allocation9 + $0x1a8] sm:$0xff]
    %v3452 = vld [vmem:[#allocation9 + $0x1b0] sm:$0xff]
    %v3453 = vld [vmem:[#allocation9 + $0x1b8] sm:$0xff]
    %v3454 = vld [vmem:[#allocation9 + $0x1c0] sm:$0xff]
    %v3455 = vld [vmem:[#allocation9 + $0x1c8] sm:$0xff]
    %v3456 = vld [vmem:[#allocation9 + $0x1d0] sm:$0xff]
    %v3457 = vld [vmem:[#allocation9 + $0x1d8] sm:$0xff]
    %v3458 = vld [vmem:[#allocation9 + $0x1e0] sm:$0xff]
    %v3459 = vld [vmem:[#allocation9 + $0x1e8] sm:$0xff]
    %v3460 = vld [vmem:[#allocation9 + $0x1f0] sm:$0xff]
    %v3461 = vld [vmem:[#allocation9 + $0x1f8] sm:$0xff]
    %v3462 = vld [vmem:[#allocation9 + $0x200] sm:$0xff]
    %v3463 = vld [vmem:[#allocation9 + $0x208] sm:$0xff]
    %v3464 = vld [vmem:[#allocation9 + $0x210] sm:$0xff]
    %v3465 = vld [vmem:[#allocation9 + $0x218] sm:$0xff]
    %v3466 = vld [vmem:[#allocation9 + $0x220] sm:$0xff]
    %v3467 = vld [vmem:[#allocation9 + $0x228] sm:$0xff]
    %v3468 = vld [vmem:[#allocation9 + $0x230] sm:$0xff]
    %v3469 = vld [vmem:[#allocation9 + $0x238] sm:$0xff]
    %v3470 = vld [vmem:[#allocation9 + $0x240] sm:$0xff]
    %v3471 = vld [vmem:[#allocation9 + $0x248] sm:$0xff]
    %v3472 = vld [vmem:[#allocation9 + $0x250] sm:$0xff]
    %v3473 = vld [vmem:[#allocation9 + $0x258] sm:$0xff]
    %v3474 = vld [vmem:[#allocation9 + $0x260] sm:$0xff]
    %v3475 = vld [vmem:[#allocation9 + $0x268] sm:$0xff]
    %v3476 = vld [vmem:[#allocation9 + $0x270] sm:$0xff]
    %v3477 = vld [vmem:[#allocation9 + $0x278] sm:$0xff]
    %v3478 = vld [vmem:[#allocation9 + $0x280] sm:$0xff]
    %v3479 = vld [vmem:[#allocation9 + $0x288] sm:$0xff]
    %v3480 = vld [vmem:[#allocation9 + $0x290] sm:$0xff]
    %v3481 = vld [vmem:[#allocation9 + $0x298] sm:$0xff]
    %v3482 = vld [vmem:[#allocation9 + $0x2a0] sm:$0xff]
    %v3483 = vld [vmem:[#allocation9 + $0x2a8] sm:$0xff]
    %v3484 = vld [vmem:[#allocation9 + $0x2b0] sm:$0xff]
    %v3485 = vld [vmem:[#allocation9 + $0x2b8] sm:$0xff]
    %v3486 = vld [vmem:[#allocation9 + $0x2c0] sm:$0xff]
    %v3487 = vld [vmem:[#allocation9 + $0x2c8] sm:$0xff]
    %v3488 = vld [vmem:[#allocation9 + $0x2d0] sm:$0xff]
    %v3489 = vld [vmem:[#allocation9 + $0x2d8] sm:$0xff]
    %v3490 = vld [vmem:[#allocation9 + $0x2e0] sm:$0xff]
    %v3491 = vld [vmem:[#allocation9 + $0x2e8] sm:$0xff]
    %v3492 = vld [vmem:[#allocation9 + $0x2f0] sm:$0xff]
    %v3493 = vld [vmem:[#allocation9 + $0x2f8] sm:$0xff]
    %v3494 = vld [vmem:[#allocation9 + $0x300] sm:$0xff]
    %v3495 = vld [vmem:[#allocation9 + $0x308] sm:$0xff]
    %v3496 = vld [vmem:[#allocation9 + $0x310] sm:$0xff]
    %v3497 = vld [vmem:[#allocation9 + $0x318] sm:$0xff]
    %v3498 = vld [vmem:[#allocation9 + $0x320] sm:$0xff]
    %v3499 = vld [vmem:[#allocation9 + $0x328] sm:$0xff]
    %v3500 = vld [vmem:[#allocation9 + $0x330] sm:$0xff]
    %v3501 = vld [vmem:[#allocation9 + $0x338] sm:$0xff]
    %v3502 = vld [vmem:[#allocation9 + $0x340] sm:$0xff]
    %v3503 = vld [vmem:[#allocation9 + $0x348] sm:$0xff]
    %v3504 = vld [vmem:[#allocation9 + $0x350] sm:$0xff]
    %v3505 = vld [vmem:[#allocation9 + $0x358] sm:$0xff]
    %v3506 = vld [vmem:[#allocation9 + $0x360] sm:$0xff]
    %v3507 = vld [vmem:[#allocation9 + $0x368] sm:$0xff]
    %v3508 = vld [vmem:[#allocation9 + $0x370] sm:$0xff]
    %v3509 = vld [vmem:[#allocation9 + $0x378] sm:$0xff]
    %v3510 = vld [vmem:[#allocation9 + $0x380] sm:$0xff]
    %v3511 = vld [vmem:[#allocation9 + $0x388] sm:$0xff]
    %v3512 = vld [vmem:[#allocation9 + $0x390] sm:$0xff]
    %v3513 = vld [vmem:[#allocation9 + $0x398] sm:$0xff]
    %v3514 = vld [vmem:[#allocation9 + $0x3a0] sm:$0xff]
    %v3515 = vld [vmem:[#allocation9 + $0x3a8] sm:$0xff]
    %v3516 = vld [vmem:[#allocation9 + $0x3b0] sm:$0xff]
    %v3517 = vld [vmem:[#allocation9 + $0x3b8] sm:$0xff]
    %v3518 = vld [vmem:[#allocation9 + $0x3c0] sm:$0xff]
    %v3519 = vld [vmem:[#allocation9 + $0x3c8] sm:$0xff]
    %v3520 = vld [vmem:[#allocation9 + $0x3d0] sm:$0xff]
    %v3521 = vld [vmem:[#allocation9 + $0x3d8] sm:$0xff]
    %v3522 = vld [vmem:[#allocation9 + $0x3e0] sm:$0xff]
    %v3523 = vld [vmem:[#allocation9 + $0x3e8] sm:$0xff]
    %v3524 = vld [vmem:[#allocation9 + $0x3f0] sm:$0xff]
    %v3525 = vld [vmem:[#allocation9 + $0x3f8] sm:$0xff]
    %v3526 = vld [vmem:[%s6 + $0x1d] sm:$0x3]
    %v3528 = vlaneseq
    %v3529 = vshrl.u32 %v3528, 7
    %v3530 = vsub.s32 0, %v3529
    %v3531 = vrot.slane %v3526, %v3530
    %v3532 = vlaneseq
    %v3533 = vshrl.u32 %v3532, 7
    %v3534 = vsub.s32 1, %v3533
    %v3535 = vrot.slane %v3526, %v3534
    %v3666 = vunpack.c.l.b16 %v3398
    %v3667 = vunpack.c.h.b16 %v3398
    %v3668 = vunpack.c.l.b16 %v3399
    %v3669 = vunpack.c.h.b16 %v3399
    %v3670 = vunpack.c.l.b16 %v3400
    %v3671 = vunpack.c.h.b16 %v3400
    %v3672 = vunpack.c.l.b16 %v3401
    %v3673 = vunpack.c.h.b16 %v3401
    %v3674 = vunpack.c.l.b16 %v3402
    %v3675 = vunpack.c.h.b16 %v3402
    %v3676 = vunpack.c.l.b16 %v3403
    %v3677 = vunpack.c.h.b16 %v3403
    %v3678 = vunpack.c.l.b16 %v3404
    %v3679 = vunpack.c.h.b16 %v3404
    %v3680 = vunpack.c.l.b16 %v3405
    %v3681 = vunpack.c.h.b16 %v3405
    %v3682 = vunpack.c.l.b16 %v3406
    %v3683 = vunpack.c.h.b16 %v3406
    %v3684 = vunpack.c.l.b16 %v3407
    %v3685 = vunpack.c.h.b16 %v3407
    %v3686 = vunpack.c.l.b16 %v3408
    %v3687 = vunpack.c.h.b16 %v3408
    %v3688 = vunpack.c.l.b16 %v3409
    %v3689 = vunpack.c.h.b16 %v3409
    %v3690 = vunpack.c.l.b16 %v3410
    %v3691 = vunpack.c.h.b16 %v3410
    %v3692 = vunpack.c.l.b16 %v3411
    %v3693 = vunpack.c.h.b16 %v3411
    %v3694 = vunpack.c.l.b16 %v3412
    %v3695 = vunpack.c.h.b16 %v3412
    %v3696 = vunpack.c.l.b16 %v3413
    %v3697 = vunpack.c.h.b16 %v3413
    %v3698 = vunpack.c.l.b16 %v3414
    %v3699 = vunpack.c.h.b16 %v3414
    %v3700 = vunpack.c.l.b16 %v3415
    %v3701 = vunpack.c.h.b16 %v3415
    %v3702 = vunpack.c.l.b16 %v3416
    %v3703 = vunpack.c.h.b16 %v3416
    %v3704 = vunpack.c.l.b16 %v3417
    %v3705 = vunpack.c.h.b16 %v3417
    %v3706 = vunpack.c.l.b16 %v3418
    %v3707 = vunpack.c.h.b16 %v3418
    %v3708 = vunpack.c.l.b16 %v3419
    %v3709 = vunpack.c.h.b16 %v3419
    %v3710 = vunpack.c.l.b16 %v3420
    %v3711 = vunpack.c.h.b16 %v3420
    %v3712 = vunpack.c.l.b16 %v3421
    %v3713 = vunpack.c.h.b16 %v3421
    %v3714 = vunpack.c.l.b16 %v3422
    %v3715 = vunpack.c.h.b16 %v3422
    %v3716 = vunpack.c.l.b16 %v3423
    %v3717 = vunpack.c.h.b16 %v3423
    %v3718 = vunpack.c.l.b16 %v3424
    %v3719 = vunpack.c.h.b16 %v3424
    %v3720 = vunpack.c.l.b16 %v3425
    %v3721 = vunpack.c.h.b16 %v3425
    %v3722 = vunpack.c.l.b16 %v3426
    %v3723 = vunpack.c.h.b16 %v3426
    %v3724 = vunpack.c.l.b16 %v3427
    %v3725 = vunpack.c.h.b16 %v3427
    %v3726 = vunpack.c.l.b16 %v3428
    %v3727 = vunpack.c.h.b16 %v3428
    %v3728 = vunpack.c.l.b16 %v3429
    %v3729 = vunpack.c.h.b16 %v3429
    %v3730 = vunpack.c.l.b16 %v3430
    %v3731 = vunpack.c.h.b16 %v3430
    %v3732 = vunpack.c.l.b16 %v3431
    %v3733 = vunpack.c.h.b16 %v3431
    %v3734 = vunpack.c.l.b16 %v3432
    %v3735 = vunpack.c.h.b16 %v3432
    %v3736 = vunpack.c.l.b16 %v3433
    %v3737 = vunpack.c.h.b16 %v3433
    %v3738 = vunpack.c.l.b16 %v3434
    %v3739 = vunpack.c.h.b16 %v3434
    %v3740 = vunpack.c.l.b16 %v3435
    %v3741 = vunpack.c.h.b16 %v3435
    %v3742 = vunpack.c.l.b16 %v3436
    %v3743 = vunpack.c.h.b16 %v3436
    %v3744 = vunpack.c.l.b16 %v3437
    %v3745 = vunpack.c.h.b16 %v3437
    %v3746 = vunpack.c.l.b16 %v3438
    %v3747 = vunpack.c.h.b16 %v3438
    %v3748 = vunpack.c.l.b16 %v3439
    %v3749 = vunpack.c.h.b16 %v3439
    %v3750 = vunpack.c.l.b16 %v3440
    %v3751 = vunpack.c.h.b16 %v3440
    %v3752 = vunpack.c.l.b16 %v3441
    %v3753 = vunpack.c.h.b16 %v3441
    %v3754 = vunpack.c.l.b16 %v3442
    %v3755 = vunpack.c.h.b16 %v3442
    %v3756 = vunpack.c.l.b16 %v3443
    %v3757 = vunpack.c.h.b16 %v3443
    %v3758 = vunpack.c.l.b16 %v3444
    %v3759 = vunpack.c.h.b16 %v3444
    %v3760 = vunpack.c.l.b16 %v3445
    %v3761 = vunpack.c.h.b16 %v3445
    %v3762 = vunpack.c.l.b16 %v3446
    %v3763 = vunpack.c.h.b16 %v3446
    %v3764 = vunpack.c.l.b16 %v3447
    %v3765 = vunpack.c.h.b16 %v3447
    %v3766 = vunpack.c.l.b16 %v3448
    %v3767 = vunpack.c.h.b16 %v3448
    %v3768 = vunpack.c.l.b16 %v3449
    %v3769 = vunpack.c.h.b16 %v3449
    %v3770 = vunpack.c.l.b16 %v3450
    %v3771 = vunpack.c.h.b16 %v3450
    %v3772 = vunpack.c.l.b16 %v3451
    %v3773 = vunpack.c.h.b16 %v3451
    %v3774 = vunpack.c.l.b16 %v3452
    %v3775 = vunpack.c.h.b16 %v3452
    %v3776 = vunpack.c.l.b16 %v3453
    %v3777 = vunpack.c.h.b16 %v3453
    %v3778 = vunpack.c.l.b16 %v3454
    %v3779 = vunpack.c.h.b16 %v3454
    %v3780 = vunpack.c.l.b16 %v3455
    %v3781 = vunpack.c.h.b16 %v3455
    %v3782 = vunpack.c.l.b16 %v3456
    %v3783 = vunpack.c.h.b16 %v3456
    %v3784 = vunpack.c.l.b16 %v3457
    %v3785 = vunpack.c.h.b16 %v3457
    %v3786 = vunpack.c.l.b16 %v3458
    %v3787 = vunpack.c.h.b16 %v3458
    %v3788 = vunpack.c.l.b16 %v3459
    %v3789 = vunpack.c.h.b16 %v3459
    %v3790 = vunpack.c.l.b16 %v3460
    %v3791 = vunpack.c.h.b16 %v3460
    %v3792 = vunpack.c.l.b16 %v3461
    %v3793 = vunpack.c.h.b16 %v3461
    %v3794 = vunpack.c.l.b16 %v3462
    %v3795 = vunpack.c.h.b16 %v3462
    %v3796 = vunpack.c.l.b16 %v3463
    %v3797 = vunpack.c.h.b16 %v3463
    %v3798 = vunpack.c.l.b16 %v3464
    %v3799 = vunpack.c.h.b16 %v3464
    %v3800 = vunpack.c.l.b16 %v3465
    %v3801 = vunpack.c.h.b16 %v3465
    %v3802 = vunpack.c.l.b16 %v3466
    %v3803 = vunpack.c.h.b16 %v3466
    %v3804 = vunpack.c.l.b16 %v3467
    %v3805 = vunpack.c.h.b16 %v3467
    %v3806 = vunpack.c.l.b16 %v3468
    %v3807 = vunpack.c.h.b16 %v3468
    %v3808 = vunpack.c.l.b16 %v3469
    %v3809 = vunpack.c.h.b16 %v3469
    %v3810 = vunpack.c.l.b16 %v3470
    %v3811 = vunpack.c.h.b16 %v3470
    %v3812 = vunpack.c.l.b16 %v3471
    %v3813 = vunpack.c.h.b16 %v3471
    %v3814 = vunpack.c.l.b16 %v3472
    %v3815 = vunpack.c.h.b16 %v3472
    %v3816 = vunpack.c.l.b16 %v3473
    %v3817 = vunpack.c.h.b16 %v3473
    %v3818 = vunpack.c.l.b16 %v3474
    %v3819 = vunpack.c.h.b16 %v3474
    %v3820 = vunpack.c.l.b16 %v3475
    %v3821 = vunpack.c.h.b16 %v3475
    %v3822 = vunpack.c.l.b16 %v3476
    %v3823 = vunpack.c.h.b16 %v3476
    %v3824 = vunpack.c.l.b16 %v3477
    %v3825 = vunpack.c.h.b16 %v3477
    %v3826 = vunpack.c.l.b16 %v3478
    %v3827 = vunpack.c.h.b16 %v3478
    %v3828 = vunpack.c.l.b16 %v3479
    %v3829 = vunpack.c.h.b16 %v3479
    %v3830 = vunpack.c.l.b16 %v3480
    %v3831 = vunpack.c.h.b16 %v3480
    %v3832 = vunpack.c.l.b16 %v3481
    %v3833 = vunpack.c.h.b16 %v3481
    %v3834 = vunpack.c.l.b16 %v3482
    %v3835 = vunpack.c.h.b16 %v3482
    %v3836 = vunpack.c.l.b16 %v3483
    %v3837 = vunpack.c.h.b16 %v3483
    %v3838 = vunpack.c.l.b16 %v3484
    %v3839 = vunpack.c.h.b16 %v3484
    %v3840 = vunpack.c.l.b16 %v3485
    %v3841 = vunpack.c.h.b16 %v3485
    %v3842 = vunpack.c.l.b16 %v3486
    %v3843 = vunpack.c.h.b16 %v3486
    %v3844 = vunpack.c.l.b16 %v3487
    %v3845 = vunpack.c.h.b16 %v3487
    %v3846 = vunpack.c.l.b16 %v3488
    %v3847 = vunpack.c.h.b16 %v3488
    %v3848 = vunpack.c.l.b16 %v3489
    %v3849 = vunpack.c.h.b16 %v3489
    %v3850 = vunpack.c.l.b16 %v3490
    %v3851 = vunpack.c.h.b16 %v3490
    %v3852 = vunpack.c.l.b16 %v3491
    %v3853 = vunpack.c.h.b16 %v3491
    %v3854 = vunpack.c.l.b16 %v3492
    %v3855 = vunpack.c.h.b16 %v3492
    %v3856 = vunpack.c.l.b16 %v3493
    %v3857 = vunpack.c.h.b16 %v3493
    %v3858 = vunpack.c.l.b16 %v3494
    %v3859 = vunpack.c.h.b16 %v3494
    %v3860 = vunpack.c.l.b16 %v3495
    %v3861 = vunpack.c.h.b16 %v3495
    %v3862 = vunpack.c.l.b16 %v3496
    %v3863 = vunpack.c.h.b16 %v3496
    %v3864 = vunpack.c.l.b16 %v3497
    %v3865 = vunpack.c.h.b16 %v3497
    %v3866 = vunpack.c.l.b16 %v3498
    %v3867 = vunpack.c.h.b16 %v3498
    %v3868 = vunpack.c.l.b16 %v3499
    %v3869 = vunpack.c.h.b16 %v3499
    %v3870 = vunpack.c.l.b16 %v3500
    %v3871 = vunpack.c.h.b16 %v3500
    %v3872 = vunpack.c.l.b16 %v3501
    %v3873 = vunpack.c.h.b16 %v3501
    %v3874 = vunpack.c.l.b16 %v3502
    %v3875 = vunpack.c.h.b16 %v3502
    %v3876 = vunpack.c.l.b16 %v3503
    %v3877 = vunpack.c.h.b16 %v3503
    %v3878 = vunpack.c.l.b16 %v3504
    %v3879 = vunpack.c.h.b16 %v3504
    %v3880 = vunpack.c.l.b16 %v3505
    %v3881 = vunpack.c.h.b16 %v3505
    %v3882 = vunpack.c.l.b16 %v3506
    %v3883 = vunpack.c.h.b16 %v3506
    %v3884 = vunpack.c.l.b16 %v3507
    %v3885 = vunpack.c.h.b16 %v3507
    %v3886 = vunpack.c.l.b16 %v3508
    %v3887 = vunpack.c.h.b16 %v3508
    %v3888 = vunpack.c.l.b16 %v3509
    %v3889 = vunpack.c.h.b16 %v3509
    %v3890 = vunpack.c.l.b16 %v3510
    %v3891 = vunpack.c.h.b16 %v3510
    %v3892 = vunpack.c.l.b16 %v3511
    %v3893 = vunpack.c.h.b16 %v3511
    %v3894 = vunpack.c.l.b16 %v3512
    %v3895 = vunpack.c.h.b16 %v3512
    %v3896 = vunpack.c.l.b16 %v3513
    %v3897 = vunpack.c.h.b16 %v3513
    %v3898 = vunpack.c.l.b16 %v3514
    %v3899 = vunpack.c.h.b16 %v3514
    %v3900 = vunpack.c.l.b16 %v3515
    %v3901 = vunpack.c.h.b16 %v3515
    %v3902 = vunpack.c.l.b16 %v3516
    %v3903 = vunpack.c.h.b16 %v3516
    %v3904 = vunpack.c.l.b16 %v3517
    %v3905 = vunpack.c.h.b16 %v3517
    %v3906 = vunpack.c.l.b16 %v3518
    %v3907 = vunpack.c.h.b16 %v3518
    %v3908 = vunpack.c.l.b16 %v3519
    %v3909 = vunpack.c.h.b16 %v3519
    %v3910 = vunpack.c.l.b16 %v3520
    %v3911 = vunpack.c.h.b16 %v3520
    %v3912 = vunpack.c.l.b16 %v3521
    %v3913 = vunpack.c.h.b16 %v3521
    %v3914 = vunpack.c.l.b16 %v3522
    %v3915 = vunpack.c.h.b16 %v3522
    %v3916 = vunpack.c.l.b16 %v3523
    %v3917 = vunpack.c.h.b16 %v3523
    %v3918 = vunpack.c.l.b16 %v3524
    %v3919 = vunpack.c.h.b16 %v3524
    %v3920 = vunpack.c.l.b16 %v3525
    %v3921 = vunpack.c.h.b16 %v3525
    %v3922 = vpack.c.b16 %v3668, %v3666
    %v3923 = vpack.c.b16 %v3669, %v3667
    %v3924 = vpack.c.b16 %v3672, %v3670
    %v3925 = vpack.c.b16 %v3673, %v3671
    %v3926 = vpack.c.b16 %v3676, %v3674
    %v3927 = vpack.c.b16 %v3677, %v3675
    %v3928 = vpack.c.b16 %v3680, %v3678
    %v3929 = vpack.c.b16 %v3681, %v3679
    %v3930 = vpack.c.b16 %v3684, %v3682
    %v3931 = vpack.c.b16 %v3685, %v3683
    %v3932 = vpack.c.b16 %v3688, %v3686
    %v3933 = vpack.c.b16 %v3689, %v3687
    %v3934 = vpack.c.b16 %v3692, %v3690
    %v3935 = vpack.c.b16 %v3693, %v3691
    %v3936 = vpack.c.b16 %v3696, %v3694
    %v3937 = vpack.c.b16 %v3697, %v3695
    %v3938 = vpack.c.b16 %v3700, %v3698
    %v3939 = vpack.c.b16 %v3701, %v3699
    %v3940 = vpack.c.b16 %v3704, %v3702
    %v3941 = vpack.c.b16 %v3705, %v3703
    %v3942 = vpack.c.b16 %v3708, %v3706
    %v3943 = vpack.c.b16 %v3709, %v3707
    %v3944 = vpack.c.b16 %v3712, %v3710
    %v3945 = vpack.c.b16 %v3713, %v3711
    %v3946 = vpack.c.b16 %v3716, %v3714
    %v3947 = vpack.c.b16 %v3717, %v3715
    %v3948 = vpack.c.b16 %v3720, %v3718
    %v3949 = vpack.c.b16 %v3721, %v3719
    %v3950 = vpack.c.b16 %v3724, %v3722
    %v3951 = vpack.c.b16 %v3725, %v3723
    %v3952 = vpack.c.b16 %v3728, %v3726
    %v3953 = vpack.c.b16 %v3729, %v3727
    %v3954 = vpack.c.b16 %v3732, %v3730
    %v3955 = vpack.c.b16 %v3733, %v3731
    %v3956 = vpack.c.b16 %v3736, %v3734
    %v3957 = vpack.c.b16 %v3737, %v3735
    %v3958 = vpack.c.b16 %v3740, %v3738
    %v3959 = vpack.c.b16 %v3741, %v3739
    %v3960 = vpack.c.b16 %v3744, %v3742
    %v3961 = vpack.c.b16 %v3745, %v3743
    %v3962 = vpack.c.b16 %v3748, %v3746
    %v3963 = vpack.c.b16 %v3749, %v3747
    %v3964 = vpack.c.b16 %v3752, %v3750
    %v3965 = vpack.c.b16 %v3753, %v3751
    %v3966 = vpack.c.b16 %v3756, %v3754
    %v3967 = vpack.c.b16 %v3757, %v3755
    %v3968 = vpack.c.b16 %v3760, %v3758
    %v3969 = vpack.c.b16 %v3761, %v3759
    %v3970 = vpack.c.b16 %v3764, %v3762
    %v3971 = vpack.c.b16 %v3765, %v3763
    %v3972 = vpack.c.b16 %v3768, %v3766
    %v3973 = vpack.c.b16 %v3769, %v3767
    %v3974 = vpack.c.b16 %v3772, %v3770
    %v3975 = vpack.c.b16 %v3773, %v3771
    %v3976 = vpack.c.b16 %v3776, %v3774
    %v3977 = vpack.c.b16 %v3777, %v3775
    %v3978 = vpack.c.b16 %v3780, %v3778
    %v3979 = vpack.c.b16 %v3781, %v3779
    %v3980 = vpack.c.b16 %v3784, %v3782
    %v3981 = vpack.c.b16 %v3785, %v3783
    %v3982 = vpack.c.b16 %v3788, %v3786
    %v3983 = vpack.c.b16 %v3789, %v3787
    %v3984 = vpack.c.b16 %v3792, %v3790
    %v3985 = vpack.c.b16 %v3793, %v3791
    %v3986 = vpack.c.b16 %v3796, %v3794
    %v3987 = vpack.c.b16 %v3797, %v3795
    %v3988 = vpack.c.b16 %v3800, %v3798
    %v3989 = vpack.c.b16 %v3801, %v3799
    %v3990 = vpack.c.b16 %v3804, %v3802
    %v3991 = vpack.c.b16 %v3805, %v3803
    %v3992 = vpack.c.b16 %v3808, %v3806
    %v3993 = vpack.c.b16 %v3809, %v3807
    %v3994 = vpack.c.b16 %v3812, %v3810
    %v3995 = vpack.c.b16 %v3813, %v3811
    %v3996 = vpack.c.b16 %v3816, %v3814
    %v3997 = vpack.c.b16 %v3817, %v3815
    %v3998 = vpack.c.b16 %v3820, %v3818
    %v3999 = vpack.c.b16 %v3821, %v3819
    %v4000 = vpack.c.b16 %v3824, %v3822
    %v4001 = vpack.c.b16 %v3825, %v3823
    %v4002 = vpack.c.b16 %v3828, %v3826
    %v4003 = vpack.c.b16 %v3829, %v3827
    %v4004 = vpack.c.b16 %v3832, %v3830
    %v4005 = vpack.c.b16 %v3833, %v3831
    %v4006 = vpack.c.b16 %v3836, %v3834
    %v4007 = vpack.c.b16 %v3837, %v3835
    %v4008 = vpack.c.b16 %v3840, %v3838
    %v4009 = vpack.c.b16 %v3841, %v3839
    %v4010 = vpack.c.b16 %v3844, %v3842
    %v4011 = vpack.c.b16 %v3845, %v3843
    %v4012 = vpack.c.b16 %v3848, %v3846
    %v4013 = vpack.c.b16 %v3849, %v3847
    %v4014 = vpack.c.b16 %v3852, %v3850
    %v4015 = vpack.c.b16 %v3853, %v3851
    %v4016 = vpack.c.b16 %v3856, %v3854
    %v4017 = vpack.c.b16 %v3857, %v3855
    %v4018 = vpack.c.b16 %v3860, %v3858
    %v4019 = vpack.c.b16 %v3861, %v3859
    %v4020 = vpack.c.b16 %v3864, %v3862
    %v4021 = vpack.c.b16 %v3865, %v3863
    %v4022 = vpack.c.b16 %v3868, %v3866
    %v4023 = vpack.c.b16 %v3869, %v3867
    %v4024 = vpack.c.b16 %v3872, %v3870
    %v4025 = vpack.c.b16 %v3873, %v3871
    %v4026 = vpack.c.b16 %v3876, %v3874
    %v4027 = vpack.c.b16 %v3877, %v3875
    %v4028 = vpack.c.b16 %v3880, %v3878
    %v4029 = vpack.c.b16 %v3881, %v3879
    %v4030 = vpack.c.b16 %v3884, %v3882
    %v4031 = vpack.c.b16 %v3885, %v3883
    %v4032 = vpack.c.b16 %v3888, %v3886
    %v4033 = vpack.c.b16 %v3889, %v3887
    %v4034 = vpack.c.b16 %v3892, %v3890
    %v4035 = vpack.c.b16 %v3893, %v3891
    %v4036 = vpack.c.b16 %v3896, %v3894
    %v4037 = vpack.c.b16 %v3897, %v3895
    %v4038 = vpack.c.b16 %v3900, %v3898
    %v4039 = vpack.c.b16 %v3901, %v3899
    %v4040 = vpack.c.b16 %v3904, %v3902
    %v4041 = vpack.c.b16 %v3905, %v3903
    %v4042 = vpack.c.b16 %v3908, %v3906
    %v4043 = vpack.c.b16 %v3909, %v3907
    %v4044 = vpack.c.b16 %v3912, %v3910
    %v4045 = vpack.c.b16 %v3913, %v3911
    %v4046 = vpack.c.b16 %v3916, %v3914
    %v4047 = vpack.c.b16 %v3917, %v3915
    %v4048 = vpack.c.b16 %v3920, %v3918
    %v4049 = vpack.c.b16 %v3921, %v3919
    %4178 = vmatprep.subr.bf16.mxu0 %v3923
    %4179 = vmatpush1.bf16.msra.mxu0 %v3922
    %4180 = vmatprep.subr.bf16.mxu0 %v3925
    %4181 = vmatpush1.bf16.msra.mxu0 %v3924
    %4182 = vmatprep.subr.bf16.mxu0 %v3927
    %4183 = vmatpush1.bf16.msra.mxu0 %v3926
    %4184 = vmatprep.subr.bf16.mxu0 %v3929
    %4185 = vmatpush1.bf16.msra.mxu0 %v3928
    %4186 = vmatprep.subr.bf16.mxu0 %v3931
    %4187 = vmatpush1.bf16.msra.mxu0 %v3930
    %4188 = vmatprep.subr.bf16.mxu0 %v3933
    %4189 = vmatpush1.bf16.msra.mxu0 %v3932
    %4190 = vmatprep.subr.bf16.mxu0 %v3935
    %4191 = vmatpush1.bf16.msra.mxu0 %v3934
    %4192 = vmatprep.subr.bf16.mxu0 %v3937
    %4193 = vmatpush1.bf16.msra.mxu0 %v3936
    %4194 = vmatprep.subr.bf16.mxu0 %v3939
    %4195 = vmatpush1.bf16.msra.mxu0 %v3938
    %4196 = vmatprep.subr.bf16.mxu0 %v3941
    %4197 = vmatpush1.bf16.msra.mxu0 %v3940
    %4198 = vmatprep.subr.bf16.mxu0 %v3943
    %4199 = vmatpush1.bf16.msra.mxu0 %v3942
    %4200 = vmatprep.subr.bf16.mxu0 %v3945
    %4201 = vmatpush1.bf16.msra.mxu0 %v3944
    %4202 = vmatprep.subr.bf16.mxu0 %v3947
    %4203 = vmatpush1.bf16.msra.mxu0 %v3946
    %4204 = vmatprep.subr.bf16.mxu0 %v3949
    %4205 = vmatpush1.bf16.msra.mxu0 %v3948
    %4206 = vmatprep.subr.bf16.mxu0 %v3951
    %4207 = vmatpush1.bf16.msra.mxu0 %v3950
    %4208 = vmatprep.subr.bf16.mxu0 %v3953
    %4209 = vmatpush1.bf16.msra.mxu0 %v3952
    %4210 = vmatprep.mubr.bf16.mxu0 %v3391
    %4211 = vmatmul.mubr.bf16.gmra.mrb[0].mxu0 %v3390
    %v4212 = vpop.f32.mrb[0].mxu0
    %v4213 = vadd.f32 %v3531, %v4212
    %v4214 = vpop.f32.mrb[0].mxu0
    %v4215 = vadd.f32 %v3535, %v4214
    %v4216 = vpop.f32.mrb[0].mxu0
    %v4217 = vpop.f32.mrb[0].mxu0
    %4218 = vdwg.mxu0
    %4219 = vmatprep.subr.bf16.mxu0 %v3955
    %4220 = vmatpush1.bf16.msra.mxu0 %v3954
    %4221 = vmatprep.subr.bf16.mxu0 %v3957
    %4222 = vmatpush1.bf16.msra.mxu0 %v3956
    %4223 = vmatprep.subr.bf16.mxu0 %v3959
    %4224 = vmatpush1.bf16.msra.mxu0 %v3958
    %4225 = vmatprep.subr.bf16.mxu0 %v3961
    %4226 = vmatpush1.bf16.msra.mxu0 %v3960
    %4227 = vmatprep.subr.bf16.mxu0 %v3963
    %4228 = vmatpush1.bf16.msra.mxu0 %v3962
    %4229 = vmatprep.subr.bf16.mxu0 %v3965
    %4230 = vmatpush1.bf16.msra.mxu0 %v3964
    %4231 = vmatprep.subr.bf16.mxu0 %v3967
    %4232 = vmatpush1.bf16.msra.mxu0 %v3966
    %4233 = vmatprep.subr.bf16.mxu0 %v3969
    %4234 = vmatpush1.bf16.msra.mxu0 %v3968
    %4235 = vmatprep.subr.bf16.mxu0 %v3971
    %4236 = vmatpush1.bf16.msra.mxu0 %v3970
    %4237 = vmatprep.subr.bf16.mxu0 %v3973
    %4238 = vmatpush1.bf16.msra.mxu0 %v3972
    %4239 = vmatprep.subr.bf16.mxu0 %v3975
    %4240 = vmatpush1.bf16.msra.mxu0 %v3974
    %4241 = vmatprep.subr.bf16.mxu0 %v3977
    %4242 = vmatpush1.bf16.msra.mxu0 %v3976
    %4243 = vmatprep.subr.bf16.mxu0 %v3979
    %4244 = vmatpush1.bf16.msra.mxu0 %v3978
    %4245 = vmatprep.subr.bf16.mxu0 %v3981
    %4246 = vmatpush1.bf16.msra.mxu0 %v3980
    %4247 = vmatprep.subr.bf16.mxu0 %v3983
    %4248 = vmatpush1.bf16.msra.mxu0 %v3982
    %4249 = vmatprep.subr.bf16.mxu0 %v3985
    %4250 = vmatpush1.bf16.msra.mxu0 %v3984
    %4251 = vmatprep.mubr.bf16.mxu0 %v3393
    %4252 = vmatmul.mubr.bf16.gmra.mrb[0].mxu0 %v3392
    %v4253 = vpop.f32.mrb[0].mxu0
    %v4254 = vadd.f32 %v4213, %v4253
    %v4255 = vpop.f32.mrb[0].mxu0
    %v4256 = vadd.f32 %v4215, %v4255
    %v4257 = vpop.f32.mrb[0].mxu0
    %v4258 = vpop.f32.mrb[0].mxu0
    %4259 = vdwg.mxu0
    %4260 = vmatprep.subr.bf16.mxu0 %v3987
    %4261 = vmatpush1.bf16.msra.mxu0 %v3986
    %4262 = vmatprep.subr.bf16.mxu0 %v3989
    %4263 = vmatpush1.bf16.msra.mxu0 %v3988
    %4264 = vmatprep.subr.bf16.mxu0 %v3991
    %4265 = vmatpush1.bf16.msra.mxu0 %v3990
    %4266 = vmatprep.subr.bf16.mxu0 %v3993
    %4267 = vmatpush1.bf16.msra.mxu0 %v3992
    %4268 = vmatprep.subr.bf16.mxu0 %v3995
    %4269 = vmatpush1.bf16.msra.mxu0 %v3994
    %4270 = vmatprep.subr.bf16.mxu0 %v3997
    %4271 = vmatpush1.bf16.msra.mxu0 %v3996
    %4272 = vmatprep.subr.bf16.mxu0 %v3999
    %4273 = vmatpush1.bf16.msra.mxu0 %v3998
    %4274 = vmatprep.subr.bf16.mxu0 %v4001
    %4275 = vmatpush1.bf16.msra.mxu0 %v4000
    %4276 = vmatprep.subr.bf16.mxu0 %v4003
    %4277 = vmatpush1.bf16.msra.mxu0 %v4002
    %4278 = vmatprep.subr.bf16.mxu0 %v4005
    %4279 = vmatpush1.bf16.msra.mxu0 %v4004
    %4280 = vmatprep.subr.bf16.mxu0 %v4007
    %4281 = vmatpush1.bf16.msra.mxu0 %v4006
    %4282 = vmatprep.subr.bf16.mxu0 %v4009
    %4283 = vmatpush1.bf16.msra.mxu0 %v4008
    %4284 = vmatprep.subr.bf16.mxu0 %v4011
    %4285 = vmatpush1.bf16.msra.mxu0 %v4010
    %4286 = vmatprep.subr.bf16.mxu0 %v4013
    %4287 = vmatpush1.bf16.msra.mxu0 %v4012
    %4288 = vmatprep.subr.bf16.mxu0 %v4015
    %4289 = vmatpush1.bf16.msra.mxu0 %v4014
    %4290 = vmatprep.subr.bf16.mxu0 %v4017
    %4291 = vmatpush1.bf16.msra.mxu0 %v4016
    %4292 = vmatprep.mubr.bf16.mxu0 %v3395
    %4293 = vmatmul.mubr.bf16.gmra.mrb[0].mxu0 %v3394
    %v4294 = vpop.f32.mrb[0].mxu0
    %v4295 = vadd.f32 %v4254, %v4294
    %v4296 = vpop.f32.mrb[0].mxu0
    %v4297 = vadd.f32 %v4256, %v4296
    %v4298 = vpop.f32.mrb[0].mxu0
    %v4299 = vpop.f32.mrb[0].mxu0
    %4300 = vdwg.mxu0
    %4301 = vmatprep.subr.bf16.mxu0 %v4019
    %4302 = vmatpush1.bf16.msra.mxu0 %v4018
    %4303 = vmatprep.subr.bf16.mxu0 %v4021
    %4304 = vmatpush1.bf16.msra.mxu0 %v4020
    %4305 = vmatprep.subr.bf16.mxu0 %v4023
    %4306 = vmatpush1.bf16.msra.mxu0 %v4022
    %4307 = vmatprep.subr.bf16.mxu0 %v4025
    %4308 = vmatpush1.bf16.msra.mxu0 %v4024
    %4309 = vmatprep.subr.bf16.mxu0 %v4027
    %4310 = vmatpush1.bf16.msra.mxu0 %v4026
    %4311 = vmatprep.subr.bf16.mxu0 %v4029
    %4312 = vmatpush1.bf16.msra.mxu0 %v4028
    %4313 = vmatprep.subr.bf16.mxu0 %v4031
    %4314 = vmatpush1.bf16.msra.mxu0 %v4030
    %4315 = vmatprep.subr.bf16.mxu0 %v4033
    %4316 = vmatpush1.bf16.msra.mxu0 %v4032
    %4317 = vmatprep.subr.bf16.mxu0 %v4035
    %4318 = vmatpush1.bf16.msra.mxu0 %v4034
    %4319 = vmatprep.subr.bf16.mxu0 %v4037
    %4320 = vmatpush1.bf16.msra.mxu0 %v4036
    %4321 = vmatprep.subr.bf16.mxu0 %v4039
    %4322 = vmatpush1.bf16.msra.mxu0 %v4038
    %4323 = vmatprep.subr.bf16.mxu0 %v4041
    %4324 = vmatpush1.bf16.msra.mxu0 %v4040
    %4325 = vmatprep.subr.bf16.mxu0 %v4043
    %4326 = vmatpush1.bf16.msra.mxu0 %v4042
    %4327 = vmatprep.subr.bf16.mxu0 %v4045
    %4328 = vmatpush1.bf16.msra.mxu0 %v4044
    %4329 = vmatprep.subr.bf16.mxu0 %v4047
    %4330 = vmatpush1.bf16.msra.mxu0 %v4046
    %4331 = vmatprep.subr.bf16.mxu0 %v4049
    %4332 = vmatpush1.bf16.msra.mxu0 %v4048
    %4333 = vmatprep.mubr.bf16.mxu0 %v3397
    %4334 = vmatmul.mubr.bf16.gmra.mrb[0].mxu0 %v3396
    %v4335 = vpop.f32.mrb[0].mxu0
    %v4336 = vadd.f32 %v4295, %v4335
    %v4337 = vpop.f32.mrb[0].mxu0
    %v4338 = vadd.f32 %v4297, %v4337
    %v4339 = vpop.f32.mrb[0].mxu0
    %v4340 = vpop.f32.mrb[0].mxu0
    %4341 = vdwg.mxu0
    %v4342 = vtanh.pop %v4336
    %v4343 = vtanh.pop %v4338
    %4344 = vst [vmem:[%s7] sm:$0xff] %v4342
    %4345 = vst [vmem:[%s7 + $0x8] sm:$0xff] %v4343
    // Predicated region
    $region50: #{generator_forward.1} parent=1 // pred_check
      _
    $region51: #{generator_forward.1} parent=1 // pred_check_branch
      %4347 = sbr.rel (0) target = $region53
    $region52: #{generator_forward.1} parent=1 // pred_region
      _
    $region53: #{generator_forward.1} parent=1 // pred_fallthru
      _
    // Predicated region
    $region54: #{generator_forward.1} parent=1 // pred_check
      _
    $region55: #{generator_forward.1} parent=1 // pred_check_branch
      %4349 = sbr.rel (0) target = $region57
    $region56: #{generator_forward.1} parent=1 // pred_region
      _
    $region57: #{generator_forward.1} parent=1 // pred_fallthru
      _
    %4350 = vsyncpa [#allocation3], 1
    %4351 = vsyncpa [#allocation5], 1
    %4352 = vsyncpa [#allocation8], 1

</llo_original>
